<compile_context>
chip_gen: v6e
topology: v6e:2x2x1
jax: 0.10.0
libtpu: 0.0.40
codegen_flags: <defaults>
</compile_context>

<pallas_src>
import math

import jax
import jax.numpy as jnp
from jax import lax
from jax.experimental import pallas as pl
from jax.experimental.pallas import tpu as pltpu


def _bigru_kernel(xf_ref, xb_ref, gamma_ref, beta_ref,
                  wih_f_ref, wih_b_ref, whh_f_ref, whh_b_ref,
                  bih_f_ref, bih_b_ref, bhn_f_ref, bhn_b_ref,
                  out_f_ref, out_b_ref,
                  h_f_ref, h_b_ref):
    B, Tc, D = xf_ref.shape
    H = h_f_ref.shape[1]
    c = pl.program_id(0)

    # Both directions start from h0 = 0 at the first grid step; the chunk
    # axis is "arbitrary" so steps run in order and h_{f,b} persist.
    @pl.when(c == 0)
    def _():
        h_f_ref[...] = jnp.zeros_like(h_f_ref)
        h_b_ref[...] = jnp.zeros_like(h_b_ref)

    gamma = gamma_ref[...]          # (1, 1, D)
    beta = beta_ref[...]

    def ln_gelu_proj(x, wih, bih):
        # LayerNorm over last dim (PyTorch default eps=1e-5, biased variance).
        mu = jnp.mean(x, axis=-1, keepdims=True)
        var = jnp.mean((x - mu) ** 2, axis=-1, keepdims=True)
        xn = (x - mu) * lax.rsqrt(var + 1e-5)
        xn = xn * gamma + beta
        # Exact (erf) GELU, matching F.gelu default.
        xg = 0.5 * xn * (1.0 + lax.erf(xn * 0.7071067811865476))
        # Whole-chunk input projection in one MXU pass; bf16 operands,
        # f32 accumulation.  bih already contains the folded bhh_{r,z}.
        xg2 = xg.reshape(B * Tc, D).astype(jnp.bfloat16)
        xw = jnp.dot(xg2, wih, preferred_element_type=jnp.float32) + bih
        return xw.reshape(B, Tc, 3 * H)

    xw_f = ln_gelu_proj(xf_ref[...], wih_f_ref[...], bih_f_ref[...])
    xw_b = ln_gelu_proj(xb_ref[...], wih_b_ref[...], bih_b_ref[...])

    whh_f = whh_f_ref[...]          # (H, 3H) bf16
    whh_b = whh_b_ref[...]
    bhn_f = bhn_f_ref[...]          # (1, H) f32
    bhn_b = bhn_b_ref[...]

    def gru_step(gi, hprev, whh, bhn):
        # PyTorch GRU cell (bias_hh r/z parts pre-folded into gi):
        #   r = sigm(gi_r + Wh_r h);  z = sigm(gi_z + Wh_z h)
        #   n = tanh(gi_n + r * (Wh_n h + bh_n));  h' = (1-z)*n + z*h
        gh = jnp.dot(hprev.astype(jnp.bfloat16), whh,
                     preferred_element_type=jnp.float32)
        r = jax.nn.sigmoid(gi[:, 0:H] + gh[:, 0:H])
        z = jax.nn.sigmoid(gi[:, H:2 * H] + gh[:, H:2 * H])
        n = jnp.tanh(gi[:, 2 * H:3 * H] + r * (gh[:, 2 * H:3 * H] + bhn))
        return (1.0 - z) * n + z * hprev

    hf = h_f_ref[...]
    hb = h_b_ref[...]

    # Interleaved forward/backward recurrences: two independent dependency
    # chains per iteration.  Forward walks this chunk left->right; backward
    # walks its (globally time-reversed) chunk right->left.  Static unroll
    # over the chunk (Tc is a compile-time block size).
    for t in range(Tc):
        tb = Tc - 1 - t
        hf = gru_step(xw_f[:, t, :], hf, whh_f, bhn_f)
        hb = gru_step(xw_b[:, tb, :], hb, whh_b, bhn_b)
        out_f_ref[:, t, :] = hf.astype(out_f_ref.dtype)
        out_b_ref[:, tb, :] = hb.astype(out_b_ref.dtype)

    h_f_ref[...] = hf
    h_b_ref[...] = hb

    # Dropout: nn.Dropout is identity in eval mode, so no-op here.
    # TODO(synk): training-mode dropout (scaled Bernoulli mask via pltpu.prng_*) not applied.


def _choose_time_chunk(T, cap=32):
    """Largest multiple of 8 dividing T, capped (static-unrolled recurrence)."""
    if T % 8 != 0:
        return T
    tc = 8
    for cand in range(8, min(T, cap) + 1, 8):
        if T % cand == 0:
            tc = cand
    return tc


def bidirectional_gru(x, params, time_chunk=None):
    """x: (B, T, D) float32 (batch_first=True). Returns (B, T, 2H)."""
    B, T, D = x.shape
    H = params["whh_f"].shape[0]
    x = x.astype(jnp.float32)

    Tc = _choose_time_chunk(T) if time_chunk is None else time_chunk
    assert T % Tc == 0, (T, Tc)
    nC = T // Tc

    # ---- parameter prep (O(params) layout / precision plumbing) ----
    wih_f = params["wih_f"].astype(jnp.bfloat16)      # (D, 3H)
    wih_b = params["wih_b"].astype(jnp.bfloat16)
    whh_f = params["whh_f"].astype(jnp.bfloat16)      # (H, 3H)
    whh_b = params["whh_b"].astype(jnp.bfloat16)

    def fold(bih, bhh):
        # bias_hh r/z only ever add to gi -> fold them in; keep bhh_n apart
        # (it is multiplied by the reset gate inside the loop).
        folded = bih + jnp.concatenate(
            [bhh[:2 * H], jnp.zeros((H,), jnp.float32)])
        return folded.reshape(1, 3 * H), bhh[2 * H:].reshape(1, H)

    bih_f, bhn_f = fold(params["bih_f"], params["bhh_f"])
    bih_b, bhn_b = fold(params["bih_b"], params["bhh_b"])
    gamma = params["gamma"].reshape(1, 1, D)
    beta = params["beta"].reshape(1, 1, D)

    def full(shape):
        return pl.BlockSpec(shape, lambda c: (0,) * len(shape))

    out_f, out_b = pl.pallas_call(
        _bigru_kernel,
        out_shape=(jax.ShapeDtypeStruct((B, T, H), jnp.float32),
                   jax.ShapeDtypeStruct((B, T, H), jnp.float32)),
        grid_spec=pltpu.PrefetchScalarGridSpec(
            num_scalar_prefetch=0,
            grid=(nC,),
            in_specs=[
                # x chunk for the forward chain: chunk c
                pl.BlockSpec((B, Tc, D), lambda c: (0, c, 0)),
                # x chunk for the backward chain: chunk nC-1-c
                pl.BlockSpec((B, Tc, D), lambda c: (0, nC - 1 - c, 0)),
                full((1, 1, D)), full((1, 1, D)),
                full((D, 3 * H)), full((D, 3 * H)),
                full((H, 3 * H)), full((H, 3 * H)),
                full((1, 3 * H)), full((1, 3 * H)),
                full((1, H)), full((1, H)),
            ],
            out_specs=[
                pl.BlockSpec((B, Tc, H), lambda c: (0, c, 0)),
                pl.BlockSpec((B, Tc, H), lambda c: (0, nC - 1 - c, 0)),
            ],
            scratch_shapes=[
                pltpu.VMEM((B, H), jnp.float32),   # carried h, forward
                pltpu.VMEM((B, H), jnp.float32),   # carried h, backward
            ],
        ),
        compiler_params=pltpu.CompilerParams(
            dimension_semantics=("arbitrary",),     # h carries across chunks
            vmem_limit_bytes=32 * 1024 * 1024,      # safe for v7x's 64 MiB VMEM
        ),
    )(x, x, gamma, beta, wih_f, wih_b, whh_f, whh_b,
      bih_f, bih_b, bhn_f, bhn_b)

    # Only remaining wrapper op: [forward || backward] feature concat.
    # (batch_first layout preserved end-to-end; no transposes.)
    return jnp.concatenate([out_f, out_b], axis=-1)      # (B, T, 2H)


def init_params(key, rnn_dim, hidden_size):
    """Deterministic synthetic params. GRU weights stored pre-transposed:
    wih_* is (D, 3H) = weight_ih_l0.T ; whh_* is (H, 3H) = weight_hh_l0.T."""
    D, H = rnn_dim, hidden_size
    k = 1.0 / math.sqrt(H)
    keys = jax.random.split(key, 8)
    u = lambda kk, shape: jax.random.uniform(kk, shape, jnp.float32, -k, k)
    return dict(
        gamma=jnp.ones((D,), jnp.float32),
        beta=jnp.zeros((D,), jnp.float32),
        wih_f=u(keys[0], (D, 3 * H)), whh_f=u(keys[1], (H, 3 * H)),
        bih_f=u(keys[2], (3 * H,)),   bhh_f=u(keys[3], (3 * H,)),
        wih_b=u(keys[4], (D, 3 * H)), whh_b=u(keys[5], (H, 3 * H)),
        bih_b=u(keys[6], (3 * H,)),   bhh_b=u(keys[7], (3 * H,)),
    )


if __name__ == "__main__":
    B, T, rnn_dim, hidden = 2, 16, 32, 32
    key = jax.random.PRNGKey(0)
    kx, kp = jax.random.split(key)
    x = jax.random.normal(kx, (B, T, rnn_dim), jnp.float32)
    params = init_params(kp, rnn_dim, hidden)

    # time_chunk=8 -> 2 grid steps: exercises the carried-h chunk pipeline
    # and the reversed-chunk indexing of the backward direction.
    out = bidirectional_gru(x, params, time_chunk=8)
    jax.block_until_ready(out)
    assert out.shape == (B, T, 2 * hidden), out.shape
    assert bool(jnp.all(jnp.isfinite(out)))
    print("KERNEL_OK")
</pallas_src>

<mosaic_0001>
module attributes {stable_mosaic.version = 11 : i64} {
  func.func @_bigru_kernel(%arg0: i32, %arg1: memref<2x8x32xf32, #tpu.memory_space<vmem>>, %arg2: memref<2x8x32xf32, #tpu.memory_space<vmem>>, %arg3: memref<1x1x32xf32, #tpu.memory_space<vmem>>, %arg4: memref<1x1x32xf32, #tpu.memory_space<vmem>>, %arg5: memref<32x96xbf16, #tpu.memory_space<vmem>>, %arg6: memref<32x96xbf16, #tpu.memory_space<vmem>>, %arg7: memref<32x96xbf16, #tpu.memory_space<vmem>>, %arg8: memref<32x96xbf16, #tpu.memory_space<vmem>>, %arg9: memref<1x96xf32, #tpu.memory_space<vmem>>, %arg10: memref<1x96xf32, #tpu.memory_space<vmem>>, %arg11: memref<1x32xf32, #tpu.memory_space<vmem>>, %arg12: memref<1x32xf32, #tpu.memory_space<vmem>>, %arg13: memref<2x8x32xf32, #tpu.memory_space<vmem>>, %arg14: memref<2x8x32xf32, #tpu.memory_space<vmem>>, %arg15: memref<2x32xf32, #tpu.memory_space<vmem>>, %arg16: memref<2x32xf32, #tpu.memory_space<vmem>>) attributes {dimension_semantics = [#tpu.dimension_semantics<arbitrary>], iteration_bounds = array<i64: 2>, scalar_prefetch = 0 : i64, scratch_operands = 2 : i64, tpu.core_type = #tpu.core_type<tc>, window_params = [{transform_indices = @transform_0, window_bounds = array<i64: 2, 8, 32>}, {transform_indices = @transform_1, window_bounds = array<i64: 2, 8, 32>}, {pipeline_mode = #tpu.pipeline_mode<synchronous>, transform_indices = @transform_2, window_bounds = array<i64: 1, 1, 32>}, {pipeline_mode = #tpu.pipeline_mode<synchronous>, transform_indices = @transform_3, window_bounds = array<i64: 1, 1, 32>}, {pipeline_mode = #tpu.pipeline_mode<synchronous>, transform_indices = @transform_4, window_bounds = array<i64: 32, 96>}, {pipeline_mode = #tpu.pipeline_mode<synchronous>, transform_indices = @transform_5, window_bounds = array<i64: 32, 96>}, {pipeline_mode = #tpu.pipeline_mode<synchronous>, transform_indices = @transform_6, window_bounds = array<i64: 32, 96>}, {pipeline_mode = #tpu.pipeline_mode<synchronous>, transform_indices = @transform_7, window_bounds = array<i64: 32, 96>}, {pipeline_mode = #tpu.pipeline_mode<synchronous>, transform_indices = @transform_8, window_bounds = array<i64: 1, 96>}, {pipeline_mode = #tpu.pipeline_mode<synchronous>, transform_indices = @transform_9, window_bounds = array<i64: 1, 96>}, {pipeline_mode = #tpu.pipeline_mode<synchronous>, transform_indices = @transform_10, window_bounds = array<i64: 1, 32>}, {pipeline_mode = #tpu.pipeline_mode<synchronous>, transform_indices = @transform_11, window_bounds = array<i64: 1, 32>}, {transform_indices = @transform_12, window_bounds = array<i64: 2, 8, 32>}, {transform_indices = @transform_13, window_bounds = array<i64: 2, 8, 32>}]} {
    %c0_i32 = arith.constant 0 : i32
    %0 = arith.cmpi eq, %arg0, %c0_i32 : i32
    %1 = arith.extui %0 : i1 to i32
    %c0_i32_0 = arith.constant 0 : i32
    %2 = arith.cmpi ne, %1, %c0_i32_0 : i32
    scf.if %2 {
      %cst_158 = arith.constant 0.000000e+00 : f32
      %651 = vector.broadcast %cst_158 : f32 to vector<2x32xf32>
      %c0_159 = arith.constant 0 : index
      %c0_160 = arith.constant 0 : index
      %652 = vector.load %arg15[%c0_159, %c0_160] : memref<2x32xf32, #tpu.memory_space<vmem>>, vector<2x32xf32>
      tpu.vector_store %arg15[%c0_159, %c0_160], %651 {strides = array<i32>} : memref<2x32xf32, #tpu.memory_space<vmem>>, vector<2x32xf32>,
      %cst_161 = arith.constant 0.000000e+00 : f32
      %653 = vector.broadcast %cst_161 : f32 to vector<2x32xf32>
      %c0_162 = arith.constant 0 : index
      %c0_163 = arith.constant 0 : index
      %654 = vector.load %arg16[%c0_162, %c0_163] : memref<2x32xf32, #tpu.memory_space<vmem>>, vector<2x32xf32>
      tpu.vector_store %arg16[%c0_162, %c0_163], %653 {strides = array<i32>} : memref<2x32xf32, #tpu.memory_space<vmem>>, vector<2x32xf32>,
    } else {
    }
    %c0 = arith.constant 0 : index
    %c0_1 = arith.constant 0 : index
    %c0_2 = arith.constant 0 : index
    %3 = vector.load %arg3[%c0, %c0_1, %c0_2] : memref<1x1x32xf32, #tpu.memory_space<vmem>>, vector<1x1x32xf32>
    %c0_3 = arith.constant 0 : index
    %c0_4 = arith.constant 0 : index
    %c0_5 = arith.constant 0 : index
    %4 = vector.load %arg4[%c0_3, %c0_4, %c0_5] : memref<1x1x32xf32, #tpu.memory_space<vmem>>, vector<1x1x32xf32>
    %c0_6 = arith.constant 0 : index
    %c0_7 = arith.constant 0 : index
    %c0_8 = arith.constant 0 : index
    %5 = vector.load %arg1[%c0_6, %c0_7, %c0_8] : memref<2x8x32xf32, #tpu.memory_space<vmem>>, vector<2x8x32xf32>
    %c0_9 = arith.constant 0 : index
    %c0_10 = arith.constant 0 : index
    %6 = vector.load %arg5[%c0_9, %c0_10] : memref<32x96xbf16, #tpu.memory_space<vmem>>, vector<32x96xbf16>
    %c0_11 = arith.constant 0 : index
    %c0_12 = arith.constant 0 : index
    %7 = vector.load %arg9[%c0_11, %c0_12] : memref<1x96xf32, #tpu.memory_space<vmem>>, vector<1x96xf32>
    %cst = arith.constant dense<0.000000e+00> : vector<2x8xf32>
    %8 = vector.multi_reduction <add>, %5, %cst [2] : vector<2x8x32xf32> to vector<2x8xf32>
    %9 = vector.shape_cast %8 : vector<2x8xf32> to vector<2x8x1xf32>
    %cst_13 = arith.constant 3.200000e+01 : f32
    %10 = vector.broadcast %cst_13 : f32 to vector<2x8x1xf32>
    %11 = arith.divf %9, %10 : vector<2x8x1xf32>
    %12 = vector.broadcast %11 : vector<2x8x1xf32> to vector<2x8x32xf32>
    %13 = arith.subf %5, %12 : vector<2x8x32xf32>
    %14 = arith.mulf %13, %13 : vector<2x8x32xf32>
    %cst_14 = arith.constant dense<0.000000e+00> : vector<2x8xf32>
    %15 = vector.multi_reduction <add>, %14, %cst_14 [2] : vector<2x8x32xf32> to vector<2x8xf32>
    %16 = vector.shape_cast %15 : vector<2x8xf32> to vector<2x8x1xf32>
    %cst_15 = arith.constant 3.200000e+01 : f32
    %17 = vector.broadcast %cst_15 : f32 to vector<2x8x1xf32>
    %18 = arith.divf %16, %17 : vector<2x8x1xf32>
    %19 = vector.broadcast %11 : vector<2x8x1xf32> to vector<2x8x32xf32>
    %20 = arith.subf %5, %19 : vector<2x8x32xf32>
    %cst_16 = arith.constant 9.99999974E-6 : f32
    %21 = vector.broadcast %cst_16 : f32 to vector<2x8x1xf32>
    %22 = arith.addf %18, %21 : vector<2x8x1xf32>
    %23 = math.rsqrt %22 : vector<2x8x1xf32>
    %24 = vector.broadcast %23 : vector<2x8x1xf32> to vector<2x8x32xf32>
    %25 = arith.mulf %20, %24 : vector<2x8x32xf32>
    %26 = vector.broadcast %3 : vector<1x1x32xf32> to vector<2x8x32xf32>
    %27 = arith.mulf %25, %26 : vector<2x8x32xf32>
    %28 = vector.broadcast %4 : vector<1x1x32xf32> to vector<2x8x32xf32>
    %29 = arith.addf %27, %28 : vector<2x8x32xf32>
    %cst_17 = arith.constant 5.000000e-01 : f32
    %30 = vector.broadcast %cst_17 : f32 to vector<2x8x32xf32>
    %31 = arith.mulf %30, %29 : vector<2x8x32xf32>
    %cst_18 = arith.constant 0.707106769 : f32
    %32 = vector.broadcast %cst_18 : f32 to vector<2x8x32xf32>
    %33 = arith.mulf %29, %32 : vector<2x8x32xf32>
    %34 = math.erf %33 : vector<2x8x32xf32>
    %cst_19 = arith.constant 1.000000e+00 : f32
    %35 = vector.broadcast %cst_19 : f32 to vector<2x8x32xf32>
    %36 = arith.addf %35, %34 : vector<2x8x32xf32>
    %37 = arith.mulf %31, %36 : vector<2x8x32xf32>
    %38 = vector.shape_cast %37 : vector<2x8x32xf32> to vector<16x32xf32>
    %39 = arith.truncf %38 : vector<16x32xf32> to vector<16x32xbf16>
    %cst_20 = arith.constant dense<0.000000e+00> : vector<16x96xf32>
    %40 = tpu.matmul %39, %6, %cst_20 {dimension_numbers = #tpu.dot_dimension_numbers<[1], [0], [0], [1], [0, 0, 1, 1], [], []>} : vector<16x32xbf16>, vector<32x96xbf16>, vector<16x96xf32> -> vector<16x96xf32>
    %41 = vector.broadcast %7 : vector<1x96xf32> to vector<16x96xf32>
    %42 = arith.addf %40, %41 : vector<16x96xf32>
    %43 = vector.shape_cast %42 : vector<16x96xf32> to vector<2x8x96xf32>
    %c0_21 = arith.constant 0 : index
    %c0_22 = arith.constant 0 : index
    %c0_23 = arith.constant 0 : index
    %44 = vector.load %arg2[%c0_21, %c0_22, %c0_23] : memref<2x8x32xf32, #tpu.memory_space<vmem>>, vector<2x8x32xf32>
    %c0_24 = arith.constant 0 : index
    %c0_25 = arith.constant 0 : index
    %45 = vector.load %arg6[%c0_24, %c0_25] : memref<32x96xbf16, #tpu.memory_space<vmem>>, vector<32x96xbf16>
    %c0_26 = arith.constant 0 : index
    %c0_27 = arith.constant 0 : index
    %46 = vector.load %arg10[%c0_26, %c0_27] : memref<1x96xf32, #tpu.memory_space<vmem>>, vector<1x96xf32>
    %cst_28 = arith.constant dense<0.000000e+00> : vector<2x8xf32>
    %47 = vector.multi_reduction <add>, %44, %cst_28 [2] : vector<2x8x32xf32> to vector<2x8xf32>
    %48 = vector.shape_cast %47 : vector<2x8xf32> to vector<2x8x1xf32>
    %cst_29 = arith.constant 3.200000e+01 : f32
    %49 = vector.broadcast %cst_29 : f32 to vector<2x8x1xf32>
    %50 = arith.divf %48, %49 : vector<2x8x1xf32>
    %51 = vector.broadcast %50 : vector<2x8x1xf32> to vector<2x8x32xf32>
    %52 = arith.subf %44, %51 : vector<2x8x32xf32>
    %53 = arith.mulf %52, %52 : vector<2x8x32xf32>
    %cst_30 = arith.constant dense<0.000000e+00> : vector<2x8xf32>
    %54 = vector.multi_reduction <add>, %53, %cst_30 [2] : vector<2x8x32xf32> to vector<2x8xf32>
    %55 = vector.shape_cast %54 : vector<2x8xf32> to vector<2x8x1xf32>
    %cst_31 = arith.constant 3.200000e+01 : f32
    %56 = vector.broadcast %cst_31 : f32 to vector<2x8x1xf32>
    %57 = arith.divf %55, %56 : vector<2x8x1xf32>
    %58 = vector.broadcast %50 : vector<2x8x1xf32> to vector<2x8x32xf32>
    %59 = arith.subf %44, %58 : vector<2x8x32xf32>
    %cst_32 = arith.constant 9.99999974E-6 : f32
    %60 = vector.broadcast %cst_32 : f32 to vector<2x8x1xf32>
    %61 = arith.addf %57, %60 : vector<2x8x1xf32>
    %62 = math.rsqrt %61 : vector<2x8x1xf32>
    %63 = vector.broadcast %62 : vector<2x8x1xf32> to vector<2x8x32xf32>
    %64 = arith.mulf %59, %63 : vector<2x8x32xf32>
    %65 = vector.broadcast %3 : vector<1x1x32xf32> to vector<2x8x32xf32>
    %66 = arith.mulf %64, %65 : vector<2x8x32xf32>
    %67 = vector.broadcast %4 : vector<1x1x32xf32> to vector<2x8x32xf32>
    %68 = arith.addf %66, %67 : vector<2x8x32xf32>
    %cst_33 = arith.constant 5.000000e-01 : f32
    %69 = vector.broadcast %cst_33 : f32 to vector<2x8x32xf32>
    %70 = arith.mulf %69, %68 : vector<2x8x32xf32>
    %cst_34 = arith.constant 0.707106769 : f32
    %71 = vector.broadcast %cst_34 : f32 to vector<2x8x32xf32>
    %72 = arith.mulf %68, %71 : vector<2x8x32xf32>
    %73 = math.erf %72 : vector<2x8x32xf32>
    %cst_35 = arith.constant 1.000000e+00 : f32
    %74 = vector.broadcast %cst_35 : f32 to vector<2x8x32xf32>
    %75 = arith.addf %74, %73 : vector<2x8x32xf32>
    %76 = arith.mulf %70, %75 : vector<2x8x32xf32>
    %77 = vector.shape_cast %76 : vector<2x8x32xf32> to vector<16x32xf32>
    %78 = arith.truncf %77 : vector<16x32xf32> to vector<16x32xbf16>
    %cst_36 = arith.constant dense<0.000000e+00> : vector<16x96xf32>
    %79 = tpu.matmul %78, %45, %cst_36 {dimension_numbers = #tpu.dot_dimension_numbers<[1], [0], [0], [1], [0, 0, 1, 1], [], []>} : vector<16x32xbf16>, vector<32x96xbf16>, vector<16x96xf32> -> vector<16x96xf32>
    %80 = vector.broadcast %46 : vector<1x96xf32> to vector<16x96xf32>
    %81 = arith.addf %79, %80 : vector<16x96xf32>
    %82 = vector.shape_cast %81 : vector<16x96xf32> to vector<2x8x96xf32>
    %c0_37 = arith.constant 0 : index
    %c0_38 = arith.constant 0 : index
    %83 = vector.load %arg7[%c0_37, %c0_38] : memref<32x96xbf16, #tpu.memory_space<vmem>>, vector<32x96xbf16>
    %c0_39 = arith.constant 0 : index
    %c0_40 = arith.constant 0 : index
    %84 = vector.load %arg8[%c0_39, %c0_40] : memref<32x96xbf16, #tpu.memory_space<vmem>>, vector<32x96xbf16>
    %c0_41 = arith.constant 0 : index
    %c0_42 = arith.constant 0 : index
    %85 = vector.load %arg11[%c0_41, %c0_42] : memref<1x32xf32, #tpu.memory_space<vmem>>, vector<1x32xf32>
    %c0_43 = arith.constant 0 : index
    %c0_44 = arith.constant 0 : index
    %86 = vector.load %arg12[%c0_43, %c0_44] : memref<1x32xf32, #tpu.memory_space<vmem>>, vector<1x32xf32>
    %c0_45 = arith.constant 0 : index
    %c0_46 = arith.constant 0 : index
    %87 = vector.load %arg15[%c0_45, %c0_46] : memref<2x32xf32, #tpu.memory_space<vmem>>, vector<2x32xf32>
    %c0_47 = arith.constant 0 : index
    %c0_48 = arith.constant 0 : index
    %88 = vector.load %arg16[%c0_47, %c0_48] : memref<2x32xf32, #tpu.memory_space<vmem>>, vector<2x32xf32>
    %89 = vector.extract_strided_slice %43 {offsets = [0, 0, 0], sizes = [2, 1, 96], strides = [1, 1, 1]} : vector<2x8x96xf32> to vector<2x1x96xf32>
    %90 = vector.shape_cast %89 : vector<2x1x96xf32> to vector<2x96xf32>
    %91 = arith.truncf %87 : vector<2x32xf32> to vector<2x32xbf16>
    %cst_49 = arith.constant dense<0.000000e+00> : vector<2x96xf32>
    %92 = tpu.matmul %91, %83, %cst_49 {dimension_numbers = #tpu.dot_dimension_numbers<[1], [0], [0], [1], [0, 0, 1, 1], [], []>} : vector<2x32xbf16>, vector<32x96xbf16>, vector<2x96xf32> -> vector<2x96xf32>
    %93 = vector.extract_strided_slice %90 {offsets = [0, 0], sizes = [2, 32], strides = [1, 1]} : vector<2x96xf32> to vector<2x32xf32>
    %94 = vector.extract_strided_slice %92 {offsets = [0, 0], sizes = [2, 32], strides = [1, 1]} : vector<2x96xf32> to vector<2x32xf32>
    %95 = arith.addf %93, %94 : vector<2x32xf32>
    %96 = arith.negf %95 : vector<2x32xf32>
    %97 = math.exp %96 : vector<2x32xf32>
    %cst_50 = arith.constant 1.000000e+00 : f32
    %98 = vector.broadcast %cst_50 : f32 to vector<2x32xf32>
    %99 = arith.addf %98, %97 : vector<2x32xf32>
    %100 = arith.divf %98, %99 : vector<2x32xf32>
    %101 = vector.extract_strided_slice %90 {offsets = [0, 32], sizes = [2, 32], strides = [1, 1]} : vector<2x96xf32> to vector<2x32xf32>
    %102 = vector.extract_strided_slice %92 {offsets = [0, 32], sizes = [2, 32], strides = [1, 1]} : vector<2x96xf32> to vector<2x32xf32>
    %103 = arith.addf %101, %102 : vector<2x32xf32>
    %104 = arith.negf %103 : vector<2x32xf32>
    %105 = math.exp %104 : vector<2x32xf32>
    %cst_51 = arith.constant 1.000000e+00 : f32
    %106 = vector.broadcast %cst_51 : f32 to vector<2x32xf32>
    %107 = arith.addf %106, %105 : vector<2x32xf32>
    %108 = arith.divf %106, %107 : vector<2x32xf32>
    %109 = vector.extract_strided_slice %90 {offsets = [0, 64], sizes = [2, 32], strides = [1, 1]} : vector<2x96xf32> to vector<2x32xf32>
    %110 = vector.extract_strided_slice %92 {offsets = [0, 64], sizes = [2, 32], strides = [1, 1]} : vector<2x96xf32> to vector<2x32xf32>
    %111 = vector.broadcast %85 : vector<1x32xf32> to vector<2x32xf32>
    %112 = arith.addf %110, %111 : vector<2x32xf32>
    %113 = arith.mulf %100, %112 : vector<2x32xf32>
    %114 = arith.addf %109, %113 : vector<2x32xf32>
    %115 = math.tanh %114 : vector<2x32xf32>
    %cst_52 = arith.constant 1.000000e+00 : f32
    %116 = vector.broadcast %cst_52 : f32 to vector<2x32xf32>
    %117 = arith.subf %116, %108 : vector<2x32xf32>
    %118 = arith.mulf %117, %115 : vector<2x32xf32>
    %119 = arith.mulf %108, %87 : vector<2x32xf32>
    %120 = arith.addf %118, %119 : vector<2x32xf32>
    %121 = vector.extract_strided_slice %82 {offsets = [0, 7, 0], sizes = [2, 1, 96], strides = [1, 1, 1]} : vector<2x8x96xf32> to vector<2x1x96xf32>
    %122 = vector.shape_cast %121 : vector<2x1x96xf32> to vector<2x96xf32>
    %123 = arith.truncf %88 : vector<2x32xf32> to vector<2x32xbf16>
    %cst_53 = arith.constant dense<0.000000e+00> : vector<2x96xf32>
    %124 = tpu.matmul %123, %84, %cst_53 {dimension_numbers = #tpu.dot_dimension_numbers<[1], [0], [0], [1], [0, 0, 1, 1], [], []>} : vector<2x32xbf16>, vector<32x96xbf16>, vector<2x96xf32> -> vector<2x96xf32>
    %125 = vector.extract_strided_slice %122 {offsets = [0, 0], sizes = [2, 32], strides = [1, 1]} : vector<2x96xf32> to vector<2x32xf32>
    %126 = vector.extract_strided_slice %124 {offsets = [0, 0], sizes = [2, 32], strides = [1, 1]} : vector<2x96xf32> to vector<2x32xf32>
    %127 = arith.addf %125, %126 : vector<2x32xf32>
    %128 = arith.negf %127 : vector<2x32xf32>
    %129 = math.exp %128 : vector<2x32xf32>
    %cst_54 = arith.constant 1.000000e+00 : f32
    %130 = vector.broadcast %cst_54 : f32 to vector<2x32xf32>
    %131 = arith.addf %130, %129 : vector<2x32xf32>
    %132 = arith.divf %130, %131 : vector<2x32xf32>
    %133 = vector.extract_strided_slice %122 {offsets = [0, 32], sizes = [2, 32], strides = [1, 1]} : vector<2x96xf32> to vector<2x32xf32>
    %134 = vector.extract_strided_slice %124 {offsets = [0, 32], sizes = [2, 32], strides = [1, 1]} : vector<2x96xf32> to vector<2x32xf32>
    %135 = arith.addf %133, %134 : vector<2x32xf32>
    %136 = arith.negf %135 : vector<2x32xf32>
    %137 = math.exp %136 : vector<2x32xf32>
    %cst_55 = arith.constant 1.000000e+00 : f32
    %138 = vector.broadcast %cst_55 : f32 to vector<2x32xf32>
    %139 = arith.addf %138, %137 : vector<2x32xf32>
    %140 = arith.divf %138, %139 : vector<2x32xf32>
    %141 = vector.extract_strided_slice %122 {offsets = [0, 64], sizes = [2, 32], strides = [1, 1]} : vector<2x96xf32> to vector<2x32xf32>
    %142 = vector.extract_strided_slice %124 {offsets = [0, 64], sizes = [2, 32], strides = [1, 1]} : vector<2x96xf32> to vector<2x32xf32>
    %143 = vector.broadcast %86 : vector<1x32xf32> to vector<2x32xf32>
    %144 = arith.addf %142, %143 : vector<2x32xf32>
    %145 = arith.mulf %132, %144 : vector<2x32xf32>
    %146 = arith.addf %141, %145 : vector<2x32xf32>
    %147 = math.tanh %146 : vector<2x32xf32>
    %cst_56 = arith.constant 1.000000e+00 : f32
    %148 = vector.broadcast %cst_56 : f32 to vector<2x32xf32>
    %149 = arith.subf %148, %140 : vector<2x32xf32>
    %150 = arith.mulf %149, %147 : vector<2x32xf32>
    %151 = arith.mulf %140, %88 : vector<2x32xf32>
    %152 = arith.addf %150, %151 : vector<2x32xf32>
    %c0_57 = arith.constant 0 : index
    %c0_58 = arith.constant 0 : index
    %c0_59 = arith.constant 0 : index
    %153 = vector.load %arg13[%c0_57, %c0_58, %c0_59] : memref<2x8x32xf32, #tpu.memory_space<vmem>>, vector<2x1x32xf32>
    %154 = vector.shape_cast %153 : vector<2x1x32xf32> to vector<2x32xf32>
    %155 = vector.shape_cast %120 : vector<2x32xf32> to vector<2x1x32xf32>
    tpu.vector_store %arg13[%c0_57, %c0_58, %c0_59], %155 {strides = array<i32>} : memref<2x8x32xf32, #tpu.memory_space<vmem>>, vector<2x1x32xf32>,
    %c0_60 = arith.constant 0 : index
    %c7 = arith.constant 7 : index
    %c0_61 = arith.constant 0 : index
    %156 = vector.load %arg14[%c0_60, %c7, %c0_61] : memref<2x8x32xf32, #tpu.memory_space<vmem>>, vector<2x1x32xf32>
    %157 = vector.shape_cast %156 : vector<2x1x32xf32> to vector<2x32xf32>
    %158 = vector.shape_cast %152 : vector<2x32xf32> to vector<2x1x32xf32>
    tpu.vector_store %arg14[%c0_60, %c7, %c0_61], %158 {strides = array<i32>} : memref<2x8x32xf32, #tpu.memory_space<vmem>>, vector<2x1x32xf32>,
    %159 = vector.extract_strided_slice %43 {offsets = [0, 1, 0], sizes = [2, 1, 96], strides = [1, 1, 1]} : vector<2x8x96xf32> to vector<2x1x96xf32>
    %160 = vector.shape_cast %159 : vector<2x1x96xf32> to vector<2x96xf32>
    %161 = arith.truncf %120 : vector<2x32xf32> to vector<2x32xbf16>
    %cst_62 = arith.constant dense<0.000000e+00> : vector<2x96xf32>
    %162 = tpu.matmul %161, %83, %cst_62 {dimension_numbers = #tpu.dot_dimension_numbers<[1], [0], [0], [1], [0, 0, 1, 1], [], []>} : vector<2x32xbf16>, vector<32x96xbf16>, vector<2x96xf32> -> vector<2x96xf32>
    %163 = vector.extract_strided_slice %160 {offsets = [0, 0], sizes = [2, 32], strides = [1, 1]} : vector<2x96xf32> to vector<2x32xf32>
    %164 = vector.extract_strided_slice %162 {offsets = [0, 0], sizes = [2, 32], strides = [1, 1]} : vector<2x96xf32> to vector<2x32xf32>
    %165 = arith.addf %163, %164 : vector<2x32xf32>
    %166 = arith.negf %165 : vector<2x32xf32>
    %167 = math.exp %166 : vector<2x32xf32>
    %cst_63 = arith.constant 1.000000e+00 : f32
    %168 = vector.broadcast %cst_63 : f32 to vector<2x32xf32>
    %169 = arith.addf %168, %167 : vector<2x32xf32>
    %170 = arith.divf %168, %169 : vector<2x32xf32>
    %171 = vector.extract_strided_slice %160 {offsets = [0, 32], sizes = [2, 32], strides = [1, 1]} : vector<2x96xf32> to vector<2x32xf32>
    %172 = vector.extract_strided_slice %162 {offsets = [0, 32], sizes = [2, 32], strides = [1, 1]} : vector<2x96xf32> to vector<2x32xf32>
    %173 = arith.addf %171, %172 : vector<2x32xf32>
    %174 = arith.negf %173 : vector<2x32xf32>
    %175 = math.exp %174 : vector<2x32xf32>
    %cst_64 = arith.constant 1.000000e+00 : f32
    %176 = vector.broadcast %cst_64 : f32 to vector<2x32xf32>
    %177 = arith.addf %176, %175 : vector<2x32xf32>
    %178 = arith.divf %176, %177 : vector<2x32xf32>
    %179 = vector.extract_strided_slice %160 {offsets = [0, 64], sizes = [2, 32], strides = [1, 1]} : vector<2x96xf32> to vector<2x32xf32>
    %180 = vector.extract_strided_slice %162 {offsets = [0, 64], sizes = [2, 32], strides = [1, 1]} : vector<2x96xf32> to vector<2x32xf32>
    %181 = vector.broadcast %85 : vector<1x32xf32> to vector<2x32xf32>
    %182 = arith.addf %180, %181 : vector<2x32xf32>
    %183 = arith.mulf %170, %182 : vector<2x32xf32>
    %184 = arith.addf %179, %183 : vector<2x32xf32>
    %185 = math.tanh %184 : vector<2x32xf32>
    %cst_65 = arith.constant 1.000000e+00 : f32
    %186 = vector.broadcast %cst_65 : f32 to vector<2x32xf32>
    %187 = arith.subf %186, %178 : vector<2x32xf32>
    %188 = arith.mulf %187, %185 : vector<2x32xf32>
    %189 = arith.mulf %178, %120 : vector<2x32xf32>
    %190 = arith.addf %188, %189 : vector<2x32xf32>
    %191 = vector.extract_strided_slice %82 {offsets = [0, 6, 0], sizes = [2, 1, 96], strides = [1, 1, 1]} : vector<2x8x96xf32> to vector<2x1x96xf32>
    %192 = vector.shape_cast %191 : vector<2x1x96xf32> to vector<2x96xf32>
    %193 = arith.truncf %152 : vector<2x32xf32> to vector<2x32xbf16>
    %cst_66 = arith.constant dense<0.000000e+00> : vector<2x96xf32>
    %194 = tpu.matmul %193, %84, %cst_66 {dimension_numbers = #tpu.dot_dimension_numbers<[1], [0], [0], [1], [0, 0, 1, 1], [], []>} : vector<2x32xbf16>, vector<32x96xbf16>, vector<2x96xf32> -> vector<2x96xf32>
    %195 = vector.extract_strided_slice %192 {offsets = [0, 0], sizes = [2, 32], strides = [1, 1]} : vector<2x96xf32> to vector<2x32xf32>
    %196 = vector.extract_strided_slice %194 {offsets = [0, 0], sizes = [2, 32], strides = [1, 1]} : vector<2x96xf32> to vector<2x32xf32>
    %197 = arith.addf %195, %196 : vector<2x32xf32>
    %198 = arith.negf %197 : vector<2x32xf32>
    %199 = math.exp %198 : vector<2x32xf32>
    %cst_67 = arith.constant 1.000000e+00 : f32
    %200 = vector.broadcast %cst_67 : f32 to vector<2x32xf32>
    %201 = arith.addf %200, %199 : vector<2x32xf32>
    %202 = arith.divf %200, %201 : vector<2x32xf32>
    %203 = vector.extract_strided_slice %192 {offsets = [0, 32], sizes = [2, 32], strides = [1, 1]} : vector<2x96xf32> to vector<2x32xf32>
    %204 = vector.extract_strided_slice %194 {offsets = [0, 32], sizes = [2, 32], strides = [1, 1]} : vector<2x96xf32> to vector<2x32xf32>
    %205 = arith.addf %203, %204 : vector<2x32xf32>
    %206 = arith.negf %205 : vector<2x32xf32>
    %207 = math.exp %206 : vector<2x32xf32>
    %cst_68 = arith.constant 1.000000e+00 : f32
    %208 = vector.broadcast %cst_68 : f32 to vector<2x32xf32>
    %209 = arith.addf %208, %207 : vector<2x32xf32>
    %210 = arith.divf %208, %209 : vector<2x32xf32>
    %211 = vector.extract_strided_slice %192 {offsets = [0, 64], sizes = [2, 32], strides = [1, 1]} : vector<2x96xf32> to vector<2x32xf32>
    %212 = vector.extract_strided_slice %194 {offsets = [0, 64], sizes = [2, 32], strides = [1, 1]} : vector<2x96xf32> to vector<2x32xf32>
    %213 = vector.broadcast %86 : vector<1x32xf32> to vector<2x32xf32>
    %214 = arith.addf %212, %213 : vector<2x32xf32>
    %215 = arith.mulf %202, %214 : vector<2x32xf32>
    %216 = arith.addf %211, %215 : vector<2x32xf32>
    %217 = math.tanh %216 : vector<2x32xf32>
    %cst_69 = arith.constant 1.000000e+00 : f32
    %218 = vector.broadcast %cst_69 : f32 to vector<2x32xf32>
    %219 = arith.subf %218, %210 : vector<2x32xf32>
    %220 = arith.mulf %219, %217 : vector<2x32xf32>
    %221 = arith.mulf %210, %152 : vector<2x32xf32>
    %222 = arith.addf %220, %221 : vector<2x32xf32>
    %c0_70 = arith.constant 0 : index
    %c1 = arith.constant 1 : index
    %c0_71 = arith.constant 0 : index
    %223 = vector.load %arg13[%c0_70, %c1, %c0_71] : memref<2x8x32xf32, #tpu.memory_space<vmem>>, vector<2x1x32xf32>
    %224 = vector.shape_cast %223 : vector<2x1x32xf32> to vector<2x32xf32>
    %225 = vector.shape_cast %190 : vector<2x32xf32> to vector<2x1x32xf32>
    tpu.vector_store %arg13[%c0_70, %c1, %c0_71], %225 {strides = array<i32>} : memref<2x8x32xf32, #tpu.memory_space<vmem>>, vector<2x1x32xf32>,
    %c0_72 = arith.constant 0 : index
    %c6 = arith.constant 6 : index
    %c0_73 = arith.constant 0 : index
    %226 = vector.load %arg14[%c0_72, %c6, %c0_73] : memref<2x8x32xf32, #tpu.memory_space<vmem>>, vector<2x1x32xf32>
    %227 = vector.shape_cast %226 : vector<2x1x32xf32> to vector<2x32xf32>
    %228 = vector.shape_cast %222 : vector<2x32xf32> to vector<2x1x32xf32>
    tpu.vector_store %arg14[%c0_72, %c6, %c0_73], %228 {strides = array<i32>} : memref<2x8x32xf32, #tpu.memory_space<vmem>>, vector<2x1x32xf32>,
    %229 = vector.extract_strided_slice %43 {offsets = [0, 2, 0], sizes = [2, 1, 96], strides = [1, 1, 1]} : vector<2x8x96xf32> to vector<2x1x96xf32>
    %230 = vector.shape_cast %229 : vector<2x1x96xf32> to vector<2x96xf32>
    %231 = arith.truncf %190 : vector<2x32xf32> to vector<2x32xbf16>
    %cst_74 = arith.constant dense<0.000000e+00> : vector<2x96xf32>
    %232 = tpu.matmul %231, %83, %cst_74 {dimension_numbers = #tpu.dot_dimension_numbers<[1], [0], [0], [1], [0, 0, 1, 1], [], []>} : vector<2x32xbf16>, vector<32x96xbf16>, vector<2x96xf32> -> vector<2x96xf32>
    %233 = vector.extract_strided_slice %230 {offsets = [0, 0], sizes = [2, 32], strides = [1, 1]} : vector<2x96xf32> to vector<2x32xf32>
    %234 = vector.extract_strided_slice %232 {offsets = [0, 0], sizes = [2, 32], strides = [1, 1]} : vector<2x96xf32> to vector<2x32xf32>
    %235 = arith.addf %233, %234 : vector<2x32xf32>
    %236 = arith.negf %235 : vector<2x32xf32>
    %237 = math.exp %236 : vector<2x32xf32>
    %cst_75 = arith.constant 1.000000e+00 : f32
    %238 = vector.broadcast %cst_75 : f32 to vector<2x32xf32>
    %239 = arith.addf %238, %237 : vector<2x32xf32>
    %240 = arith.divf %238, %239 : vector<2x32xf32>
    %241 = vector.extract_strided_slice %230 {offsets = [0, 32], sizes = [2, 32], strides = [1, 1]} : vector<2x96xf32> to vector<2x32xf32>
    %242 = vector.extract_strided_slice %232 {offsets = [0, 32], sizes = [2, 32], strides = [1, 1]} : vector<2x96xf32> to vector<2x32xf32>
    %243 = arith.addf %241, %242 : vector<2x32xf32>
    %244 = arith.negf %243 : vector<2x32xf32>
    %245 = math.exp %244 : vector<2x32xf32>
    %cst_76 = arith.constant 1.000000e+00 : f32
    %246 = vector.broadcast %cst_76 : f32 to vector<2x32xf32>
    %247 = arith.addf %246, %245 : vector<2x32xf32>
    %248 = arith.divf %246, %247 : vector<2x32xf32>
    %249 = vector.extract_strided_slice %230 {offsets = [0, 64], sizes = [2, 32], strides = [1, 1]} : vector<2x96xf32> to vector<2x32xf32>
    %250 = vector.extract_strided_slice %232 {offsets = [0, 64], sizes = [2, 32], strides = [1, 1]} : vector<2x96xf32> to vector<2x32xf32>
    %251 = vector.broadcast %85 : vector<1x32xf32> to vector<2x32xf32>
    %252 = arith.addf %250, %251 : vector<2x32xf32>
    %253 = arith.mulf %240, %252 : vector<2x32xf32>
    %254 = arith.addf %249, %253 : vector<2x32xf32>
    %255 = math.tanh %254 : vector<2x32xf32>
    %cst_77 = arith.constant 1.000000e+00 : f32
    %256 = vector.broadcast %cst_77 : f32 to vector<2x32xf32>
    %257 = arith.subf %256, %248 : vector<2x32xf32>
    %258 = arith.mulf %257, %255 : vector<2x32xf32>
    %259 = arith.mulf %248, %190 : vector<2x32xf32>
    %260 = arith.addf %258, %259 : vector<2x32xf32>
    %261 = vector.extract_strided_slice %82 {offsets = [0, 5, 0], sizes = [2, 1, 96], strides = [1, 1, 1]} : vector<2x8x96xf32> to vector<2x1x96xf32>
    %262 = vector.shape_cast %261 : vector<2x1x96xf32> to vector<2x96xf32>
    %263 = arith.truncf %222 : vector<2x32xf32> to vector<2x32xbf16>
    %cst_78 = arith.constant dense<0.000000e+00> : vector<2x96xf32>
    %264 = tpu.matmul %263, %84, %cst_78 {dimension_numbers = #tpu.dot_dimension_numbers<[1], [0], [0], [1], [0, 0, 1, 1], [], []>} : vector<2x32xbf16>, vector<32x96xbf16>, vector<2x96xf32> -> vector<2x96xf32>
    %265 = vector.extract_strided_slice %262 {offsets = [0, 0], sizes = [2, 32], strides = [1, 1]} : vector<2x96xf32> to vector<2x32xf32>
    %266 = vector.extract_strided_slice %264 {offsets = [0, 0], sizes = [2, 32], strides = [1, 1]} : vector<2x96xf32> to vector<2x32xf32>
    %267 = arith.addf %265, %266 : vector<2x32xf32>
    %268 = arith.negf %267 : vector<2x32xf32>
    %269 = math.exp %268 : vector<2x32xf32>
    %cst_79 = arith.constant 1.000000e+00 : f32
    %270 = vector.broadcast %cst_79 : f32 to vector<2x32xf32>
    %271 = arith.addf %270, %269 : vector<2x32xf32>
    %272 = arith.divf %270, %271 : vector<2x32xf32>
    %273 = vector.extract_strided_slice %262 {offsets = [0, 32], sizes = [2, 32], strides = [1, 1]} : vector<2x96xf32> to vector<2x32xf32>
    %274 = vector.extract_strided_slice %264 {offsets = [0, 32], sizes = [2, 32], strides = [1, 1]} : vector<2x96xf32> to vector<2x32xf32>
    %275 = arith.addf %273, %274 : vector<2x32xf32>
    %276 = arith.negf %275 : vector<2x32xf32>
    %277 = math.exp %276 : vector<2x32xf32>
    %cst_80 = arith.constant 1.000000e+00 : f32
    %278 = vector.broadcast %cst_80 : f32 to vector<2x32xf32>
    %279 = arith.addf %278, %277 : vector<2x32xf32>
    %280 = arith.divf %278, %279 : vector<2x32xf32>
    %281 = vector.extract_strided_slice %262 {offsets = [0, 64], sizes = [2, 32], strides = [1, 1]} : vector<2x96xf32> to vector<2x32xf32>
    %282 = vector.extract_strided_slice %264 {offsets = [0, 64], sizes = [2, 32], strides = [1, 1]} : vector<2x96xf32> to vector<2x32xf32>
    %283 = vector.broadcast %86 : vector<1x32xf32> to vector<2x32xf32>
    %284 = arith.addf %282, %283 : vector<2x32xf32>
    %285 = arith.mulf %272, %284 : vector<2x32xf32>
    %286 = arith.addf %281, %285 : vector<2x32xf32>
    %287 = math.tanh %286 : vector<2x32xf32>
    %cst_81 = arith.constant 1.000000e+00 : f32
    %288 = vector.broadcast %cst_81 : f32 to vector<2x32xf32>
    %289 = arith.subf %288, %280 : vector<2x32xf32>
    %290 = arith.mulf %289, %287 : vector<2x32xf32>
    %291 = arith.mulf %280, %222 : vector<2x32xf32>
    %292 = arith.addf %290, %291 : vector<2x32xf32>
    %c0_82 = arith.constant 0 : index
    %c2 = arith.constant 2 : index
    %c0_83 = arith.constant 0 : index
    %293 = vector.load %arg13[%c0_82, %c2, %c0_83] : memref<2x8x32xf32, #tpu.memory_space<vmem>>, vector<2x1x32xf32>
    %294 = vector.shape_cast %293 : vector<2x1x32xf32> to vector<2x32xf32>
    %295 = vector.shape_cast %260 : vector<2x32xf32> to vector<2x1x32xf32>
    tpu.vector_store %arg13[%c0_82, %c2, %c0_83], %295 {strides = array<i32>} : memref<2x8x32xf32, #tpu.memory_space<vmem>>, vector<2x1x32xf32>,
    %c0_84 = arith.constant 0 : index
    %c5 = arith.constant 5 : index
    %c0_85 = arith.constant 0 : index
    %296 = vector.load %arg14[%c0_84, %c5, %c0_85] : memref<2x8x32xf32, #tpu.memory_space<vmem>>, vector<2x1x32xf32>
    %297 = vector.shape_cast %296 : vector<2x1x32xf32> to vector<2x32xf32>
    %298 = vector.shape_cast %292 : vector<2x32xf32> to vector<2x1x32xf32>
    tpu.vector_store %arg14[%c0_84, %c5, %c0_85], %298 {strides = array<i32>} : memref<2x8x32xf32, #tpu.memory_space<vmem>>, vector<2x1x32xf32>,
    %299 = vector.extract_strided_slice %43 {offsets = [0, 3, 0], sizes = [2, 1, 96], strides = [1, 1, 1]} : vector<2x8x96xf32> to vector<2x1x96xf32>
    %300 = vector.shape_cast %299 : vector<2x1x96xf32> to vector<2x96xf32>
    %301 = arith.truncf %260 : vector<2x32xf32> to vector<2x32xbf16>
    %cst_86 = arith.constant dense<0.000000e+00> : vector<2x96xf32>
    %302 = tpu.matmul %301, %83, %cst_86 {dimension_numbers = #tpu.dot_dimension_numbers<[1], [0], [0], [1], [0, 0, 1, 1], [], []>} : vector<2x32xbf16>, vector<32x96xbf16>, vector<2x96xf32> -> vector<2x96xf32>
    %303 = vector.extract_strided_slice %300 {offsets = [0, 0], sizes = [2, 32], strides = [1, 1]} : vector<2x96xf32> to vector<2x32xf32>
    %304 = vector.extract_strided_slice %302 {offsets = [0, 0], sizes = [2, 32], strides = [1, 1]} : vector<2x96xf32> to vector<2x32xf32>
    %305 = arith.addf %303, %304 : vector<2x32xf32>
    %306 = arith.negf %305 : vector<2x32xf32>
    %307 = math.exp %306 : vector<2x32xf32>
    %cst_87 = arith.constant 1.000000e+00 : f32
    %308 = vector.broadcast %cst_87 : f32 to vector<2x32xf32>
    %309 = arith.addf %308, %307 : vector<2x32xf32>
    %310 = arith.divf %308, %309 : vector<2x32xf32>
    %311 = vector.extract_strided_slice %300 {offsets = [0, 32], sizes = [2, 32], strides = [1, 1]} : vector<2x96xf32> to vector<2x32xf32>
    %312 = vector.extract_strided_slice %302 {offsets = [0, 32], sizes = [2, 32], strides = [1, 1]} : vector<2x96xf32> to vector<2x32xf32>
    %313 = arith.addf %311, %312 : vector<2x32xf32>
    %314 = arith.negf %313 : vector<2x32xf32>
    %315 = math.exp %314 : vector<2x32xf32>
    %cst_88 = arith.constant 1.000000e+00 : f32
    %316 = vector.broadcast %cst_88 : f32 to vector<2x32xf32>
    %317 = arith.addf %316, %315 : vector<2x32xf32>
    %318 = arith.divf %316, %317 : vector<2x32xf32>
    %319 = vector.extract_strided_slice %300 {offsets = [0, 64], sizes = [2, 32], strides = [1, 1]} : vector<2x96xf32> to vector<2x32xf32>
    %320 = vector.extract_strided_slice %302 {offsets = [0, 64], sizes = [2, 32], strides = [1, 1]} : vector<2x96xf32> to vector<2x32xf32>
    %321 = vector.broadcast %85 : vector<1x32xf32> to vector<2x32xf32>
    %322 = arith.addf %320, %321 : vector<2x32xf32>
    %323 = arith.mulf %310, %322 : vector<2x32xf32>
    %324 = arith.addf %319, %323 : vector<2x32xf32>
    %325 = math.tanh %324 : vector<2x32xf32>
    %cst_89 = arith.constant 1.000000e+00 : f32
    %326 = vector.broadcast %cst_89 : f32 to vector<2x32xf32>
    %327 = arith.subf %326, %318 : vector<2x32xf32>
    %328 = arith.mulf %327, %325 : vector<2x32xf32>
    %329 = arith.mulf %318, %260 : vector<2x32xf32>
    %330 = arith.addf %328, %329 : vector<2x32xf32>
    %331 = vector.extract_strided_slice %82 {offsets = [0, 4, 0], sizes = [2, 1, 96], strides = [1, 1, 1]} : vector<2x8x96xf32> to vector<2x1x96xf32>
    %332 = vector.shape_cast %331 : vector<2x1x96xf32> to vector<2x96xf32>
    %333 = arith.truncf %292 : vector<2x32xf32> to vector<2x32xbf16>
    %cst_90 = arith.constant dense<0.000000e+00> : vector<2x96xf32>
    %334 = tpu.matmul %333, %84, %cst_90 {dimension_numbers = #tpu.dot_dimension_numbers<[1], [0], [0], [1], [0, 0, 1, 1], [], []>} : vector<2x32xbf16>, vector<32x96xbf16>, vector<2x96xf32> -> vector<2x96xf32>
    %335 = vector.extract_strided_slice %332 {offsets = [0, 0], sizes = [2, 32], strides = [1, 1]} : vector<2x96xf32> to vector<2x32xf32>
    %336 = vector.extract_strided_slice %334 {offsets = [0, 0], sizes = [2, 32], strides = [1, 1]} : vector<2x96xf32> to vector<2x32xf32>
    %337 = arith.addf %335, %336 : vector<2x32xf32>
    %338 = arith.negf %337 : vector<2x32xf32>
    %339 = math.exp %338 : vector<2x32xf32>
    %cst_91 = arith.constant 1.000000e+00 : f32
    %340 = vector.broadcast %cst_91 : f32 to vector<2x32xf32>
    %341 = arith.addf %340, %339 : vector<2x32xf32>
    %342 = arith.divf %340, %341 : vector<2x32xf32>
    %343 = vector.extract_strided_slice %332 {offsets = [0, 32], sizes = [2, 32], strides = [1, 1]} : vector<2x96xf32> to vector<2x32xf32>
    %344 = vector.extract_strided_slice %334 {offsets = [0, 32], sizes = [2, 32], strides = [1, 1]} : vector<2x96xf32> to vector<2x32xf32>
    %345 = arith.addf %343, %344 : vector<2x32xf32>
    %346 = arith.negf %345 : vector<2x32xf32>
    %347 = math.exp %346 : vector<2x32xf32>
    %cst_92 = arith.constant 1.000000e+00 : f32
    %348 = vector.broadcast %cst_92 : f32 to vector<2x32xf32>
    %349 = arith.addf %348, %347 : vector<2x32xf32>
    %350 = arith.divf %348, %349 : vector<2x32xf32>
    %351 = vector.extract_strided_slice %332 {offsets = [0, 64], sizes = [2, 32], strides = [1, 1]} : vector<2x96xf32> to vector<2x32xf32>
    %352 = vector.extract_strided_slice %334 {offsets = [0, 64], sizes = [2, 32], strides = [1, 1]} : vector<2x96xf32> to vector<2x32xf32>
    %353 = vector.broadcast %86 : vector<1x32xf32> to vector<2x32xf32>
    %354 = arith.addf %352, %353 : vector<2x32xf32>
    %355 = arith.mulf %342, %354 : vector<2x32xf32>
    %356 = arith.addf %351, %355 : vector<2x32xf32>
    %357 = math.tanh %356 : vector<2x32xf32>
    %cst_93 = arith.constant 1.000000e+00 : f32
    %358 = vector.broadcast %cst_93 : f32 to vector<2x32xf32>
    %359 = arith.subf %358, %350 : vector<2x32xf32>
    %360 = arith.mulf %359, %357 : vector<2x32xf32>
    %361 = arith.mulf %350, %292 : vector<2x32xf32>
    %362 = arith.addf %360, %361 : vector<2x32xf32>
    %c0_94 = arith.constant 0 : index
    %c3 = arith.constant 3 : index
    %c0_95 = arith.constant 0 : index
    %363 = vector.load %arg13[%c0_94, %c3, %c0_95] : memref<2x8x32xf32, #tpu.memory_space<vmem>>, vector<2x1x32xf32>
    %364 = vector.shape_cast %363 : vector<2x1x32xf32> to vector<2x32xf32>
    %365 = vector.shape_cast %330 : vector<2x32xf32> to vector<2x1x32xf32>
    tpu.vector_store %arg13[%c0_94, %c3, %c0_95], %365 {strides = array<i32>} : memref<2x8x32xf32, #tpu.memory_space<vmem>>, vector<2x1x32xf32>,
    %c0_96 = arith.constant 0 : index
    %c4 = arith.constant 4 : index
    %c0_97 = arith.constant 0 : index
    %366 = vector.load %arg14[%c0_96, %c4, %c0_97] : memref<2x8x32xf32, #tpu.memory_space<vmem>>, vector<2x1x32xf32>
    %367 = vector.shape_cast %366 : vector<2x1x32xf32> to vector<2x32xf32>
    %368 = vector.shape_cast %362 : vector<2x32xf32> to vector<2x1x32xf32>
    tpu.vector_store %arg14[%c0_96, %c4, %c0_97], %368 {strides = array<i32>} : memref<2x8x32xf32, #tpu.memory_space<vmem>>, vector<2x1x32xf32>,
    %369 = vector.extract_strided_slice %43 {offsets = [0, 4, 0], sizes = [2, 1, 96], strides = [1, 1, 1]} : vector<2x8x96xf32> to vector<2x1x96xf32>
    %370 = vector.shape_cast %369 : vector<2x1x96xf32> to vector<2x96xf32>
    %371 = arith.truncf %330 : vector<2x32xf32> to vector<2x32xbf16>
    %cst_98 = arith.constant dense<0.000000e+00> : vector<2x96xf32>
    %372 = tpu.matmul %371, %83, %cst_98 {dimension_numbers = #tpu.dot_dimension_numbers<[1], [0], [0], [1], [0, 0, 1, 1], [], []>} : vector<2x32xbf16>, vector<32x96xbf16>, vector<2x96xf32> -> vector<2x96xf32>
    %373 = vector.extract_strided_slice %370 {offsets = [0, 0], sizes = [2, 32], strides = [1, 1]} : vector<2x96xf32> to vector<2x32xf32>
    %374 = vector.extract_strided_slice %372 {offsets = [0, 0], sizes = [2, 32], strides = [1, 1]} : vector<2x96xf32> to vector<2x32xf32>
    %375 = arith.addf %373, %374 : vector<2x32xf32>
    %376 = arith.negf %375 : vector<2x32xf32>
    %377 = math.exp %376 : vector<2x32xf32>
    %cst_99 = arith.constant 1.000000e+00 : f32
    %378 = vector.broadcast %cst_99 : f32 to vector<2x32xf32>
    %379 = arith.addf %378, %377 : vector<2x32xf32>
    %380 = arith.divf %378, %379 : vector<2x32xf32>
    %381 = vector.extract_strided_slice %370 {offsets = [0, 32], sizes = [2, 32], strides = [1, 1]} : vector<2x96xf32> to vector<2x32xf32>
    %382 = vector.extract_strided_slice %372 {offsets = [0, 32], sizes = [2, 32], strides = [1, 1]} : vector<2x96xf32> to vector<2x32xf32>
    %383 = arith.addf %381, %382 : vector<2x32xf32>
    %384 = arith.negf %383 : vector<2x32xf32>
    %385 = math.exp %384 : vector<2x32xf32>
    %cst_100 = arith.constant 1.000000e+00 : f32
    %386 = vector.broadcast %cst_100 : f32 to vector<2x32xf32>
    %387 = arith.addf %386, %385 : vector<2x32xf32>
    %388 = arith.divf %386, %387 : vector<2x32xf32>
    %389 = vector.extract_strided_slice %370 {offsets = [0, 64], sizes = [2, 32], strides = [1, 1]} : vector<2x96xf32> to vector<2x32xf32>
    %390 = vector.extract_strided_slice %372 {offsets = [0, 64], sizes = [2, 32], strides = [1, 1]} : vector<2x96xf32> to vector<2x32xf32>
    %391 = vector.broadcast %85 : vector<1x32xf32> to vector<2x32xf32>
    %392 = arith.addf %390, %391 : vector<2x32xf32>
    %393 = arith.mulf %380, %392 : vector<2x32xf32>
    %394 = arith.addf %389, %393 : vector<2x32xf32>
    %395 = math.tanh %394 : vector<2x32xf32>
    %cst_101 = arith.constant 1.000000e+00 : f32
    %396 = vector.broadcast %cst_101 : f32 to vector<2x32xf32>
    %397 = arith.subf %396, %388 : vector<2x32xf32>
    %398 = arith.mulf %397, %395 : vector<2x32xf32>
    %399 = arith.mulf %388, %330 : vector<2x32xf32>
    %400 = arith.addf %398, %399 : vector<2x32xf32>
    %401 = vector.extract_strided_slice %82 {offsets = [0, 3, 0], sizes = [2, 1, 96], strides = [1, 1, 1]} : vector<2x8x96xf32> to vector<2x1x96xf32>
    %402 = vector.shape_cast %401 : vector<2x1x96xf32> to vector<2x96xf32>
    %403 = arith.truncf %362 : vector<2x32xf32> to vector<2x32xbf16>
    %cst_102 = arith.constant dense<0.000000e+00> : vector<2x96xf32>
    %404 = tpu.matmul %403, %84, %cst_102 {dimension_numbers = #tpu.dot_dimension_numbers<[1], [0], [0], [1], [0, 0, 1, 1], [], []>} : vector<2x32xbf16>, vector<32x96xbf16>, vector<2x96xf32> -> vector<2x96xf32>
    %405 = vector.extract_strided_slice %402 {offsets = [0, 0], sizes = [2, 32], strides = [1, 1]} : vector<2x96xf32> to vector<2x32xf32>
    %406 = vector.extract_strided_slice %404 {offsets = [0, 0], sizes = [2, 32], strides = [1, 1]} : vector<2x96xf32> to vector<2x32xf32>
    %407 = arith.addf %405, %406 : vector<2x32xf32>
    %408 = arith.negf %407 : vector<2x32xf32>
    %409 = math.exp %408 : vector<2x32xf32>
    %cst_103 = arith.constant 1.000000e+00 : f32
    %410 = vector.broadcast %cst_103 : f32 to vector<2x32xf32>
    %411 = arith.addf %410, %409 : vector<2x32xf32>
    %412 = arith.divf %410, %411 : vector<2x32xf32>
    %413 = vector.extract_strided_slice %402 {offsets = [0, 32], sizes = [2, 32], strides = [1, 1]} : vector<2x96xf32> to vector<2x32xf32>
    %414 = vector.extract_strided_slice %404 {offsets = [0, 32], sizes = [2, 32], strides = [1, 1]} : vector<2x96xf32> to vector<2x32xf32>
    %415 = arith.addf %413, %414 : vector<2x32xf32>
    %416 = arith.negf %415 : vector<2x32xf32>
    %417 = math.exp %416 : vector<2x32xf32>
    %cst_104 = arith.constant 1.000000e+00 : f32
    %418 = vector.broadcast %cst_104 : f32 to vector<2x32xf32>
    %419 = arith.addf %418, %417 : vector<2x32xf32>
    %420 = arith.divf %418, %419 : vector<2x32xf32>
    %421 = vector.extract_strided_slice %402 {offsets = [0, 64], sizes = [2, 32], strides = [1, 1]} : vector<2x96xf32> to vector<2x32xf32>
    %422 = vector.extract_strided_slice %404 {offsets = [0, 64], sizes = [2, 32], strides = [1, 1]} : vector<2x96xf32> to vector<2x32xf32>
    %423 = vector.broadcast %86 : vector<1x32xf32> to vector<2x32xf32>
    %424 = arith.addf %422, %423 : vector<2x32xf32>
    %425 = arith.mulf %412, %424 : vector<2x32xf32>
    %426 = arith.addf %421, %425 : vector<2x32xf32>
    %427 = math.tanh %426 : vector<2x32xf32>
    %cst_105 = arith.constant 1.000000e+00 : f32
    %428 = vector.broadcast %cst_105 : f32 to vector<2x32xf32>
    %429 = arith.subf %428, %420 : vector<2x32xf32>
    %430 = arith.mulf %429, %427 : vector<2x32xf32>
    %431 = arith.mulf %420, %362 : vector<2x32xf32>
    %432 = arith.addf %430, %431 : vector<2x32xf32>
    %c0_106 = arith.constant 0 : index
    %c4_107 = arith.constant 4 : index
    %c0_108 = arith.constant 0 : index
    %433 = vector.load %arg13[%c0_106, %c4_107, %c0_108] : memref<2x8x32xf32, #tpu.memory_space<vmem>>, vector<2x1x32xf32>
    %434 = vector.shape_cast %433 : vector<2x1x32xf32> to vector<2x32xf32>
    %435 = vector.shape_cast %400 : vector<2x32xf32> to vector<2x1x32xf32>
    tpu.vector_store %arg13[%c0_106, %c4_107, %c0_108], %435 {strides = array<i32>} : memref<2x8x32xf32, #tpu.memory_space<vmem>>, vector<2x1x32xf32>,
    %c0_109 = arith.constant 0 : index
    %c3_110 = arith.constant 3 : index
    %c0_111 = arith.constant 0 : index
    %436 = vector.load %arg14[%c0_109, %c3_110, %c0_111] : memref<2x8x32xf32, #tpu.memory_space<vmem>>, vector<2x1x32xf32>
    %437 = vector.shape_cast %436 : vector<2x1x32xf32> to vector<2x32xf32>
    %438 = vector.shape_cast %432 : vector<2x32xf32> to vector<2x1x32xf32>
    tpu.vector_store %arg14[%c0_109, %c3_110, %c0_111], %438 {strides = array<i32>} : memref<2x8x32xf32, #tpu.memory_space<vmem>>, vector<2x1x32xf32>,
    %439 = vector.extract_strided_slice %43 {offsets = [0, 5, 0], sizes = [2, 1, 96], strides = [1, 1, 1]} : vector<2x8x96xf32> to vector<2x1x96xf32>
    %440 = vector.shape_cast %439 : vector<2x1x96xf32> to vector<2x96xf32>
    %441 = arith.truncf %400 : vector<2x32xf32> to vector<2x32xbf16>
    %cst_112 = arith.constant dense<0.000000e+00> : vector<2x96xf32>
    %442 = tpu.matmul %441, %83, %cst_112 {dimension_numbers = #tpu.dot_dimension_numbers<[1], [0], [0], [1], [0, 0, 1, 1], [], []>} : vector<2x32xbf16>, vector<32x96xbf16>, vector<2x96xf32> -> vector<2x96xf32>
    %443 = vector.extract_strided_slice %440 {offsets = [0, 0], sizes = [2, 32], strides = [1, 1]} : vector<2x96xf32> to vector<2x32xf32>
    %444 = vector.extract_strided_slice %442 {offsets = [0, 0], sizes = [2, 32], strides = [1, 1]} : vector<2x96xf32> to vector<2x32xf32>
    %445 = arith.addf %443, %444 : vector<2x32xf32>
    %446 = arith.negf %445 : vector<2x32xf32>
    %447 = math.exp %446 : vector<2x32xf32>
    %cst_113 = arith.constant 1.000000e+00 : f32
    %448 = vector.broadcast %cst_113 : f32 to vector<2x32xf32>
    %449 = arith.addf %448, %447 : vector<2x32xf32>
    %450 = arith.divf %448, %449 : vector<2x32xf32>
    %451 = vector.extract_strided_slice %440 {offsets = [0, 32], sizes = [2, 32], strides = [1, 1]} : vector<2x96xf32> to vector<2x32xf32>
    %452 = vector.extract_strided_slice %442 {offsets = [0, 32], sizes = [2, 32], strides = [1, 1]} : vector<2x96xf32> to vector<2x32xf32>
    %453 = arith.addf %451, %452 : vector<2x32xf32>
    %454 = arith.negf %453 : vector<2x32xf32>
    %455 = math.exp %454 : vector<2x32xf32>
    %cst_114 = arith.constant 1.000000e+00 : f32
    %456 = vector.broadcast %cst_114 : f32 to vector<2x32xf32>
    %457 = arith.addf %456, %455 : vector<2x32xf32>
    %458 = arith.divf %456, %457 : vector<2x32xf32>
    %459 = vector.extract_strided_slice %440 {offsets = [0, 64], sizes = [2, 32], strides = [1, 1]} : vector<2x96xf32> to vector<2x32xf32>
    %460 = vector.extract_strided_slice %442 {offsets = [0, 64], sizes = [2, 32], strides = [1, 1]} : vector<2x96xf32> to vector<2x32xf32>
    %461 = vector.broadcast %85 : vector<1x32xf32> to vector<2x32xf32>
    %462 = arith.addf %460, %461 : vector<2x32xf32>
    %463 = arith.mulf %450, %462 : vector<2x32xf32>
    %464 = arith.addf %459, %463 : vector<2x32xf32>
    %465 = math.tanh %464 : vector<2x32xf32>
    %cst_115 = arith.constant 1.000000e+00 : f32
    %466 = vector.broadcast %cst_115 : f32 to vector<2x32xf32>
    %467 = arith.subf %466, %458 : vector<2x32xf32>
    %468 = arith.mulf %467, %465 : vector<2x32xf32>
    %469 = arith.mulf %458, %400 : vector<2x32xf32>
    %470 = arith.addf %468, %469 : vector<2x32xf32>
    %471 = vector.extract_strided_slice %82 {offsets = [0, 2, 0], sizes = [2, 1, 96], strides = [1, 1, 1]} : vector<2x8x96xf32> to vector<2x1x96xf32>
    %472 = vector.shape_cast %471 : vector<2x1x96xf32> to vector<2x96xf32>
    %473 = arith.truncf %432 : vector<2x32xf32> to vector<2x32xbf16>
    %cst_116 = arith.constant dense<0.000000e+00> : vector<2x96xf32>
    %474 = tpu.matmul %473, %84, %cst_116 {dimension_numbers = #tpu.dot_dimension_numbers<[1], [0], [0], [1], [0, 0, 1, 1], [], []>} : vector<2x32xbf16>, vector<32x96xbf16>, vector<2x96xf32> -> vector<2x96xf32>
    %475 = vector.extract_strided_slice %472 {offsets = [0, 0], sizes = [2, 32], strides = [1, 1]} : vector<2x96xf32> to vector<2x32xf32>
    %476 = vector.extract_strided_slice %474 {offsets = [0, 0], sizes = [2, 32], strides = [1, 1]} : vector<2x96xf32> to vector<2x32xf32>
    %477 = arith.addf %475, %476 : vector<2x32xf32>
    %478 = arith.negf %477 : vector<2x32xf32>
    %479 = math.exp %478 : vector<2x32xf32>
    %cst_117 = arith.constant 1.000000e+00 : f32
    %480 = vector.broadcast %cst_117 : f32 to vector<2x32xf32>
    %481 = arith.addf %480, %479 : vector<2x32xf32>
    %482 = arith.divf %480, %481 : vector<2x32xf32>
    %483 = vector.extract_strided_slice %472 {offsets = [0, 32], sizes = [2, 32], strides = [1, 1]} : vector<2x96xf32> to vector<2x32xf32>
    %484 = vector.extract_strided_slice %474 {offsets = [0, 32], sizes = [2, 32], strides = [1, 1]} : vector<2x96xf32> to vector<2x32xf32>
    %485 = arith.addf %483, %484 : vector<2x32xf32>
    %486 = arith.negf %485 : vector<2x32xf32>
    %487 = math.exp %486 : vector<2x32xf32>
    %cst_118 = arith.constant 1.000000e+00 : f32
    %488 = vector.broadcast %cst_118 : f32 to vector<2x32xf32>
    %489 = arith.addf %488, %487 : vector<2x32xf32>
    %490 = arith.divf %488, %489 : vector<2x32xf32>
    %491 = vector.extract_strided_slice %472 {offsets = [0, 64], sizes = [2, 32], strides = [1, 1]} : vector<2x96xf32> to vector<2x32xf32>
    %492 = vector.extract_strided_slice %474 {offsets = [0, 64], sizes = [2, 32], strides = [1, 1]} : vector<2x96xf32> to vector<2x32xf32>
    %493 = vector.broadcast %86 : vector<1x32xf32> to vector<2x32xf32>
    %494 = arith.addf %492, %493 : vector<2x32xf32>
    %495 = arith.mulf %482, %494 : vector<2x32xf32>
    %496 = arith.addf %491, %495 : vector<2x32xf32>
    %497 = math.tanh %496 : vector<2x32xf32>
    %cst_119 = arith.constant 1.000000e+00 : f32
    %498 = vector.broadcast %cst_119 : f32 to vector<2x32xf32>
    %499 = arith.subf %498, %490 : vector<2x32xf32>
    %500 = arith.mulf %499, %497 : vector<2x32xf32>
    %501 = arith.mulf %490, %432 : vector<2x32xf32>
    %502 = arith.addf %500, %501 : vector<2x32xf32>
    %c0_120 = arith.constant 0 : index
    %c5_121 = arith.constant 5 : index
    %c0_122 = arith.constant 0 : index
    %503 = vector.load %arg13[%c0_120, %c5_121, %c0_122] : memref<2x8x32xf32, #tpu.memory_space<vmem>>, vector<2x1x32xf32>
    %504 = vector.shape_cast %503 : vector<2x1x32xf32> to vector<2x32xf32>
    %505 = vector.shape_cast %470 : vector<2x32xf32> to vector<2x1x32xf32>
    tpu.vector_store %arg13[%c0_120, %c5_121, %c0_122], %505 {strides = array<i32>} : memref<2x8x32xf32, #tpu.memory_space<vmem>>, vector<2x1x32xf32>,
    %c0_123 = arith.constant 0 : index
    %c2_124 = arith.constant 2 : index
    %c0_125 = arith.constant 0 : index
    %506 = vector.load %arg14[%c0_123, %c2_124, %c0_125] : memref<2x8x32xf32, #tpu.memory_space<vmem>>, vector<2x1x32xf32>
    %507 = vector.shape_cast %506 : vector<2x1x32xf32> to vector<2x32xf32>
    %508 = vector.shape_cast %502 : vector<2x32xf32> to vector<2x1x32xf32>
    tpu.vector_store %arg14[%c0_123, %c2_124, %c0_125], %508 {strides = array<i32>} : memref<2x8x32xf32, #tpu.memory_space<vmem>>, vector<2x1x32xf32>,
    %509 = vector.extract_strided_slice %43 {offsets = [0, 6, 0], sizes = [2, 1, 96], strides = [1, 1, 1]} : vector<2x8x96xf32> to vector<2x1x96xf32>
    %510 = vector.shape_cast %509 : vector<2x1x96xf32> to vector<2x96xf32>
    %511 = arith.truncf %470 : vector<2x32xf32> to vector<2x32xbf16>
    %cst_126 = arith.constant dense<0.000000e+00> : vector<2x96xf32>
    %512 = tpu.matmul %511, %83, %cst_126 {dimension_numbers = #tpu.dot_dimension_numbers<[1], [0], [0], [1], [0, 0, 1, 1], [], []>} : vector<2x32xbf16>, vector<32x96xbf16>, vector<2x96xf32> -> vector<2x96xf32>
    %513 = vector.extract_strided_slice %510 {offsets = [0, 0], sizes = [2, 32], strides = [1, 1]} : vector<2x96xf32> to vector<2x32xf32>
    %514 = vector.extract_strided_slice %512 {offsets = [0, 0], sizes = [2, 32], strides = [1, 1]} : vector<2x96xf32> to vector<2x32xf32>
    %515 = arith.addf %513, %514 : vector<2x32xf32>
    %516 = arith.negf %515 : vector<2x32xf32>
    %517 = math.exp %516 : vector<2x32xf32>
    %cst_127 = arith.constant 1.000000e+00 : f32
    %518 = vector.broadcast %cst_127 : f32 to vector<2x32xf32>
    %519 = arith.addf %518, %517 : vector<2x32xf32>
    %520 = arith.divf %518, %519 : vector<2x32xf32>
    %521 = vector.extract_strided_slice %510 {offsets = [0, 32], sizes = [2, 32], strides = [1, 1]} : vector<2x96xf32> to vector<2x32xf32>
    %522 = vector.extract_strided_slice %512 {offsets = [0, 32], sizes = [2, 32], strides = [1, 1]} : vector<2x96xf32> to vector<2x32xf32>
    %523 = arith.addf %521, %522 : vector<2x32xf32>
    %524 = arith.negf %523 : vector<2x32xf32>
    %525 = math.exp %524 : vector<2x32xf32>
    %cst_128 = arith.constant 1.000000e+00 : f32
    %526 = vector.broadcast %cst_128 : f32 to vector<2x32xf32>
    %527 = arith.addf %526, %525 : vector<2x32xf32>
    %528 = arith.divf %526, %527 : vector<2x32xf32>
    %529 = vector.extract_strided_slice %510 {offsets = [0, 64], sizes = [2, 32], strides = [1, 1]} : vector<2x96xf32> to vector<2x32xf32>
    %530 = vector.extract_strided_slice %512 {offsets = [0, 64], sizes = [2, 32], strides = [1, 1]} : vector<2x96xf32> to vector<2x32xf32>
    %531 = vector.broadcast %85 : vector<1x32xf32> to vector<2x32xf32>
    %532 = arith.addf %530, %531 : vector<2x32xf32>
    %533 = arith.mulf %520, %532 : vector<2x32xf32>
    %534 = arith.addf %529, %533 : vector<2x32xf32>
    %535 = math.tanh %534 : vector<2x32xf32>
    %cst_129 = arith.constant 1.000000e+00 : f32
    %536 = vector.broadcast %cst_129 : f32 to vector<2x32xf32>
    %537 = arith.subf %536, %528 : vector<2x32xf32>
    %538 = arith.mulf %537, %535 : vector<2x32xf32>
    %539 = arith.mulf %528, %470 : vector<2x32xf32>
    %540 = arith.addf %538, %539 : vector<2x32xf32>
    %541 = vector.extract_strided_slice %82 {offsets = [0, 1, 0], sizes = [2, 1, 96], strides = [1, 1, 1]} : vector<2x8x96xf32> to vector<2x1x96xf32>
    %542 = vector.shape_cast %541 : vector<2x1x96xf32> to vector<2x96xf32>
    %543 = arith.truncf %502 : vector<2x32xf32> to vector<2x32xbf16>
    %cst_130 = arith.constant dense<0.000000e+00> : vector<2x96xf32>
    %544 = tpu.matmul %543, %84, %cst_130 {dimension_numbers = #tpu.dot_dimension_numbers<[1], [0], [0], [1], [0, 0, 1, 1], [], []>} : vector<2x32xbf16>, vector<32x96xbf16>, vector<2x96xf32> -> vector<2x96xf32>
    %545 = vector.extract_strided_slice %542 {offsets = [0, 0], sizes = [2, 32], strides = [1, 1]} : vector<2x96xf32> to vector<2x32xf32>
    %546 = vector.extract_strided_slice %544 {offsets = [0, 0], sizes = [2, 32], strides = [1, 1]} : vector<2x96xf32> to vector<2x32xf32>
    %547 = arith.addf %545, %546 : vector<2x32xf32>
    %548 = arith.negf %547 : vector<2x32xf32>
    %549 = math.exp %548 : vector<2x32xf32>
    %cst_131 = arith.constant 1.000000e+00 : f32
    %550 = vector.broadcast %cst_131 : f32 to vector<2x32xf32>
    %551 = arith.addf %550, %549 : vector<2x32xf32>
    %552 = arith.divf %550, %551 : vector<2x32xf32>
    %553 = vector.extract_strided_slice %542 {offsets = [0, 32], sizes = [2, 32], strides = [1, 1]} : vector<2x96xf32> to vector<2x32xf32>
    %554 = vector.extract_strided_slice %544 {offsets = [0, 32], sizes = [2, 32], strides = [1, 1]} : vector<2x96xf32> to vector<2x32xf32>
    %555 = arith.addf %553, %554 : vector<2x32xf32>
    %556 = arith.negf %555 : vector<2x32xf32>
    %557 = math.exp %556 : vector<2x32xf32>
    %cst_132 = arith.constant 1.000000e+00 : f32
    %558 = vector.broadcast %cst_132 : f32 to vector<2x32xf32>
    %559 = arith.addf %558, %557 : vector<2x32xf32>
    %560 = arith.divf %558, %559 : vector<2x32xf32>
    %561 = vector.extract_strided_slice %542 {offsets = [0, 64], sizes = [2, 32], strides = [1, 1]} : vector<2x96xf32> to vector<2x32xf32>
    %562 = vector.extract_strided_slice %544 {offsets = [0, 64], sizes = [2, 32], strides = [1, 1]} : vector<2x96xf32> to vector<2x32xf32>
    %563 = vector.broadcast %86 : vector<1x32xf32> to vector<2x32xf32>
    %564 = arith.addf %562, %563 : vector<2x32xf32>
    %565 = arith.mulf %552, %564 : vector<2x32xf32>
    %566 = arith.addf %561, %565 : vector<2x32xf32>
    %567 = math.tanh %566 : vector<2x32xf32>
    %cst_133 = arith.constant 1.000000e+00 : f32
    %568 = vector.broadcast %cst_133 : f32 to vector<2x32xf32>
    %569 = arith.subf %568, %560 : vector<2x32xf32>
    %570 = arith.mulf %569, %567 : vector<2x32xf32>
    %571 = arith.mulf %560, %502 : vector<2x32xf32>
    %572 = arith.addf %570, %571 : vector<2x32xf32>
    %c0_134 = arith.constant 0 : index
    %c6_135 = arith.constant 6 : index
    %c0_136 = arith.constant 0 : index
    %573 = vector.load %arg13[%c0_134, %c6_135, %c0_136] : memref<2x8x32xf32, #tpu.memory_space<vmem>>, vector<2x1x32xf32>
    %574 = vector.shape_cast %573 : vector<2x1x32xf32> to vector<2x32xf32>
    %575 = vector.shape_cast %540 : vector<2x32xf32> to vector<2x1x32xf32>
    tpu.vector_store %arg13[%c0_134, %c6_135, %c0_136], %575 {strides = array<i32>} : memref<2x8x32xf32, #tpu.memory_space<vmem>>, vector<2x1x32xf32>,
    %c0_137 = arith.constant 0 : index
    %c1_138 = arith.constant 1 : index
    %c0_139 = arith.constant 0 : index
    %576 = vector.load %arg14[%c0_137, %c1_138, %c0_139] : memref<2x8x32xf32, #tpu.memory_space<vmem>>, vector<2x1x32xf32>
    %577 = vector.shape_cast %576 : vector<2x1x32xf32> to vector<2x32xf32>
    %578 = vector.shape_cast %572 : vector<2x32xf32> to vector<2x1x32xf32>
    tpu.vector_store %arg14[%c0_137, %c1_138, %c0_139], %578 {strides = array<i32>} : memref<2x8x32xf32, #tpu.memory_space<vmem>>, vector<2x1x32xf32>,
    %579 = vector.extract_strided_slice %43 {offsets = [0, 7, 0], sizes = [2, 1, 96], strides = [1, 1, 1]} : vector<2x8x96xf32> to vector<2x1x96xf32>
    %580 = vector.shape_cast %579 : vector<2x1x96xf32> to vector<2x96xf32>
    %581 = arith.truncf %540 : vector<2x32xf32> to vector<2x32xbf16>
    %cst_140 = arith.constant dense<0.000000e+00> : vector<2x96xf32>
    %582 = tpu.matmul %581, %83, %cst_140 {dimension_numbers = #tpu.dot_dimension_numbers<[1], [0], [0], [1], [0, 0, 1, 1], [], []>} : vector<2x32xbf16>, vector<32x96xbf16>, vector<2x96xf32> -> vector<2x96xf32>
    %583 = vector.extract_strided_slice %580 {offsets = [0, 0], sizes = [2, 32], strides = [1, 1]} : vector<2x96xf32> to vector<2x32xf32>
    %584 = vector.extract_strided_slice %582 {offsets = [0, 0], sizes = [2, 32], strides = [1, 1]} : vector<2x96xf32> to vector<2x32xf32>
    %585 = arith.addf %583, %584 : vector<2x32xf32>
    %586 = arith.negf %585 : vector<2x32xf32>
    %587 = math.exp %586 : vector<2x32xf32>
    %cst_141 = arith.constant 1.000000e+00 : f32
    %588 = vector.broadcast %cst_141 : f32 to vector<2x32xf32>
    %589 = arith.addf %588, %587 : vector<2x32xf32>
    %590 = arith.divf %588, %589 : vector<2x32xf32>
    %591 = vector.extract_strided_slice %580 {offsets = [0, 32], sizes = [2, 32], strides = [1, 1]} : vector<2x96xf32> to vector<2x32xf32>
    %592 = vector.extract_strided_slice %582 {offsets = [0, 32], sizes = [2, 32], strides = [1, 1]} : vector<2x96xf32> to vector<2x32xf32>
    %593 = arith.addf %591, %592 : vector<2x32xf32>
    %594 = arith.negf %593 : vector<2x32xf32>
    %595 = math.exp %594 : vector<2x32xf32>
    %cst_142 = arith.constant 1.000000e+00 : f32
    %596 = vector.broadcast %cst_142 : f32 to vector<2x32xf32>
    %597 = arith.addf %596, %595 : vector<2x32xf32>
    %598 = arith.divf %596, %597 : vector<2x32xf32>
    %599 = vector.extract_strided_slice %580 {offsets = [0, 64], sizes = [2, 32], strides = [1, 1]} : vector<2x96xf32> to vector<2x32xf32>
    %600 = vector.extract_strided_slice %582 {offsets = [0, 64], sizes = [2, 32], strides = [1, 1]} : vector<2x96xf32> to vector<2x32xf32>
    %601 = vector.broadcast %85 : vector<1x32xf32> to vector<2x32xf32>
    %602 = arith.addf %600, %601 : vector<2x32xf32>
    %603 = arith.mulf %590, %602 : vector<2x32xf32>
    %604 = arith.addf %599, %603 : vector<2x32xf32>
    %605 = math.tanh %604 : vector<2x32xf32>
    %cst_143 = arith.constant 1.000000e+00 : f32
    %606 = vector.broadcast %cst_143 : f32 to vector<2x32xf32>
    %607 = arith.subf %606, %598 : vector<2x32xf32>
    %608 = arith.mulf %607, %605 : vector<2x32xf32>
    %609 = arith.mulf %598, %540 : vector<2x32xf32>
    %610 = arith.addf %608, %609 : vector<2x32xf32>
    %611 = vector.extract_strided_slice %82 {offsets = [0, 0, 0], sizes = [2, 1, 96], strides = [1, 1, 1]} : vector<2x8x96xf32> to vector<2x1x96xf32>
    %612 = vector.shape_cast %611 : vector<2x1x96xf32> to vector<2x96xf32>
    %613 = arith.truncf %572 : vector<2x32xf32> to vector<2x32xbf16>
    %cst_144 = arith.constant dense<0.000000e+00> : vector<2x96xf32>
    %614 = tpu.matmul %613, %84, %cst_144 {dimension_numbers = #tpu.dot_dimension_numbers<[1], [0], [0], [1], [0, 0, 1, 1], [], []>} : vector<2x32xbf16>, vector<32x96xbf16>, vector<2x96xf32> -> vector<2x96xf32>
    %615 = vector.extract_strided_slice %612 {offsets = [0, 0], sizes = [2, 32], strides = [1, 1]} : vector<2x96xf32> to vector<2x32xf32>
    %616 = vector.extract_strided_slice %614 {offsets = [0, 0], sizes = [2, 32], strides = [1, 1]} : vector<2x96xf32> to vector<2x32xf32>
    %617 = arith.addf %615, %616 : vector<2x32xf32>
    %618 = arith.negf %617 : vector<2x32xf32>
    %619 = math.exp %618 : vector<2x32xf32>
    %cst_145 = arith.constant 1.000000e+00 : f32
    %620 = vector.broadcast %cst_145 : f32 to vector<2x32xf32>
    %621 = arith.addf %620, %619 : vector<2x32xf32>
    %622 = arith.divf %620, %621 : vector<2x32xf32>
    %623 = vector.extract_strided_slice %612 {offsets = [0, 32], sizes = [2, 32], strides = [1, 1]} : vector<2x96xf32> to vector<2x32xf32>
    %624 = vector.extract_strided_slice %614 {offsets = [0, 32], sizes = [2, 32], strides = [1, 1]} : vector<2x96xf32> to vector<2x32xf32>
    %625 = arith.addf %623, %624 : vector<2x32xf32>
    %626 = arith.negf %625 : vector<2x32xf32>
    %627 = math.exp %626 : vector<2x32xf32>
    %cst_146 = arith.constant 1.000000e+00 : f32
    %628 = vector.broadcast %cst_146 : f32 to vector<2x32xf32>
    %629 = arith.addf %628, %627 : vector<2x32xf32>
    %630 = arith.divf %628, %629 : vector<2x32xf32>
    %631 = vector.extract_strided_slice %612 {offsets = [0, 64], sizes = [2, 32], strides = [1, 1]} : vector<2x96xf32> to vector<2x32xf32>
    %632 = vector.extract_strided_slice %614 {offsets = [0, 64], sizes = [2, 32], strides = [1, 1]} : vector<2x96xf32> to vector<2x32xf32>
    %633 = vector.broadcast %86 : vector<1x32xf32> to vector<2x32xf32>
    %634 = arith.addf %632, %633 : vector<2x32xf32>
    %635 = arith.mulf %622, %634 : vector<2x32xf32>
    %636 = arith.addf %631, %635 : vector<2x32xf32>
    %637 = math.tanh %636 : vector<2x32xf32>
    %cst_147 = arith.constant 1.000000e+00 : f32
    %638 = vector.broadcast %cst_147 : f32 to vector<2x32xf32>
    %639 = arith.subf %638, %630 : vector<2x32xf32>
    %640 = arith.mulf %639, %637 : vector<2x32xf32>
    %641 = arith.mulf %630, %572 : vector<2x32xf32>
    %642 = arith.addf %640, %641 : vector<2x32xf32>
    %c0_148 = arith.constant 0 : index
    %c7_149 = arith.constant 7 : index
    %c0_150 = arith.constant 0 : index
    %643 = vector.load %arg13[%c0_148, %c7_149, %c0_150] : memref<2x8x32xf32, #tpu.memory_space<vmem>>, vector<2x1x32xf32>
    %644 = vector.shape_cast %643 : vector<2x1x32xf32> to vector<2x32xf32>
    %645 = vector.shape_cast %610 : vector<2x32xf32> to vector<2x1x32xf32>
    tpu.vector_store %arg13[%c0_148, %c7_149, %c0_150], %645 {strides = array<i32>} : memref<2x8x32xf32, #tpu.memory_space<vmem>>, vector<2x1x32xf32>,
    %c0_151 = arith.constant 0 : index
    %c0_152 = arith.constant 0 : index
    %c0_153 = arith.constant 0 : index
    %646 = vector.load %arg14[%c0_151, %c0_152, %c0_153] : memref<2x8x32xf32, #tpu.memory_space<vmem>>, vector<2x1x32xf32>
    %647 = vector.shape_cast %646 : vector<2x1x32xf32> to vector<2x32xf32>
    %648 = vector.shape_cast %642 : vector<2x32xf32> to vector<2x1x32xf32>
    tpu.vector_store %arg14[%c0_151, %c0_152, %c0_153], %648 {strides = array<i32>} : memref<2x8x32xf32, #tpu.memory_space<vmem>>, vector<2x1x32xf32>,
    %c0_154 = arith.constant 0 : index
    %c0_155 = arith.constant 0 : index
    %649 = vector.load %arg15[%c0_154, %c0_155] : memref<2x32xf32, #tpu.memory_space<vmem>>, vector<2x32xf32>
    tpu.vector_store %arg15[%c0_154, %c0_155], %610 {strides = array<i32>} : memref<2x32xf32, #tpu.memory_space<vmem>>, vector<2x32xf32>,
    %c0_156 = arith.constant 0 : index
    %c0_157 = arith.constant 0 : index
    %650 = vector.load %arg16[%c0_156, %c0_157] : memref<2x32xf32, #tpu.memory_space<vmem>>, vector<2x32xf32>
    tpu.vector_store %arg16[%c0_156, %c0_157], %642 {strides = array<i32>} : memref<2x32xf32, #tpu.memory_space<vmem>>, vector<2x32xf32>,
    return
  }
  func.func @transform_0(%arg0: i32) -> (i32, i32, i32) {
    %c0_i32 = arith.constant 0 : i32
    %c0_i32_0 = arith.constant 0 : i32
    %c0_i32_1 = arith.constant 0 : i32
    return %c0_i32, %arg0, %c0_i32_0 : i32, i32, i32
  }
  func.func @transform_1(%arg0: i32) -> (i32, i32, i32) {
    %c1_i32 = arith.constant 1 : i32
    %0 = arith.subi %c1_i32, %arg0 : i32
    %c0_i32 = arith.constant 0 : i32
    %c0_i32_0 = arith.constant 0 : i32
    %c0_i32_1 = arith.constant 0 : i32
    return %c0_i32, %0, %c0_i32_0 : i32, i32, i32
  }
  func.func @transform_2(%arg0: i32) -> (i32, i32, i32) {
    %c0_i32 = arith.constant 0 : i32
    %c0_i32_0 = arith.constant 0 : i32
    %c0_i32_1 = arith.constant 0 : i32
    %c0_i32_2 = arith.constant 0 : i32
    return %c0_i32, %c0_i32_0, %c0_i32_1 : i32, i32, i32
  }
  func.func @transform_3(%arg0: i32) -> (i32, i32, i32) {
    %c0_i32 = arith.constant 0 : i32
    %c0_i32_0 = arith.constant 0 : i32
    %c0_i32_1 = arith.constant 0 : i32
    %c0_i32_2 = arith.constant 0 : i32
    return %c0_i32, %c0_i32_0, %c0_i32_1 : i32, i32, i32
  }
  func.func @transform_4(%arg0: i32) -> (i32, i32) {
    %c0_i32 = arith.constant 0 : i32
    %c0_i32_0 = arith.constant 0 : i32
    %c0_i32_1 = arith.constant 0 : i32
    return %c0_i32, %c0_i32_0 : i32, i32
  }
  func.func @transform_5(%arg0: i32) -> (i32, i32) {
    %c0_i32 = arith.constant 0 : i32
    %c0_i32_0 = arith.constant 0 : i32
    %c0_i32_1 = arith.constant 0 : i32
    return %c0_i32, %c0_i32_0 : i32, i32
  }
  func.func @transform_6(%arg0: i32) -> (i32, i32) {
    %c0_i32 = arith.constant 0 : i32
    %c0_i32_0 = arith.constant 0 : i32
    %c0_i32_1 = arith.constant 0 : i32
    return %c0_i32, %c0_i32_0 : i32, i32
  }
  func.func @transform_7(%arg0: i32) -> (i32, i32) {
    %c0_i32 = arith.constant 0 : i32
    %c0_i32_0 = arith.constant 0 : i32
    %c0_i32_1 = arith.constant 0 : i32
    return %c0_i32, %c0_i32_0 : i32, i32
  }
  func.func @transform_8(%arg0: i32) -> (i32, i32) {
    %c0_i32 = arith.constant 0 : i32
    %c0_i32_0 = arith.constant 0 : i32
    %c0_i32_1 = arith.constant 0 : i32
    return %c0_i32, %c0_i32_0 : i32, i32
  }
  func.func @transform_9(%arg0: i32) -> (i32, i32) {
    %c0_i32 = arith.constant 0 : i32
    %c0_i32_0 = arith.constant 0 : i32
    %c0_i32_1 = arith.constant 0 : i32
    return %c0_i32, %c0_i32_0 : i32, i32
  }
  func.func @transform_10(%arg0: i32) -> (i32, i32) {
    %c0_i32 = arith.constant 0 : i32
    %c0_i32_0 = arith.constant 0 : i32
    %c0_i32_1 = arith.constant 0 : i32
    return %c0_i32, %c0_i32_0 : i32, i32
  }
  func.func @transform_11(%arg0: i32) -> (i32, i32) {
    %c0_i32 = arith.constant 0 : i32
    %c0_i32_0 = arith.constant 0 : i32
    %c0_i32_1 = arith.constant 0 : i32
    return %c0_i32, %c0_i32_0 : i32, i32
  }
  func.func @transform_12(%arg0: i32) -> (i32, i32, i32) {
    %c0_i32 = arith.constant 0 : i32
    %c0_i32_0 = arith.constant 0 : i32
    %c0_i32_1 = arith.constant 0 : i32
    return %c0_i32, %arg0, %c0_i32_0 : i32, i32, i32
  }
  func.func @transform_13(%arg0: i32) -> (i32, i32, i32) {
    %c1_i32 = arith.constant 1 : i32
    %0 = arith.subi %c1_i32, %arg0 : i32
    %c0_i32 = arith.constant 0 : i32
    %c0_i32_0 = arith.constant 0 : i32
    %c0_i32_1 = arith.constant 0 : i32
    return %c0_i32, %0, %c0_i32_0 : i32, i32, i32
  }
}

</mosaic_0001>

<llo_original>
// kernel: tpu_custom_call.1
$region0: #{tpu_custom_call.1}
  #allocation0 [shape = 'u32[]', space=smem, size = 0x4, offset = 0x4, fixed_abs, tag = 'smem constant byte address 0x4 - core index']
  #allocation1 [shape = 'u32[144,128]{1,0:T(1,128)}', space=vmem, size = 0x12000, scoped, tag = 'internal scratch']
  #allocation2 [shape = 'f32[2,32]{1,0:T(2,128)}', space=vmem, size = 0x400, scoped, tag = 'scratch operand']
  #allocation3 [shape = 'f32[2,32]{1,0:T(2,128)}', space=vmem, size = 0x400, scoped, tag = 'scratch operand']
  %s0 = inlined_call_operand.hbm [shape: f32[2,16,32], index: 0, kind: input, shape index: {}]
  %s1 = inlined_call_operand.hbm [shape: f32[2,16,32], index: 1, kind: input, shape index: {}]
  %s2 = inlined_call_operand.vmem [shape: f32[1,1,32], index: 2, kind: input, shape index: {}]
  %s3 = inlined_call_operand.vmem [shape: f32[1,1,32], index: 3, kind: input, shape index: {}]
  %s4 = inlined_call_operand.hbm [shape: bf16[32,96], index: 4, kind: input, shape index: {}]
  %s5 = inlined_call_operand.hbm [shape: bf16[32,96], index: 5, kind: input, shape index: {}]
  %s6 = inlined_call_operand.hbm [shape: bf16[32,96], index: 6, kind: input, shape index: {}]
  %s7 = inlined_call_operand.hbm [shape: bf16[32,96], index: 7, kind: input, shape index: {}]
  %s8 = inlined_call_operand.vmem [shape: f32[1,96], index: 8, kind: input, shape index: {}]
  %s9 = inlined_call_operand.vmem [shape: f32[1,96], index: 9, kind: input, shape index: {}]
  %s10 = inlined_call_operand.vmem [shape: f32[1,32], index: 10, kind: input, shape index: {}]
  %s11 = inlined_call_operand.vmem [shape: f32[1,32], index: 11, kind: input, shape index: {}]
  %s12 = inlined_call_operand.hbm [shape: f32[2,16,32], index: 12, kind: output, shape index: {0}]
  %s13 = inlined_call_operand.hbm [shape: f32[2,16,32], index: 13, kind: output, shape index: {1}]
  %14 = xla_tuple %s12, %s13
  %s15 = sld [smem:[#allocation0]]
  $region117: #{tpu_custom_call.1} parent=0
    _
  %s17 = ssub.s32 1, %s15
  %s18 = scalar_select 0, %s17, %s15
  $region1: #{tpu_custom_call.1} parent=0
    #allocation4 [shape = 'u8[16384]{0}', space=vmem, size = 0x4000, scoped, tag = 'input window, operand 0']
    #allocation5 [shape = 's32[2]{0}', space=sflag, size = 0x8, scoped, tag = 'scoped memory for tpu_custom_call.1']
    #allocation6 [shape = 's32[2]{0}', space=sflag, size = 0x8, scoped, tag = 'scoped memory for tpu_custom_call.1']
    #allocation7 [shape = 'u8[16384]{0}', space=vmem, size = 0x4000, scoped, tag = 'input window, operand 1']
    #allocation8 [shape = 's32[2]{0}', space=sflag, size = 0x8, scoped, tag = 'scoped memory for tpu_custom_call.1']
    #allocation9 [shape = 'u8[8192]{0}', space=vmem, size = 0x2000, scoped, tag = 'input window, operand 4, single buffered']
    #allocation10 [shape = 'u8[8192]{0}', space=vmem, size = 0x2000, scoped, tag = 'input window, operand 5, single buffered']
    #allocation11 [shape = 's32[1]{0}', space=sflag, size = 0x4, scoped, tag = 'scoped memory for tpu_custom_call.1']
    #allocation12 [shape = 'u8[8192]{0}', space=vmem, size = 0x2000, scoped, tag = 'input window, operand 6, single buffered']
    #allocation13 [shape = 'u8[8192]{0}', space=vmem, size = 0x2000, scoped, tag = 'input window, operand 7, single buffered']
    #allocation14 [shape = 's32[1]{0}', space=sflag, size = 0x4, scoped, tag = 'scoped memory for tpu_custom_call.1']
    #allocation15 [shape = 'u8[16384]{0}', space=vmem, size = 0x4000, scoped, tag = 'output window, operand 0']
    #allocation16 [shape = 'u8[16384]{0}', space=vmem, size = 0x4000, scoped, tag = 'output window, operand 1']
    #allocation17 [shape = 's32[2]{0}', space=sflag, size = 0x8, scoped, tag = 'scoped memory for tpu_custom_call.1']
    %19 = vsyncpa [#allocation5], 0
    %s20 = scalar_lea.sflag [#allocation5], 1
    %21 = vsyncpa %s20, 0
    %22 = vsyncpa [#allocation8], 0
    %s23 = scalar_lea.sflag [#allocation8], 1
    %24 = vsyncpa %s23, 0
    %25 = vsyncpa [#allocation11], 0
    %26 = vsyncpa [#allocation14], 0
    %27 = vsyncpa [#allocation6], 0
    %s28 = scalar_lea.sflag [#allocation6], 1
    %29 = vsyncpa %s28, 0
    %30 = vsyncpa [#allocation17], 0
    %s31 = scalar_lea.sflag [#allocation17], 1
    %32 = vsyncpa %s31, 0
    loop: start=0, step=1, limit=4
    $region2: #{tpu_custom_call.1} parent=1 // loop_pre_header
      _
    $region3: #{tpu_custom_call.1} parent=1 // loop_header
      %s34 = sphi 0, %s38
      %p35 = scmp.ge.s32.totalorder %s34, 4
      %s44 = sphi 0, %s46
      %s47 = sphi 0, %s44
      %s48 = sphi 0, %s47
      %s64 = sphi 0, %s48
      %s72 = sphi 0, %s74
      %s75 = sphi 0, %s72
      %s76 = sphi 0, %s75
      %s92 = sphi 0, %s76
      %s96 = sphi 0, %s96
      %s98 = sphi 0, %s96
      %s99 = sphi 0, %s98
      %s113 = sphi 0, %s99
      %s117 = sphi 0, %s117
      %s119 = sphi 0, %s117
      %s120 = sphi 0, %s119
      %s134 = sphi 0, %s120
      %s138 = sphi 0, %s138
      %s140 = sphi 0, %s138
      %s141 = sphi 0, %s140
      %s155 = sphi 0, %s141
      %s159 = sphi 0, %s159
      %s161 = sphi 0, %s159
      %s162 = sphi 0, %s161
      %s176 = sphi 0, %s162
      %s180 = sphi 0, %s180
      %s182 = sphi 0, %s180
      %s183 = sphi 0, %s182
      %s197 = sphi 0, %s183
      %s201 = sphi 0, %s201
      %s203 = sphi 0, %s201
      %s204 = sphi 0, %s203
      %s218 = sphi 0, %s204
      %s222 = sphi 0, %s222
      %s224 = sphi 0, %s222
      %s225 = sphi 0, %s224
      %s239 = sphi 0, %s225
      %s243 = sphi 0, %s243
      %s245 = sphi 0, %s243
      %s246 = sphi 0, %s245
      %s260 = sphi 0, %s246
      %s264 = sphi 0, %s264
      %s266 = sphi 0, %s264
      %s267 = sphi 0, %s266
      %s281 = sphi 0, %s267
      %s285 = sphi 0, %s285
      %s287 = sphi 0, %s285
      %s288 = sphi 0, %s287
      %s302 = sphi 0, %s288
      %s308 = sphi 0, %s310
      %s311 = sphi 0, %s308
      %s312 = sphi 0, %s311
      %s328 = sphi 0, %s312
      %s336 = sphi 0, %s338
      %s339 = sphi 0, %s336
      %s340 = sphi 0, %s339
      %s356 = sphi 0, %s340
    $region4: #{tpu_custom_call.1} parent=1 // loop_header_branch
      %37 = sbr.rel (%p35) target = $region8
    $region5: #{tpu_custom_call.1} parent=1 // loop_body
      %s39 = ssub.s32 %s34, 1
      %s40 = ssub.s32 %s34, 2
      %s41 = sadd.s32 %s34, 1
      %s42 = ssub.s32 %s34, %s41
      %p43 = scmp.eq.s32.totalorder %s42, 0
      %s45 = sadd.s32 %s44, 1
      %s46 = scalar_select %p43, %s44, %s45
      %p49 = pneg %p43
      %p50 = scmp.eq.s32.totalorder %s34, 1
      %p51 = por %p49, %p50
      %p52 = scmp.ne.s32.totalorder %s44, %s47
      %p53 = scmp.eq.s32.totalorder %s34, 0
      %p54 = por %p52, %p53
      %p55 = scmp.ne.s32.totalorder %s44, %s47
      %p56 = scmp.eq.s32.totalorder %s39, 1
      %p57 = por %p55, %p56
      %p58 = scmp.ne.s32.totalorder %s47, %s48
      %p59 = scmp.eq.s32.totalorder %s39, 0
      %p60 = por %p58, %p59
      %p61 = scmp.ne.s32.totalorder %s47, %s48
      %p62 = scmp.eq.s32.totalorder %s40, 1
      %p63 = por %p61, %p62
      %p65 = scmp.ne.s32.totalorder %s48, %s64
      %p66 = scmp.eq.s32.totalorder %s40, 0
      %p67 = por %p65, %p66
      %s68 = ssub.s32 1, %s34
      %s69 = ssub.s32 1, %s41
      %s70 = ssub.s32 %s68, %s69
      %p71 = scmp.eq.s32.totalorder %s70, 0
      %s73 = sadd.s32 %s72, 1
      %s74 = scalar_select %p71, %s72, %s73
      %p77 = pneg %p71
      %p78 = scmp.eq.s32.totalorder %s34, 1
      %p79 = por %p77, %p78
      %p80 = scmp.ne.s32.totalorder %s72, %s75
      %p81 = scmp.eq.s32.totalorder %s34, 0
      %p82 = por %p80, %p81
      %p83 = scmp.ne.s32.totalorder %s72, %s75
      %p84 = scmp.eq.s32.totalorder %s39, 1
      %p85 = por %p83, %p84
      %p86 = scmp.ne.s32.totalorder %s75, %s76
      %p87 = scmp.eq.s32.totalorder %s39, 0
      %p88 = por %p86, %p87
      %p89 = scmp.ne.s32.totalorder %s75, %s76
      %p90 = scmp.eq.s32.totalorder %s40, 1
      %p91 = por %p89, %p90
      %p93 = scmp.ne.s32.totalorder %s76, %s92
      %p94 = scmp.eq.s32.totalorder %s40, 0
      %p95 = por %p93, %p94
      %s97 = sadd.s32 %s96, 1
      %p100 = scmp.eq.s32.totalorder %s34, 1
      %p101 = scmp.ne.s32.totalorder %s96, %s98
      %p102 = scmp.eq.s32.totalorder %s34, 0
      %p103 = por %p101, %p102
      %p104 = scmp.ne.s32.totalorder %s96, %s98
      %p105 = scmp.eq.s32.totalorder %s39, 1
      %p106 = por %p104, %p105
      %p107 = scmp.ne.s32.totalorder %s98, %s99
      %p108 = scmp.eq.s32.totalorder %s39, 0
      %p109 = por %p107, %p108
      %p110 = scmp.ne.s32.totalorder %s98, %s99
      %p111 = scmp.eq.s32.totalorder %s40, 1
      %p112 = por %p110, %p111
      %p114 = scmp.ne.s32.totalorder %s99, %s113
      %p115 = scmp.eq.s32.totalorder %s40, 0
      %p116 = por %p114, %p115
      %s118 = sadd.s32 %s117, 1
      %p121 = scmp.eq.s32.totalorder %s34, 1
      %p122 = scmp.ne.s32.totalorder %s117, %s119
      %p123 = scmp.eq.s32.totalorder %s34, 0
      %p124 = por %p122, %p123
      %p125 = scmp.ne.s32.totalorder %s117, %s119
      %p126 = scmp.eq.s32.totalorder %s39, 1
      %p127 = por %p125, %p126
      %p128 = scmp.ne.s32.totalorder %s119, %s120
      %p129 = scmp.eq.s32.totalorder %s39, 0
      %p130 = por %p128, %p129
      %p131 = scmp.ne.s32.totalorder %s119, %s120
      %p132 = scmp.eq.s32.totalorder %s40, 1
      %p133 = por %p131, %p132
      %p135 = scmp.ne.s32.totalorder %s120, %s134
      %p136 = scmp.eq.s32.totalorder %s40, 0
      %p137 = por %p135, %p136
      %s139 = sadd.s32 %s138, 1
      %p142 = scmp.eq.s32.totalorder %s34, 1
      %p143 = scmp.ne.s32.totalorder %s138, %s140
      %p144 = scmp.eq.s32.totalorder %s34, 0
      %p145 = por %p143, %p144
      %p146 = scmp.ne.s32.totalorder %s138, %s140
      %p147 = scmp.eq.s32.totalorder %s39, 1
      %p148 = por %p146, %p147
      %p149 = scmp.ne.s32.totalorder %s140, %s141
      %p150 = scmp.eq.s32.totalorder %s39, 0
      %p151 = por %p149, %p150
      %p152 = scmp.ne.s32.totalorder %s140, %s141
      %p153 = scmp.eq.s32.totalorder %s40, 1
      %p154 = por %p152, %p153
      %p156 = scmp.ne.s32.totalorder %s141, %s155
      %p157 = scmp.eq.s32.totalorder %s40, 0
      %p158 = por %p156, %p157
      %s160 = sadd.s32 %s159, 1
      %p163 = scmp.eq.s32.totalorder %s34, 1
      %p164 = scmp.ne.s32.totalorder %s159, %s161
      %p165 = scmp.eq.s32.totalorder %s34, 0
      %p166 = por %p164, %p165
      %p167 = scmp.ne.s32.totalorder %s159, %s161
      %p168 = scmp.eq.s32.totalorder %s39, 1
      %p169 = por %p167, %p168
      %p170 = scmp.ne.s32.totalorder %s161, %s162
      %p171 = scmp.eq.s32.totalorder %s39, 0
      %p172 = por %p170, %p171
      %p173 = scmp.ne.s32.totalorder %s161, %s162
      %p174 = scmp.eq.s32.totalorder %s40, 1
      %p175 = por %p173, %p174
      %p177 = scmp.ne.s32.totalorder %s162, %s176
      %p178 = scmp.eq.s32.totalorder %s40, 0
      %p179 = por %p177, %p178
      %s181 = sadd.s32 %s180, 1
      %p184 = scmp.eq.s32.totalorder %s34, 1
      %p185 = scmp.ne.s32.totalorder %s180, %s182
      %p186 = scmp.eq.s32.totalorder %s34, 0
      %p187 = por %p185, %p186
      %p188 = scmp.ne.s32.totalorder %s180, %s182
      %p189 = scmp.eq.s32.totalorder %s39, 1
      %p190 = por %p188, %p189
      %p191 = scmp.ne.s32.totalorder %s182, %s183
      %p192 = scmp.eq.s32.totalorder %s39, 0
      %p193 = por %p191, %p192
      %p194 = scmp.ne.s32.totalorder %s182, %s183
      %p195 = scmp.eq.s32.totalorder %s40, 1
      %p196 = por %p194, %p195
      %p198 = scmp.ne.s32.totalorder %s183, %s197
      %p199 = scmp.eq.s32.totalorder %s40, 0
      %p200 = por %p198, %p199
      %s202 = sadd.s32 %s201, 1
      %p205 = scmp.eq.s32.totalorder %s34, 1
      %p206 = scmp.ne.s32.totalorder %s201, %s203
      %p207 = scmp.eq.s32.totalorder %s34, 0
      %p208 = por %p206, %p207
      %p209 = scmp.ne.s32.totalorder %s201, %s203
      %p210 = scmp.eq.s32.totalorder %s39, 1
      %p211 = por %p209, %p210
      %p212 = scmp.ne.s32.totalorder %s203, %s204
      %p213 = scmp.eq.s32.totalorder %s39, 0
      %p214 = por %p212, %p213
      %p215 = scmp.ne.s32.totalorder %s203, %s204
      %p216 = scmp.eq.s32.totalorder %s40, 1
      %p217 = por %p215, %p216
      %p219 = scmp.ne.s32.totalorder %s204, %s218
      %p220 = scmp.eq.s32.totalorder %s40, 0
      %p221 = por %p219, %p220
      %s223 = sadd.s32 %s222, 1
      %p226 = scmp.eq.s32.totalorder %s34, 1
      %p227 = scmp.ne.s32.totalorder %s222, %s224
      %p228 = scmp.eq.s32.totalorder %s34, 0
      %p229 = por %p227, %p228
      %p230 = scmp.ne.s32.totalorder %s222, %s224
      %p231 = scmp.eq.s32.totalorder %s39, 1
      %p232 = por %p230, %p231
      %p233 = scmp.ne.s32.totalorder %s224, %s225
      %p234 = scmp.eq.s32.totalorder %s39, 0
      %p235 = por %p233, %p234
      %p236 = scmp.ne.s32.totalorder %s224, %s225
      %p237 = scmp.eq.s32.totalorder %s40, 1
      %p238 = por %p236, %p237
      %p240 = scmp.ne.s32.totalorder %s225, %s239
      %p241 = scmp.eq.s32.totalorder %s40, 0
      %p242 = por %p240, %p241
      %s244 = sadd.s32 %s243, 1
      %p247 = scmp.eq.s32.totalorder %s34, 1
      %p248 = scmp.ne.s32.totalorder %s243, %s245
      %p249 = scmp.eq.s32.totalorder %s34, 0
      %p250 = por %p248, %p249
      %p251 = scmp.ne.s32.totalorder %s243, %s245
      %p252 = scmp.eq.s32.totalorder %s39, 1
      %p253 = por %p251, %p252
      %p254 = scmp.ne.s32.totalorder %s245, %s246
      %p255 = scmp.eq.s32.totalorder %s39, 0
      %p256 = por %p254, %p255
      %p257 = scmp.ne.s32.totalorder %s245, %s246
      %p258 = scmp.eq.s32.totalorder %s40, 1
      %p259 = por %p257, %p258
      %p261 = scmp.ne.s32.totalorder %s246, %s260
      %p262 = scmp.eq.s32.totalorder %s40, 0
      %p263 = por %p261, %p262
      %s265 = sadd.s32 %s264, 1
      %p268 = scmp.eq.s32.totalorder %s34, 1
      %p269 = scmp.ne.s32.totalorder %s264, %s266
      %p270 = scmp.eq.s32.totalorder %s34, 0
      %p271 = por %p269, %p270
      %p272 = scmp.ne.s32.totalorder %s264, %s266
      %p273 = scmp.eq.s32.totalorder %s39, 1
      %p274 = por %p272, %p273
      %p275 = scmp.ne.s32.totalorder %s266, %s267
      %p276 = scmp.eq.s32.totalorder %s39, 0
      %p277 = por %p275, %p276
      %p278 = scmp.ne.s32.totalorder %s266, %s267
      %p279 = scmp.eq.s32.totalorder %s40, 1
      %p280 = por %p278, %p279
      %p282 = scmp.ne.s32.totalorder %s267, %s281
      %p283 = scmp.eq.s32.totalorder %s40, 0
      %p284 = por %p282, %p283
      %s286 = sadd.s32 %s285, 1
      %p289 = scmp.eq.s32.totalorder %s34, 1
      %p290 = scmp.ne.s32.totalorder %s285, %s287
      %p291 = scmp.eq.s32.totalorder %s34, 0
      %p292 = por %p290, %p291
      %p293 = scmp.ne.s32.totalorder %s285, %s287
      %p294 = scmp.eq.s32.totalorder %s39, 1
      %p295 = por %p293, %p294
      %p296 = scmp.ne.s32.totalorder %s287, %s288
      %p297 = scmp.eq.s32.totalorder %s39, 0
      %p298 = por %p296, %p297
      %p299 = scmp.ne.s32.totalorder %s287, %s288
      %p300 = scmp.eq.s32.totalorder %s40, 1
      %p301 = por %p299, %p300
      %p303 = scmp.ne.s32.totalorder %s288, %s302
      %p304 = scmp.eq.s32.totalorder %s40, 0
      %p305 = por %p303, %p304
      %s306 = ssub.s32 %s34, %s41
      %p307 = scmp.eq.s32.totalorder %s306, 0
      %s309 = sadd.s32 %s308, 1
      %s310 = scalar_select %p307, %s308, %s309
      %p313 = pneg %p307
      %p314 = scmp.eq.s32.totalorder %s34, 1
      %p315 = por %p313, %p314
      %p316 = scmp.ne.s32.totalorder %s308, %s311
      %p317 = scmp.eq.s32.totalorder %s34, 0
      %p318 = por %p316, %p317
      %p319 = scmp.ne.s32.totalorder %s308, %s311
      %p320 = scmp.eq.s32.totalorder %s39, 1
      %p321 = por %p319, %p320
      %p322 = scmp.ne.s32.totalorder %s311, %s312
      %p323 = scmp.eq.s32.totalorder %s39, 0
      %p324 = por %p322, %p323
      %p325 = scmp.ne.s32.totalorder %s311, %s312
      %p326 = scmp.eq.s32.totalorder %s40, 1
      %p327 = por %p325, %p326
      %p329 = scmp.ne.s32.totalorder %s312, %s328
      %p330 = scmp.eq.s32.totalorder %s40, 0
      %p331 = por %p329, %p330
      %s332 = ssub.s32 1, %s34
      %s333 = ssub.s32 1, %s41
      %s334 = ssub.s32 %s332, %s333
      %p335 = scmp.eq.s32.totalorder %s334, 0
      %s337 = sadd.s32 %s336, 1
      %s338 = scalar_select %p335, %s336, %s337
      %p341 = pneg %p335
      %p342 = scmp.eq.s32.totalorder %s34, 1
      %p343 = por %p341, %p342
      %p344 = scmp.ne.s32.totalorder %s336, %s339
      %p345 = scmp.eq.s32.totalorder %s34, 0
      %p346 = por %p344, %p345
      %p347 = scmp.ne.s32.totalorder %s336, %s339
      %p348 = scmp.eq.s32.totalorder %s39, 1
      %p349 = por %p347, %p348
      %p350 = scmp.ne.s32.totalorder %s339, %s340
      %p351 = scmp.eq.s32.totalorder %s39, 0
      %p352 = por %p350, %p351
      %p353 = scmp.ne.s32.totalorder %s339, %s340
      %p354 = scmp.eq.s32.totalorder %s40, 1
      %p355 = por %p353, %p354
      %p357 = scmp.ne.s32.totalorder %s340, %s356
      %p358 = scmp.eq.s32.totalorder %s40, 0
      %p359 = por %p357, %p358
      %p360 = scmp.le.s32.totalorder 1, %s34
      %p361 = scmp.lt.s32.totalorder %s34, 3
      %p362 = pnand %p360, %p361
      %p363 = pneg %p362
      // Predicated region
      $region9: #{tpu_custom_call.1} parent=5 // pred_check
        _
      $region10: #{tpu_custom_call.1} parent=5 // pred_check_branch
        %365 = sbr.rel (%p362) target = $region12
      $region11: #{tpu_custom_call.1} parent=5 // pred_region
        %s366 = ssub.s32 %s34, 1
        // Predicated region
        $region13: #{tpu_custom_call.1} parent=11 // pred_check
          %p367 = pneg %p109
        $region14: #{tpu_custom_call.1} parent=11 // pred_check_branch
          %369 = sbr.rel (%p367) target = $region16
        $region15: #{tpu_custom_call.1} parent=11 // pred_region
          _
        $region16: #{tpu_custom_call.1} parent=11 // pred_fallthru
          _
        // Predicated region
        $region17: #{tpu_custom_call.1} parent=11 // pred_check
          %p370 = pneg %p130
        $region18: #{tpu_custom_call.1} parent=11 // pred_check_branch
          %372 = sbr.rel (%p370) target = $region20
        $region19: #{tpu_custom_call.1} parent=11 // pred_region
          _
        $region20: #{tpu_custom_call.1} parent=11 // pred_fallthru
          _
        // Predicated region
        $region21: #{tpu_custom_call.1} parent=11 // pred_check
          %p373 = pneg %p151
        $region22: #{tpu_custom_call.1} parent=11 // pred_check_branch
          %375 = sbr.rel (%p373) target = $region24
        $region23: #{tpu_custom_call.1} parent=11 // pred_region
          %s377 = ssub.s32 256, 256
          %378 = vsyncadd [#allocation8], %s377
          %s379 = sshll.u32 [#allocation9], 4
          %s380 = int_to_ptr.vmem [resolvable:$true] %s379
          %385 = dma.hbm_to_vmem [thread:$0]  %s4, 256, %s380, [#allocation8], 64, 64, 4
        $region24: #{tpu_custom_call.1} parent=11 // pred_fallthru
          _
        // Predicated region
        $region25: #{tpu_custom_call.1} parent=11 // pred_check
          %p386 = pneg %p172
        $region26: #{tpu_custom_call.1} parent=11 // pred_check_branch
          %388 = sbr.rel (%p386) target = $region28
        $region27: #{tpu_custom_call.1} parent=11 // pred_region
          %s390 = ssub.s32 256, 256
          %391 = vsyncadd [#allocation11], %s390
          %s392 = sshll.u32 [#allocation10], 4
          %s393 = int_to_ptr.vmem [resolvable:$true] %s392
          %398 = dma.hbm_to_vmem [thread:$0]  %s5, 256, %s393, [#allocation11], 64, 64, 4
        $region28: #{tpu_custom_call.1} parent=11 // pred_fallthru
          _
        // Predicated region
        $region29: #{tpu_custom_call.1} parent=11 // pred_check
          %p399 = pneg %p193
        $region30: #{tpu_custom_call.1} parent=11 // pred_check_branch
          %401 = sbr.rel (%p399) target = $region32
        $region31: #{tpu_custom_call.1} parent=11 // pred_region
          %s403 = ssub.s32 256, 256
          %404 = vsyncadd [#allocation11], %s403
          %s405 = sshll.u32 [#allocation12], 4
          %s406 = int_to_ptr.vmem [resolvable:$true] %s405
          %411 = dma.hbm_to_vmem [thread:$0]  %s6, 256, %s406, [#allocation11], 64, 64, 4
        $region32: #{tpu_custom_call.1} parent=11 // pred_fallthru
          _
        // Predicated region
        $region33: #{tpu_custom_call.1} parent=11 // pred_check
          %p412 = pneg %p214
        $region34: #{tpu_custom_call.1} parent=11 // pred_check_branch
          %414 = sbr.rel (%p412) target = $region36
        $region35: #{tpu_custom_call.1} parent=11 // pred_region
          %s416 = ssub.s32 256, 256
          %417 = vsyncadd [#allocation14], %s416
          %s418 = sshll.u32 [#allocation13], 4
          %s419 = int_to_ptr.vmem [resolvable:$true] %s418
          %424 = dma.hbm_to_vmem [thread:$0]  %s7, 256, %s419, [#allocation14], 64, 64, 4
        $region36: #{tpu_custom_call.1} parent=11 // pred_fallthru
          _
        // Predicated region
        $region37: #{tpu_custom_call.1} parent=11 // pred_check
          %p425 = pneg %p235
        $region38: #{tpu_custom_call.1} parent=11 // pred_check_branch
          %427 = sbr.rel (%p425) target = $region40
        $region39: #{tpu_custom_call.1} parent=11 // pred_region
          _
        $region40: #{tpu_custom_call.1} parent=11 // pred_fallthru
          _
        // Predicated region
        $region41: #{tpu_custom_call.1} parent=11 // pred_check
          %p428 = pneg %p256
        $region42: #{tpu_custom_call.1} parent=11 // pred_check_branch
          %430 = sbr.rel (%p428) target = $region44
        $region43: #{tpu_custom_call.1} parent=11 // pred_region
          _
        $region44: #{tpu_custom_call.1} parent=11 // pred_fallthru
          _
        // Predicated region
        $region45: #{tpu_custom_call.1} parent=11 // pred_check
          %p431 = pneg %p277
        $region46: #{tpu_custom_call.1} parent=11 // pred_check_branch
          %433 = sbr.rel (%p431) target = $region48
        $region47: #{tpu_custom_call.1} parent=11 // pred_region
          _
        $region48: #{tpu_custom_call.1} parent=11 // pred_fallthru
          _
        // Predicated region
        $region49: #{tpu_custom_call.1} parent=11 // pred_check
          %p434 = pneg %p298
        $region50: #{tpu_custom_call.1} parent=11 // pred_check_branch
          %436 = sbr.rel (%p434) target = $region52
        $region51: #{tpu_custom_call.1} parent=11 // pred_region
          _
        $region52: #{tpu_custom_call.1} parent=11 // pred_fallthru
          _
      $region12: #{tpu_custom_call.1} parent=5 // pred_fallthru
        _
      %p437 = scmp.lt.s32.totalorder %s34, 2
      // Predicated region
      $region53: #{tpu_custom_call.1} parent=5 // pred_check
        %p438 = pneg %p437
      $region54: #{tpu_custom_call.1} parent=5 // pred_check_branch
        %440 = sbr.rel (%p438) target = $region56
      $region55: #{tpu_custom_call.1} parent=5 // pred_region
        // Predicated region
        $region57: #{tpu_custom_call.1} parent=55 // pred_check
          %p441 = pneg %p54
        $region58: #{tpu_custom_call.1} parent=55 // pred_check_branch
          %443 = sbr.rel (%p441) target = $region60
        $region59: #{tpu_custom_call.1} parent=55 // pred_region
          %s444 = sand.u32 %s44, 1
          %s445 = scalar_lea.sflag [#allocation5], %s444
          %s446 = sand.u32 %s44, 1
          %s447 = smul.addr %s446, 16
          %s448 = scalar_lea.vmem [#allocation4], %s447
          %s450 = ssub.s32 256, 256
          %451 = vsyncadd %s445, %s450
          %s452 = smul.addr %s34, 128
          %s453 = scalar_lea.hbm %s0, %s452
          %s454 = sshll.u32 %s448, 4
          %s455 = int_to_ptr.vmem [resolvable:$true] %s454
          %460 = dma.hbm_to_vmem [thread:$0]  %s453, 256, %s455, %s445, 256, 128, 8
        $region60: #{tpu_custom_call.1} parent=55 // pred_fallthru
          _
        // Predicated region
        $region61: #{tpu_custom_call.1} parent=55 // pred_check
          %p461 = pneg %p82
        $region62: #{tpu_custom_call.1} parent=55 // pred_check_branch
          %463 = sbr.rel (%p461) target = $region64
        $region63: #{tpu_custom_call.1} parent=55 // pred_region
          %s464 = sand.u32 %s34, 1
          %s465 = scalar_lea.sflag [#allocation8], %s464
          %s466 = sand.u32 %s72, 1
          %s467 = smul.addr %s466, 16
          %s468 = scalar_lea.vmem [#allocation7], %s467
          %s469 = ssub.s32 1, %s34
          %s471 = ssub.s32 256, 256
          %472 = vsyncadd %s465, %s471
          %s473 = smul.addr %s469, 128
          %s474 = scalar_lea.hbm %s1, %s473
          %s475 = sshll.u32 %s468, 4
          %s476 = int_to_ptr.vmem [resolvable:$true] %s475
          %481 = dma.hbm_to_vmem [thread:$0]  %s474, 256, %s476, %s465, 256, 128, 8
        $region64: #{tpu_custom_call.1} parent=55 // pred_fallthru
          _
      $region56: #{tpu_custom_call.1} parent=5 // pred_fallthru
        _
      %p482 = scmp.le.s32.totalorder 1, %s34
      %p483 = scmp.lt.s32.totalorder %s34, 3
      %p484 = pnand %p482, %p483
      %p485 = pneg %p484
      // Predicated region
      $region65: #{tpu_custom_call.1} parent=5 // pred_check
        _
      $region66: #{tpu_custom_call.1} parent=5 // pred_check_branch
        %487 = sbr.rel (%p484) target = $region68
      $region67: #{tpu_custom_call.1} parent=5 // pred_region
        %s488 = ssub.s32 %s34, 1
        %s489 = sand.u32 %s47, 1
        %s490 = scalar_lea.sflag [#allocation5], %s489
        %s491 = sand.u32 %s47, 1
        %s492 = smul.addr %s491, 16
        %s493 = scalar_lea.vmem [#allocation4], %s492
        // Predicated region
        $region69: #{tpu_custom_call.1} parent=67 // pred_check
          %p494 = pneg %p60
        $region70: #{tpu_custom_call.1} parent=67 // pred_check_branch
          %496 = sbr.rel (%p494) target = $region72
        $region71: #{tpu_custom_call.1} parent=67 // pred_region
          %497 = dma.done %s490, 256
        $region72: #{tpu_custom_call.1} parent=67 // pred_fallthru
          _
        %s498 = sand.u32 %s39, 1
        %s499 = scalar_lea.sflag [#allocation8], %s498
        %s500 = sand.u32 %s75, 1
        %s501 = smul.addr %s500, 16
        %s502 = scalar_lea.vmem [#allocation7], %s501
        // Predicated region
        $region73: #{tpu_custom_call.1} parent=67 // pred_check
          %p503 = pneg %p88
        $region74: #{tpu_custom_call.1} parent=67 // pred_check_branch
          %505 = sbr.rel (%p503) target = $region76
        $region75: #{tpu_custom_call.1} parent=67 // pred_region
          %506 = dma.done %s499, 256
        $region76: #{tpu_custom_call.1} parent=67 // pred_fallthru
          _
        // Predicated region
        $region77: #{tpu_custom_call.1} parent=67 // pred_check
          %p507 = pneg %p151
        $region78: #{tpu_custom_call.1} parent=67 // pred_check_branch
          %509 = sbr.rel (%p507) target = $region80
        $region79: #{tpu_custom_call.1} parent=67 // pred_region
          %510 = dma.done [#allocation8], 256
        $region80: #{tpu_custom_call.1} parent=67 // pred_fallthru
          _
        // Predicated region
        $region81: #{tpu_custom_call.1} parent=67 // pred_check
          %p511 = pneg %p172
        $region82: #{tpu_custom_call.1} parent=67 // pred_check_branch
          %513 = sbr.rel (%p511) target = $region84
        $region83: #{tpu_custom_call.1} parent=67 // pred_region
          %514 = dma.done [#allocation11], 256
        $region84: #{tpu_custom_call.1} parent=67 // pred_fallthru
          _
        // Predicated region
        $region85: #{tpu_custom_call.1} parent=67 // pred_check
          %p515 = pneg %p193
        $region86: #{tpu_custom_call.1} parent=67 // pred_check_branch
          %517 = sbr.rel (%p515) target = $region88
        $region87: #{tpu_custom_call.1} parent=67 // pred_region
          %518 = dma.done [#allocation11], 256
        $region88: #{tpu_custom_call.1} parent=67 // pred_fallthru
          _
        // Predicated region
        $region89: #{tpu_custom_call.1} parent=67 // pred_check
          %p519 = pneg %p214
        $region90: #{tpu_custom_call.1} parent=67 // pred_check_branch
          %521 = sbr.rel (%p519) target = $region92
        $region91: #{tpu_custom_call.1} parent=67 // pred_region
          %522 = dma.done [#allocation14], 256
        $region92: #{tpu_custom_call.1} parent=67 // pred_fallthru
          _
        %s523 = sand.u32 %s47, 1
        %s524 = scalar_lea.sflag [#allocation5], %s523
        %s525 = sand.u32 %s47, 1
        %s526 = smul.addr %s525, 16
        %s527 = scalar_lea.vmem [#allocation4], %s526
        %p528 = pneg %p60
        %p529 = pneg %p57
        %s530 = sand.u32 %s39, 1
        %s531 = scalar_lea.sflag [#allocation8], %s530
        %s532 = sand.u32 %s75, 1
        %s533 = smul.addr %s532, 16
        %s534 = scalar_lea.vmem [#allocation7], %s533
        %p535 = pneg %p88
        %p536 = pneg %p85
        %p537 = pneg %p109
        %p538 = pneg %p106
        %p539 = pneg %p130
        %p540 = pneg %p127
        %p541 = pneg %p151
        %p542 = pneg %p148
        %p543 = pneg %p172
        %p544 = pneg %p169
        %p545 = pneg %p193
        %p546 = pneg %p190
        %p547 = pneg %p214
        %p548 = pneg %p211
        %p549 = pneg %p235
        %p550 = pneg %p232
        %p551 = pneg %p256
        %p552 = pneg %p253
        %p553 = pneg %p277
        %p554 = pneg %p274
        %p555 = pneg %p298
        %p556 = pneg %p295
        %p557 = pneg %p324
        %p558 = pneg %p321
        %s559 = sand.u32 %s311, 1
        %s560 = scalar_lea.sflag [#allocation6], %s559
        %s561 = sand.u32 %s311, 1
        %s562 = smul.addr %s561, 16
        %s563 = scalar_lea.vmem [#allocation15], %s562
        %p564 = pneg %p352
        %p565 = pneg %p349
        %s566 = sand.u32 %s339, 1
        %s567 = scalar_lea.sflag [#allocation17], %s566
        %s568 = sand.u32 %s339, 1
        %s569 = smul.addr %s568, 16
        %s570 = scalar_lea.vmem [#allocation16], %s569
        %s571 = ssub.s32 1, %s39
        %s572 = ssub.s32 1, %s39
        %p574 = scmp.eq.s32.totalorder %s39, 0
        // Predicated region
        $region93: #{tpu_custom_call.1} parent=67 // pred_check
          %p575 = pneg %p574
        $region94: #{tpu_custom_call.1} parent=67 // pred_check_branch
          %577 = sbr.rel (%p575) target = $region96
        $region95: #{tpu_custom_call.1} parent=67 // pred_region
          %vm578 = vcmask 254976
          %579 = vst.msk [vmem:[#allocation2] sm:$0x3] %vm578, 0.0
          %580 = vst.msk [vmem:[#allocation3] sm:$0x3] %vm578, 0.0
        $region96: #{tpu_custom_call.1} parent=67 // pred_fallthru
          _
        %v581 = vld [vmem:[%s2] sm:$0x1]
        %v582 = vld [vmem:[%s3] sm:$0x1]
        %v583 = vld [vmem:[%s493] sm:$0xff]
        %v584 = vld [vmem:[%s493 + $0x8] sm:$0xff]
        %v585 = vld [vmem:[#allocation9] sm:$0xf]
        %v586 = vld [vmem:[#allocation9 + $0x4] sm:$0xf]
        %v587 = vld [vmem:[#allocation9 + $0x8] sm:$0xf]
        %v588 = vld [vmem:[#allocation9 + $0xc] sm:$0xf]
        %v589 = vld [vmem:[%s8] sm:$0x1]
        %vm590 = vcmask 261120
        %v591 = vsel %vm590, %v583, 0.0
        %592 = vadd.xlane.f32.xlu0 %v591
        %v593 = vpop.xlane.xlu0 %592
        %v594 = vsel %vm590, %v584, 0.0
        %595 = vadd.xlane.f32.xlu0 %v594
        %v596 = vpop.xlane.xlu0 %595
        %v597 = vrcp.pop 32.0
        %v598 = vmul.f32 %v593, %v597
        %v599 = vmul.f32 %v596, %v597
        %v600 = vsub.f32 %v583, %v598
        %v601 = vsub.f32 %v584, %v599
        %v602 = vmul.f32 %v600, %v600
        %v603 = vmul.f32 %v601, %v601
        %v604 = vsel %vm590, %v602, 0.0
        %605 = vadd.xlane.f32.xlu0 %v604
        %v606 = vpop.xlane.xlu0 %605
        %v607 = vsel %vm590, %v603, 0.0
        %608 = vadd.xlane.f32.xlu0 %v607
        %v609 = vpop.xlane.xlu0 %608
        %v610 = vmul.f32 %v606, %v597
        %v611 = vmul.f32 %v609, %v597
        %v612 = vadd.f32 %v610, 1e-05
        %v613 = vadd.f32 %v611, 1e-05
        %v614 = vrsqrt.pop %v612
        %v615 = vrsqrt.pop %v613
        %v616 = vmul.f32 %v600, %v614
        %v617 = vmul.f32 %v601, %v615
        %v619 = vlaneseq
        %v620 = vshrl.u32 %v619, 7
        %v621 = vsub.s32 0, %v620
        %v622 = vrot.slane %v581, %v621
        %v624 = vmul.f32 %v616, %v622
        %v625 = vmul.f32 %v617, %v622
        %v627 = vlaneseq
        %v628 = vshrl.u32 %v627, 7
        %v629 = vsub.s32 0, %v628
        %v630 = vrot.slane %v582, %v629
        %v632 = vadd.f32 %v624, %v630
        %v633 = vadd.f32 %v625, %v630
        %v634 = vmul.f32 %v632, 0.5
        %v635 = vmul.f32 %v633, 0.5
        %v636 = vmul.f32 %v632, 0.70710677
        %v637 = vmul.f32 %v633, 0.70710677
        %v638 = verf.f32.pop %v636
        %v639 = verf.f32.pop %v637
        %v640 = vadd.f32 %v638, 1.0
        %v641 = vadd.f32 %v639, 1.0
        %v642 = vmul.f32 %v634, %v640
        %v643 = vmul.f32 %v635, %v641
        %v644 = vpack.c.bf16 %v643, %v642
        %v646 = vlaneseq
        %v647 = vshrl.u32 %v646, 7
        %v648 = vsub.s32 0, %v647
        %v649 = vrot.slane %v589, %v648
        %v655 = vunpack.c.l.b16 %v585
        %v656 = vunpack.c.l.b16 %v586
        %v657 = vunpack.c.l.b16 %v587
        %v658 = vunpack.c.l.b16 %v588
        %v659 = vpack.c.b16 %v656, %v655
        %v660 = vpack.c.b16 %v658, %v657
        %v664 = vsel %vm590, %v644, 0
        %666 = vmatprep.subr.bf16.mxu0 0
        %667 = vmatpush1.bf16.msra.mxu0 0
        %668 = vmatprep.subr.bf16.mxu0 0
        %669 = vmatpush1.bf16.msra.mxu0 0
        %670 = vmatprep.subr.bf16.mxu0 0
        %671 = vmatpush1.bf16.msra.mxu0 0
        %672 = vmatprep.subr.bf16.mxu0 0
        %673 = vmatpush1.bf16.msra.mxu0 0
        %674 = vmatprep.subr.bf16.mxu0 0
        %675 = vmatpush1.bf16.msra.mxu0 0
        %676 = vmatprep.subr.bf16.mxu0 0
        %677 = vmatpush1.bf16.msra.mxu0 0
        %678 = vmatprep.subr.bf16.mxu0 0
        %679 = vmatpush1.bf16.msra.mxu0 %v660
        %680 = vmatprep.subr.bf16.mxu0 0
        %681 = vmatpush1.bf16.msra.mxu0 %v659
        %682 = vmatprep.subr.bf16.mxu0 0
        %683 = vmatpush2.bf16.msra.mxu0 0
        %684 = vmatprep.subr.bf16.mxu0 0
        %685 = vmatpush2.bf16.msra.mxu0 0
        %686 = vmatprep.subr.bf16.mxu0 0
        %687 = vmatpush2.bf16.msra.mxu0 0
        %688 = vmatprep.subr.bf16.mxu0 0
        %689 = vmatpush2.bf16.msra.mxu0 0
        %690 = vmatprep.subr.bf16.mxu0 0
        %691 = vmatpush2.bf16.msra.mxu0 0
        %692 = vmatprep.subr.bf16.mxu0 0
        %693 = vmatpush2.bf16.msra.mxu0 0
        %694 = vmatprep.subr.bf16.mxu0 0
        %695 = vmatpush2.bf16.msra.mxu0 0
        %696 = vmatprep.subr.bf16.mxu0 0
        %697 = vmatpush2.bf16.msra.mxu0 0
        %698 = vmatprep.mubr.bf16.mxu0 0
        %699 = vmatmul.mubr.bf16.gmra.mxu0 %v664
        %v700 = vpop.f32.mrf.mxu0
        %v701 = vadd.f32 %v649, %v700
        %v702 = vpop.f32.mrf.mxu0
        %v703 = vpop.f32.mrf.mxu0
        %v704 = vadd.f32 %v649, %v703
        %v705 = vpop.f32.mrf.mxu0
        %706 = vdwg.mxu0
        %v707 = vld [vmem:[%s502] sm:$0xff]
        %v708 = vld [vmem:[%s502 + $0x8] sm:$0xff]
        %v709 = vld [vmem:[#allocation10] sm:$0xf]
        %v710 = vld [vmem:[#allocation10 + $0x4] sm:$0xf]
        %v711 = vld [vmem:[#allocation10 + $0x8] sm:$0xf]
        %v712 = vld [vmem:[#allocation10 + $0xc] sm:$0xf]
        %v713 = vld [vmem:[%s9] sm:$0x1]
        %v714 = vsel %vm590, %v707, 0.0
        %715 = vadd.xlane.f32.xlu0 %v714
        %v716 = vpop.xlane.xlu0 %715
        %v717 = vsel %vm590, %v708, 0.0
        %718 = vadd.xlane.f32.xlu0 %v717
        %v719 = vpop.xlane.xlu0 %718
        %v720 = vmul.f32 %v716, %v597
        %v721 = vmul.f32 %v719, %v597
        %v722 = vsub.f32 %v707, %v720
        %v723 = vsub.f32 %v708, %v721
        %v724 = vmul.f32 %v722, %v722
        %v725 = vmul.f32 %v723, %v723
        %v726 = vsel %vm590, %v724, 0.0
        %727 = vadd.xlane.f32.xlu0 %v726
        %v728 = vpop.xlane.xlu0 %727
        %v729 = vsel %vm590, %v725, 0.0
        %730 = vadd.xlane.f32.xlu0 %v729
        %v731 = vpop.xlane.xlu0 %730
        %v732 = vmul.f32 %v728, %v597
        %v733 = vmul.f32 %v731, %v597
        %v734 = vadd.f32 %v732, 1e-05
        %v735 = vadd.f32 %v733, 1e-05
        %v736 = vrsqrt.pop %v734
        %v737 = vrsqrt.pop %v735
        %v738 = vmul.f32 %v722, %v736
        %v739 = vmul.f32 %v723, %v737
        %v740 = vmul.f32 %v738, %v622
        %v741 = vmul.f32 %v739, %v622
        %v742 = vadd.f32 %v740, %v630
        %v743 = vadd.f32 %v741, %v630
        %v744 = vmul.f32 %v742, 0.5
        %v745 = vmul.f32 %v743, 0.5
        %v746 = vmul.f32 %v742, 0.70710677
        %v747 = vmul.f32 %v743, 0.70710677
        %v748 = verf.f32.pop %v746
        %v749 = verf.f32.pop %v747
        %v750 = vadd.f32 %v748, 1.0
        %v751 = vadd.f32 %v749, 1.0
        %v752 = vmul.f32 %v744, %v750
        %v753 = vmul.f32 %v745, %v751
        %v754 = vpack.c.bf16 %v753, %v752
        %v756 = vlaneseq
        %v757 = vshrl.u32 %v756, 7
        %v758 = vsub.s32 0, %v757
        %v759 = vrot.slane %v713, %v758
        %v765 = vunpack.c.l.b16 %v709
        %v766 = vunpack.c.l.b16 %v710
        %v767 = vunpack.c.l.b16 %v711
        %v768 = vunpack.c.l.b16 %v712
        %v769 = vpack.c.b16 %v766, %v765
        %v770 = vpack.c.b16 %v768, %v767
        %v774 = vsel %vm590, %v754, 0
        %776 = vmatprep.subr.bf16.mxu0 0
        %777 = vmatpush1.bf16.msra.mxu0 0
        %778 = vmatprep.subr.bf16.mxu0 0
        %779 = vmatpush1.bf16.msra.mxu0 0
        %780 = vmatprep.subr.bf16.mxu0 0
        %781 = vmatpush1.bf16.msra.mxu0 0
        %782 = vmatprep.subr.bf16.mxu0 0
        %783 = vmatpush1.bf16.msra.mxu0 0
        %784 = vmatprep.subr.bf16.mxu0 0
        %785 = vmatpush1.bf16.msra.mxu0 0
        %786 = vmatprep.subr.bf16.mxu0 0
        %787 = vmatpush1.bf16.msra.mxu0 0
        %788 = vmatprep.subr.bf16.mxu0 0
        %789 = vmatpush1.bf16.msra.mxu0 %v770
        %790 = vmatprep.subr.bf16.mxu0 0
        %791 = vmatpush1.bf16.msra.mxu0 %v769
        %792 = vmatprep.subr.bf16.mxu0 0
        %793 = vmatpush2.bf16.msra.mxu0 0
        %794 = vmatprep.subr.bf16.mxu0 0
        %795 = vmatpush2.bf16.msra.mxu0 0
        %796 = vmatprep.subr.bf16.mxu0 0
        %797 = vmatpush2.bf16.msra.mxu0 0
        %798 = vmatprep.subr.bf16.mxu0 0
        %799 = vmatpush2.bf16.msra.mxu0 0
        %800 = vmatprep.subr.bf16.mxu0 0
        %801 = vmatpush2.bf16.msra.mxu0 0
        %802 = vmatprep.subr.bf16.mxu0 0
        %803 = vmatpush2.bf16.msra.mxu0 0
        %804 = vmatprep.subr.bf16.mxu0 0
        %805 = vmatpush2.bf16.msra.mxu0 0
        %806 = vmatprep.subr.bf16.mxu0 0
        %807 = vmatpush2.bf16.msra.mxu0 0
        %808 = vmatprep.mubr.bf16.mxu0 0
        %809 = vmatmul.mubr.bf16.gmra.mxu0 %v774
        %v810 = vpop.f32.mrf.mxu0
        %v811 = vadd.f32 %v759, %v810
        %v812 = vpop.f32.mrf.mxu0
        %v813 = vpop.f32.mrf.mxu0
        %v814 = vadd.f32 %v759, %v813
        %v815 = vpop.f32.mrf.mxu0
        %816 = vdwg.mxu0
        %v817 = vld [vmem:[#allocation12] sm:$0xf]
        %v818 = vld [vmem:[#allocation12 + $0x4] sm:$0xf]
        %v819 = vld [vmem:[#allocation12 + $0x8] sm:$0xf]
        %v820 = vld [vmem:[#allocation12 + $0xc] sm:$0xf]
        %v821 = vld [vmem:[#allocation13] sm:$0xf]
        %v822 = vld [vmem:[#allocation13 + $0x4] sm:$0xf]
        %v823 = vld [vmem:[#allocation13 + $0x8] sm:$0xf]
        %v824 = vld [vmem:[#allocation13 + $0xc] sm:$0xf]
        %v825 = vld [vmem:[%s10] sm:$0x1]
        %v826 = vld [vmem:[%s11] sm:$0x1]
        %v827 = vld [vmem:[#allocation2] sm:$0x3]
        %v828 = vld [vmem:[#allocation3] sm:$0x3]
        %v829 = vpack.c.bf16 %v827, %v827
        %v834 = vunpack.c.l.b16 %v817
        %v835 = vunpack.c.l.b16 %v818
        %v836 = vunpack.c.l.b16 %v819
        %v837 = vunpack.c.l.b16 %v820
        %v838 = vpack.c.b16 %v835, %v834
        %v839 = vpack.c.b16 %v837, %v836
        %v843 = vsel %vm590, %v829, 0
        %845 = vmatprep.subr.bf16.mxu0 0
        %846 = vmatpush1.bf16.msra.mxu0 0
        %847 = vmatprep.subr.bf16.mxu0 0
        %848 = vmatpush1.bf16.msra.mxu0 0
        %849 = vmatprep.subr.bf16.mxu0 0
        %850 = vmatpush1.bf16.msra.mxu0 0
        %851 = vmatprep.subr.bf16.mxu0 0
        %852 = vmatpush1.bf16.msra.mxu0 0
        %853 = vmatprep.subr.bf16.mxu0 0
        %854 = vmatpush1.bf16.msra.mxu0 0
        %855 = vmatprep.subr.bf16.mxu0 0
        %856 = vmatpush1.bf16.msra.mxu0 0
        %857 = vmatprep.subr.bf16.mxu0 0
        %858 = vmatpush1.bf16.msra.mxu0 %v839
        %859 = vmatprep.subr.bf16.mxu0 0
        %860 = vmatpush1.bf16.msra.mxu0 %v838
        %861 = vmatprep.subr.bf16.mxu0 0
        %862 = vmatpush2.bf16.msra.mxu0 0
        %863 = vmatprep.subr.bf16.mxu0 0
        %864 = vmatpush2.bf16.msra.mxu0 0
        %865 = vmatprep.subr.bf16.mxu0 0
        %866 = vmatpush2.bf16.msra.mxu0 0
        %867 = vmatprep.subr.bf16.mxu0 0
        %868 = vmatpush2.bf16.msra.mxu0 0
        %869 = vmatprep.subr.bf16.mxu0 0
        %870 = vmatpush2.bf16.msra.mxu0 0
        %871 = vmatprep.subr.bf16.mxu0 0
        %872 = vmatpush2.bf16.msra.mxu0 0
        %873 = vmatprep.subr.bf16.mxu0 0
        %874 = vmatpush2.bf16.msra.mxu0 0
        %875 = vmatprep.subr.bf16.mxu0 0
        %876 = vmatpush2.bf16.msra.mxu0 0
        %877 = vmatprep.mubr.bf16.mxu0 0
        %878 = vmatmul.mubr.bf16.gmra.mxu0 %v843
        %v879 = vpop.f32.mrf.mxu0
        %v880 = vadd.f32 0.0, %v879
        %v881 = vpop.f32.mrf.mxu0
        %v882 = vpop.f32.mrf.mxu0
        %v883 = vpop.f32.mrf.mxu0
        %884 = vdwg.mxu0
        %v886 = vrot.slane %v880, 1
        %v889 = vadd.f32 %v701, %v880
        %v890 = vadd.f32 %v704, %v886
        %v891 = vxor.u32 %v889, 2147483648
        %v892 = vxor.u32 %v890, 2147483648
        %v893 = vmul.f32 %v891, 1.442695
        %v894 = vpow.pop %v893
        %v895 = vmul.f32 %v892, 1.442695
        %v896 = vpow.pop %v895
        %v897 = vadd.f32 %v894, 1.0
        %v898 = vadd.f32 %v896, 1.0
        %v899 = vrcp.pop %v897
        %v900 = vmul.f32 1.0, %v899
        %v901 = vrcp.pop %v898
        %v902 = vmul.f32 1.0, %v901
        %v904 = vlaneseq
        %v905 = vshrl.u32 %v904, 7
        %v906 = vsub.s32 0, %v905
        %v907 = vrot.slane %v825, %v906
        %908 = vrot.lane.b32.xlu0 %v907, 64
        %v909 = vpop.permute.xlu0 %908
        %v911 = vadd.f32 %v880, %v909
        %v913 = vrot.slane %v911, 1
        %914 = vrot.lane.b32.xlu0 %v911, 64
        %v915 = vpop.permute.xlu0 %914
        %916 = vrot.lane.b32.xlu0 %v913, 64
        %v917 = vpop.permute.xlu0 %916
        %v920 = vmul.f32 %v900, %v915
        %v921 = vmul.f32 %v902, %v917
        %924 = vrot.lane.b32.xlu0 %v920, 64
        %v925 = vpop.permute.xlu0 %924
        %926 = vrot.lane.b32.xlu0 %v921, 64
        %v927 = vpop.permute.xlu0 %926
        %v930 = vadd.f32 %v701, %v925
        %v931 = vadd.f32 %v704, %v927
        %v932 = vtanh.pop %v930
        %v933 = vtanh.pop %v931
        %v934 = vsub.f32 1.0, %v900
        %v935 = vsub.f32 1.0, %v902
        %938 = vrot.lane.b32.xlu0 %v932, 96
        %v939 = vpop.permute.xlu0 %938
        %940 = vrot.lane.b32.xlu0 %v933, 96
        %v941 = vpop.permute.xlu0 %940
        %v944 = vmul.f32 %v934, %v939
        %v945 = vmul.f32 %v935, %v941
        %v947 = vrot.slane %v827, 1
        %948 = vrot.lane.b32.xlu0 %v827, 32
        %v949 = vpop.permute.xlu0 %948
        %950 = vrot.lane.b32.xlu0 %v947, 32
        %v951 = vpop.permute.xlu0 %950
        %v954 = vmul.f32 %v900, %v949
        %v955 = vmul.f32 %v902, %v951
        %v956 = vadd.f32 %v944, %v954
        %v957 = vadd.f32 %v945, %v955
        %v958 = vpack.c.bf16 %v828, %v828
        %v963 = vunpack.c.l.b16 %v821
        %v964 = vunpack.c.l.b16 %v822
        %v965 = vunpack.c.l.b16 %v823
        %v966 = vunpack.c.l.b16 %v824
        %v967 = vpack.c.b16 %v964, %v963
        %v968 = vpack.c.b16 %v966, %v965
        %v972 = vsel %vm590, %v958, 0
        %974 = vmatprep.subr.bf16.mxu0 0
        %975 = vmatpush1.bf16.msra.mxu0 0
        %976 = vmatprep.subr.bf16.mxu0 0
        %977 = vmatpush1.bf16.msra.mxu0 0
        %978 = vmatprep.subr.bf16.mxu0 0
        %979 = vmatpush1.bf16.msra.mxu0 0
        %980 = vmatprep.subr.bf16.mxu0 0
        %981 = vmatpush1.bf16.msra.mxu0 0
        %982 = vmatprep.subr.bf16.mxu0 0
        %983 = vmatpush1.bf16.msra.mxu0 0
        %984 = vmatprep.subr.bf16.mxu0 0
        %985 = vmatpush1.bf16.msra.mxu0 0
        %986 = vmatprep.subr.bf16.mxu0 0
        %987 = vmatpush1.bf16.msra.mxu0 %v968
        %988 = vmatprep.subr.bf16.mxu0 0
        %989 = vmatpush1.bf16.msra.mxu0 %v967
        %990 = vmatprep.subr.bf16.mxu0 0
        %991 = vmatpush2.bf16.msra.mxu0 0
        %992 = vmatprep.subr.bf16.mxu0 0
        %993 = vmatpush2.bf16.msra.mxu0 0
        %994 = vmatprep.subr.bf16.mxu0 0
        %995 = vmatpush2.bf16.msra.mxu0 0
        %996 = vmatprep.subr.bf16.mxu0 0
        %997 = vmatpush2.bf16.msra.mxu0 0
        %998 = vmatprep.subr.bf16.mxu0 0
        %999 = vmatpush2.bf16.msra.mxu0 0
        %1000 = vmatprep.subr.bf16.mxu0 0
        %1001 = vmatpush2.bf16.msra.mxu0 0
        %1002 = vmatprep.subr.bf16.mxu0 0
        %1003 = vmatpush2.bf16.msra.mxu0 0
        %1004 = vmatprep.subr.bf16.mxu0 0
        %1005 = vmatpush2.bf16.msra.mxu0 0
        %1006 = vmatprep.mubr.bf16.mxu0 0
        %1007 = vmatmul.mubr.bf16.gmra.mxu0 %v972
        %v1008 = vpop.f32.mrf.mxu0
        %v1009 = vadd.f32 0.0, %v1008
        %v1010 = vpop.f32.mrf.mxu0
        %v1011 = vpop.f32.mrf.mxu0
        %v1012 = vpop.f32.mrf.mxu0
        %1013 = vdwg.mxu0
        %v1015 = vrot.slane %v1009, 1
        %v1016 = vrot.slane %v1009, 2
        %v1019 = vadd.f32 %v811, %v1015
        %v1020 = vadd.f32 %v814, %v1016
        %v1021 = vxor.u32 %v1019, 2147483648
        %v1022 = vxor.u32 %v1020, 2147483648
        %v1023 = vmul.f32 %v1021, 1.442695
        %v1024 = vpow.pop %v1023
        %v1025 = vmul.f32 %v1022, 1.442695
        %v1026 = vpow.pop %v1025
        %v1027 = vadd.f32 %v1024, 1.0
        %v1028 = vadd.f32 %v1026, 1.0
        %v1029 = vrcp.pop %v1027
        %v1030 = vmul.f32 1.0, %v1029
        %v1031 = vrcp.pop %v1028
        %v1032 = vmul.f32 1.0, %v1031
        %v1034 = vlaneseq
        %v1035 = vshrl.u32 %v1034, 7
        %v1036 = vsub.s32 0, %v1035
        %v1037 = vrot.slane %v826, %v1036
        %1038 = vrot.lane.b32.xlu0 %v1037, 64
        %v1039 = vpop.permute.xlu0 %1038
        %v1041 = vadd.f32 %v1009, %v1039
        %v1043 = vrot.slane %v1041, 1
        %v1044 = vrot.slane %v1041, 2
        %1045 = vrot.lane.b32.xlu0 %v1043, 64
        %v1046 = vpop.permute.xlu0 %1045
        %1047 = vrot.lane.b32.xlu0 %v1044, 64
        %v1048 = vpop.permute.xlu0 %1047
        %v1051 = vmul.f32 %v1030, %v1046
        %v1052 = vmul.f32 %v1032, %v1048
        %1055 = vrot.lane.b32.xlu0 %v1051, 64
        %v1056 = vpop.permute.xlu0 %1055
        %1057 = vrot.lane.b32.xlu0 %v1052, 64
        %v1058 = vpop.permute.xlu0 %1057
        %v1061 = vadd.f32 %v811, %v1056
        %v1062 = vadd.f32 %v814, %v1058
        %v1063 = vtanh.pop %v1061
        %v1064 = vtanh.pop %v1062
        %v1065 = vsub.f32 1.0, %v1030
        %v1066 = vsub.f32 1.0, %v1032
        %1069 = vrot.lane.b32.xlu0 %v1063, 96
        %v1070 = vpop.permute.xlu0 %1069
        %1071 = vrot.lane.b32.xlu0 %v1064, 96
        %v1072 = vpop.permute.xlu0 %1071
        %v1075 = vmul.f32 %v1065, %v1070
        %v1076 = vmul.f32 %v1066, %v1072
        %v1078 = vrot.slane %v828, 1
        %v1079 = vrot.slane %v828, 2
        %1080 = vrot.lane.b32.xlu0 %v1078, 32
        %v1081 = vpop.permute.xlu0 %1080
        %1082 = vrot.lane.b32.xlu0 %v1079, 32
        %v1083 = vpop.permute.xlu0 %1082
        %v1086 = vmul.f32 %v1030, %v1081
        %v1087 = vmul.f32 %v1032, %v1083
        %v1088 = vadd.f32 %v1075, %v1086
        %v1089 = vadd.f32 %v1076, %v1087
        %1092 = vrot.lane.b32.xlu0 %v956, 96
        %v1093 = vpop.permute.xlu0 %1092
        %1094 = vrot.lane.b32.xlu0 %v957, 96
        %v1095 = vpop.permute.xlu0 %1094
        %vm1098 = vcmask 253952
        %1099 = vst.msk [vmem:[%s563] sm:$0x1] %vm1098, %v1093
        %1100 = vst.msk [vmem:[%s563 + $0x8] sm:$0x1] %vm1098, %v1095
        %1103 = vrot.lane.b32.xlu0 %v1088, 96
        %v1104 = vpop.permute.xlu0 %1103
        %1105 = vrot.lane.b32.xlu0 %v1089, 96
        %v1106 = vpop.permute.xlu0 %1105
        %vm1109 = vcmask 261127
        %1110 = vst.msk [vmem:[%s570] sm:$0x80] %vm1109, %v1104
        %1111 = vst.msk [vmem:[%s570 + $0x8] sm:$0x80] %vm1109, %v1106
        %v1112 = vpack.c.bf16 %v956, %v956
        %v1113 = vpack.c.bf16 %v957, %v957
        %v1116 = vunpack.c.l.b16 %v1112
        %v1117 = vunpack.c.l.b16 %v1113
        %v1118 = vrot.slane %v1117, 7
        %vm1119 = vcmask 1041409
        %v1120 = vsel %vm1119, %v1118, %v1116
        %v1121 = vpack.c.b16 %v1120, %v1120
        %1122 = vrot.lane.b32.xlu0 %v1121, 96
        %v1123 = vpop.permute.xlu0 %1122
        %v1125 = vsel %vm590, %v1123, 0
        %1127 = vmatprep.subr.bf16.mxu0 0
        %1128 = vmatpush1.bf16.msra.mxu0 0
        %1129 = vmatprep.subr.bf16.mxu0 0
        %1130 = vmatpush1.bf16.msra.mxu0 0
        %1131 = vmatprep.subr.bf16.mxu0 0
        %1132 = vmatpush1.bf16.msra.mxu0 0
        %1133 = vmatprep.subr.bf16.mxu0 0
        %1134 = vmatpush1.bf16.msra.mxu0 0
        %1135 = vmatprep.subr.bf16.mxu0 0
        %1136 = vmatpush1.bf16.msra.mxu0 0
        %1137 = vmatprep.subr.bf16.mxu0 0
        %1138 = vmatpush1.bf16.msra.mxu0 0
        %1139 = vmatprep.subr.bf16.mxu0 0
        %1140 = vmatpush1.bf16.msra.mxu0 %v839
        %1141 = vmatprep.subr.bf16.mxu0 0
        %1142 = vmatpush1.bf16.msra.mxu0 %v838
        %1143 = vmatprep.subr.bf16.mxu0 0
        %1144 = vmatpush2.bf16.msra.mxu0 0
        %1145 = vmatprep.subr.bf16.mxu0 0
        %1146 = vmatpush2.bf16.msra.mxu0 0
        %1147 = vmatprep.subr.bf16.mxu0 0
        %1148 = vmatpush2.bf16.msra.mxu0 0
        %1149 = vmatprep.subr.bf16.mxu0 0
        %1150 = vmatpush2.bf16.msra.mxu0 0
        %1151 = vmatprep.subr.bf16.mxu0 0
        %1152 = vmatpush2.bf16.msra.mxu0 0
        %1153 = vmatprep.subr.bf16.mxu0 0
        %1154 = vmatpush2.bf16.msra.mxu0 0
        %1155 = vmatprep.subr.bf16.mxu0 0
        %1156 = vmatpush2.bf16.msra.mxu0 0
        %1157 = vmatprep.subr.bf16.mxu0 0
        %1158 = vmatpush2.bf16.msra.mxu0 0
        %1159 = vmatprep.mubr.bf16.mxu0 0
        %1160 = vmatmul.mubr.bf16.gmra.mxu0 %v1125
        %v1161 = vpop.f32.mrf.mxu0
        %v1162 = vadd.f32 0.0, %v1161
        %v1163 = vpop.f32.mrf.mxu0
        %v1164 = vpop.f32.mrf.mxu0
        %v1165 = vpop.f32.mrf.mxu0
        %1166 = vdwg.mxu0
        %v1168 = vrot.slane %v1162, 7
        %v1171 = vadd.f32 %v701, %v1168
        %v1172 = vadd.f32 %v704, %v1162
        %v1173 = vxor.u32 %v1171, 2147483648
        %v1174 = vxor.u32 %v1172, 2147483648
        %v1175 = vmul.f32 %v1173, 1.442695
        %v1176 = vpow.pop %v1175
        %v1177 = vmul.f32 %v1174, 1.442695
        %v1178 = vpow.pop %v1177
        %v1179 = vadd.f32 %v1176, 1.0
        %v1180 = vadd.f32 %v1178, 1.0
        %v1181 = vrcp.pop %v1179
        %v1182 = vmul.f32 1.0, %v1181
        %v1183 = vrcp.pop %v1180
        %v1184 = vmul.f32 1.0, %v1183
        %v1185 = vadd.f32 %v1162, %v909
        %v1187 = vrot.slane %v1185, 7
        %1188 = vrot.lane.b32.xlu0 %v1187, 64
        %v1189 = vpop.permute.xlu0 %1188
        %1190 = vrot.lane.b32.xlu0 %v1185, 64
        %v1191 = vpop.permute.xlu0 %1190
        %v1194 = vmul.f32 %v1182, %v1189
        %v1195 = vmul.f32 %v1184, %v1191
        %1198 = vrot.lane.b32.xlu0 %v1194, 64
        %v1199 = vpop.permute.xlu0 %1198
        %1200 = vrot.lane.b32.xlu0 %v1195, 64
        %v1201 = vpop.permute.xlu0 %1200
        %v1204 = vadd.f32 %v701, %v1199
        %v1205 = vadd.f32 %v704, %v1201
        %v1206 = vtanh.pop %v1204
        %v1207 = vtanh.pop %v1205
        %v1208 = vsub.f32 1.0, %v1182
        %v1209 = vsub.f32 1.0, %v1184
        %1212 = vrot.lane.b32.xlu0 %v1206, 96
        %v1213 = vpop.permute.xlu0 %1212
        %1214 = vrot.lane.b32.xlu0 %v1207, 96
        %v1215 = vpop.permute.xlu0 %1214
        %v1218 = vmul.f32 %v1208, %v1213
        %v1219 = vmul.f32 %v1209, %v1215
        %v1220 = vrot.slane %v956, 7
        %v1221 = vrot.slane %v957, 7
        %v1224 = vmul.f32 %v1182, %v1220
        %v1225 = vmul.f32 %v1184, %v1221
        %v1226 = vadd.f32 %v1218, %v1224
        %v1227 = vadd.f32 %v1219, %v1225
        %v1228 = vpack.c.bf16 %v1088, %v1088
        %v1229 = vpack.c.bf16 %v1089, %v1089
        %v1232 = vunpack.c.l.b16 %v1228
        %v1233 = vunpack.c.l.b16 %v1229
        %v1234 = vrot.slane %v1232, 7
        %v1235 = vrot.slane %v1233, 6
        %v1236 = vsel %vm1119, %v1235, %v1234
        %v1237 = vpack.c.b16 %v1236, %v1236
        %1238 = vrot.lane.b32.xlu0 %v1237, 96
        %v1239 = vpop.permute.xlu0 %1238
        %v1241 = vsel %vm590, %v1239, 0
        %1243 = vmatprep.subr.bf16.mxu0 0
        %1244 = vmatpush1.bf16.msra.mxu0 0
        %1245 = vmatprep.subr.bf16.mxu0 0
        %1246 = vmatpush1.bf16.msra.mxu0 0
        %1247 = vmatprep.subr.bf16.mxu0 0
        %1248 = vmatpush1.bf16.msra.mxu0 0
        %1249 = vmatprep.subr.bf16.mxu0 0
        %1250 = vmatpush1.bf16.msra.mxu0 0
        %1251 = vmatprep.subr.bf16.mxu0 0
        %1252 = vmatpush1.bf16.msra.mxu0 0
        %1253 = vmatprep.subr.bf16.mxu0 0
        %1254 = vmatpush1.bf16.msra.mxu0 0
        %1255 = vmatprep.subr.bf16.mxu0 0
        %1256 = vmatpush1.bf16.msra.mxu0 %v968
        %1257 = vmatprep.subr.bf16.mxu0 0
        %1258 = vmatpush1.bf16.msra.mxu0 %v967
        %1259 = vmatprep.subr.bf16.mxu0 0
        %1260 = vmatpush2.bf16.msra.mxu0 0
        %1261 = vmatprep.subr.bf16.mxu0 0
        %1262 = vmatpush2.bf16.msra.mxu0 0
        %1263 = vmatprep.subr.bf16.mxu0 0
        %1264 = vmatpush2.bf16.msra.mxu0 0
        %1265 = vmatprep.subr.bf16.mxu0 0
        %1266 = vmatpush2.bf16.msra.mxu0 0
        %1267 = vmatprep.subr.bf16.mxu0 0
        %1268 = vmatpush2.bf16.msra.mxu0 0
        %1269 = vmatprep.subr.bf16.mxu0 0
        %1270 = vmatpush2.bf16.msra.mxu0 0
        %1271 = vmatprep.subr.bf16.mxu0 0
        %1272 = vmatpush2.bf16.msra.mxu0 0
        %1273 = vmatprep.subr.bf16.mxu0 0
        %1274 = vmatpush2.bf16.msra.mxu0 0
        %1275 = vmatprep.mubr.bf16.mxu0 0
        %1276 = vmatmul.mubr.bf16.gmra.mxu0 %v1241
        %v1277 = vpop.f32.mrf.mxu0
        %v1278 = vadd.f32 0.0, %v1277
        %v1279 = vpop.f32.mrf.mxu0
        %v1280 = vpop.f32.mrf.mxu0
        %v1281 = vpop.f32.mrf.mxu0
        %1282 = vdwg.mxu0
        %v1284 = vrot.slane %v1278, 2
        %v1285 = vrot.slane %v1278, 3
        %v1288 = vadd.f32 %v811, %v1284
        %v1289 = vadd.f32 %v814, %v1285
        %v1290 = vxor.u32 %v1288, 2147483648
        %v1291 = vxor.u32 %v1289, 2147483648
        %v1292 = vmul.f32 %v1290, 1.442695
        %v1293 = vpow.pop %v1292
        %v1294 = vmul.f32 %v1291, 1.442695
        %v1295 = vpow.pop %v1294
        %v1296 = vadd.f32 %v1293, 1.0
        %v1297 = vadd.f32 %v1295, 1.0
        %v1298 = vrcp.pop %v1296
        %v1299 = vmul.f32 1.0, %v1298
        %v1300 = vrcp.pop %v1297
        %v1301 = vmul.f32 1.0, %v1300
        %v1302 = vadd.f32 %v1278, %v1039
        %v1304 = vrot.slane %v1302, 2
        %v1305 = vrot.slane %v1302, 3
        %1306 = vrot.lane.b32.xlu0 %v1304, 64
        %v1307 = vpop.permute.xlu0 %1306
        %1308 = vrot.lane.b32.xlu0 %v1305, 64
        %v1309 = vpop.permute.xlu0 %1308
        %v1312 = vmul.f32 %v1299, %v1307
        %v1313 = vmul.f32 %v1301, %v1309
        %1316 = vrot.lane.b32.xlu0 %v1312, 64
        %v1317 = vpop.permute.xlu0 %1316
        %1318 = vrot.lane.b32.xlu0 %v1313, 64
        %v1319 = vpop.permute.xlu0 %1318
        %v1322 = vadd.f32 %v811, %v1317
        %v1323 = vadd.f32 %v814, %v1319
        %v1324 = vtanh.pop %v1322
        %v1325 = vtanh.pop %v1323
        %v1326 = vsub.f32 1.0, %v1299
        %v1327 = vsub.f32 1.0, %v1301
        %1330 = vrot.lane.b32.xlu0 %v1324, 96
        %v1331 = vpop.permute.xlu0 %1330
        %1332 = vrot.lane.b32.xlu0 %v1325, 96
        %v1333 = vpop.permute.xlu0 %1332
        %v1336 = vmul.f32 %v1326, %v1331
        %v1337 = vmul.f32 %v1327, %v1333
        %v1338 = vrot.slane %v1088, 1
        %v1339 = vrot.slane %v1089, 1
        %v1342 = vmul.f32 %v1299, %v1338
        %v1343 = vmul.f32 %v1301, %v1339
        %v1344 = vadd.f32 %v1336, %v1342
        %v1345 = vadd.f32 %v1337, %v1343
        %1348 = vrot.lane.b32.xlu0 %v1226, 96
        %v1349 = vpop.permute.xlu0 %1348
        %1350 = vrot.lane.b32.xlu0 %v1227, 96
        %v1351 = vpop.permute.xlu0 %1350
        %vm1354 = vcmask 254977
        %1355 = vst.msk [vmem:[%s563] sm:$0x2] %vm1354, %v1349
        %1356 = vst.msk [vmem:[%s563 + $0x8] sm:$0x2] %vm1354, %v1351
        %1359 = vrot.lane.b32.xlu0 %v1344, 96
        %v1360 = vpop.permute.xlu0 %1359
        %1361 = vrot.lane.b32.xlu0 %v1345, 96
        %v1362 = vpop.permute.xlu0 %1361
        %vm1365 = vcmask 260102
        %1366 = vst.msk [vmem:[%s570] sm:$0x40] %vm1365, %v1360
        %1367 = vst.msk [vmem:[%s570 + $0x8] sm:$0x40] %vm1365, %v1362
        %v1368 = vpack.c.bf16 %v1226, %v1226
        %v1369 = vpack.c.bf16 %v1227, %v1227
        %v1372 = vunpack.c.l.b16 %v1368
        %v1373 = vunpack.c.l.b16 %v1369
        %v1374 = vrot.slane %v1372, 1
        %v1375 = vsel %vm1119, %v1373, %v1374
        %v1376 = vpack.c.b16 %v1375, %v1375
        %1377 = vrot.lane.b32.xlu0 %v1376, 96
        %v1378 = vpop.permute.xlu0 %1377
        %v1380 = vsel %vm590, %v1378, 0
        %1382 = vmatprep.subr.bf16.mxu0 0
        %1383 = vmatpush1.bf16.msra.mxu0 0
        %1384 = vmatprep.subr.bf16.mxu0 0
        %1385 = vmatpush1.bf16.msra.mxu0 0
        %1386 = vmatprep.subr.bf16.mxu0 0
        %1387 = vmatpush1.bf16.msra.mxu0 0
        %1388 = vmatprep.subr.bf16.mxu0 0
        %1389 = vmatpush1.bf16.msra.mxu0 0
        %1390 = vmatprep.subr.bf16.mxu0 0
        %1391 = vmatpush1.bf16.msra.mxu0 0
        %1392 = vmatprep.subr.bf16.mxu0 0
        %1393 = vmatpush1.bf16.msra.mxu0 0
        %1394 = vmatprep.subr.bf16.mxu0 0
        %1395 = vmatpush1.bf16.msra.mxu0 %v839
        %1396 = vmatprep.subr.bf16.mxu0 0
        %1397 = vmatpush1.bf16.msra.mxu0 %v838
        %1398 = vmatprep.subr.bf16.mxu0 0
        %1399 = vmatpush2.bf16.msra.mxu0 0
        %1400 = vmatprep.subr.bf16.mxu0 0
        %1401 = vmatpush2.bf16.msra.mxu0 0
        %1402 = vmatprep.subr.bf16.mxu0 0
        %1403 = vmatpush2.bf16.msra.mxu0 0
        %1404 = vmatprep.subr.bf16.mxu0 0
        %1405 = vmatpush2.bf16.msra.mxu0 0
        %1406 = vmatprep.subr.bf16.mxu0 0
        %1407 = vmatpush2.bf16.msra.mxu0 0
        %1408 = vmatprep.subr.bf16.mxu0 0
        %1409 = vmatpush2.bf16.msra.mxu0 0
        %1410 = vmatprep.subr.bf16.mxu0 0
        %1411 = vmatpush2.bf16.msra.mxu0 0
        %1412 = vmatprep.subr.bf16.mxu0 0
        %1413 = vmatpush2.bf16.msra.mxu0 0
        %1414 = vmatprep.mubr.bf16.mxu0 0
        %1415 = vmatmul.mubr.bf16.gmra.mxu0 %v1380
        %v1416 = vpop.f32.mrf.mxu0
        %v1417 = vadd.f32 0.0, %v1416
        %v1418 = vpop.f32.mrf.mxu0
        %v1419 = vpop.f32.mrf.mxu0
        %v1420 = vpop.f32.mrf.mxu0
        %1421 = vdwg.mxu0
        %v1423 = vrot.slane %v1417, 6
        %v1424 = vrot.slane %v1417, 7
        %v1427 = vadd.f32 %v701, %v1423
        %v1428 = vadd.f32 %v704, %v1424
        %v1429 = vxor.u32 %v1427, 2147483648
        %v1430 = vxor.u32 %v1428, 2147483648
        %v1431 = vmul.f32 %v1429, 1.442695
        %v1432 = vpow.pop %v1431
        %v1433 = vmul.f32 %v1430, 1.442695
        %v1434 = vpow.pop %v1433
        %v1435 = vadd.f32 %v1432, 1.0
        %v1436 = vadd.f32 %v1434, 1.0
        %v1437 = vrcp.pop %v1435
        %v1438 = vmul.f32 1.0, %v1437
        %v1439 = vrcp.pop %v1436
        %v1440 = vmul.f32 1.0, %v1439
        %v1441 = vadd.f32 %v1417, %v909
        %v1443 = vrot.slane %v1441, 6
        %v1444 = vrot.slane %v1441, 7
        %1445 = vrot.lane.b32.xlu0 %v1443, 64
        %v1446 = vpop.permute.xlu0 %1445
        %1447 = vrot.lane.b32.xlu0 %v1444, 64
        %v1448 = vpop.permute.xlu0 %1447
        %v1451 = vmul.f32 %v1438, %v1446
        %v1452 = vmul.f32 %v1440, %v1448
        %1455 = vrot.lane.b32.xlu0 %v1451, 64
        %v1456 = vpop.permute.xlu0 %1455
        %1457 = vrot.lane.b32.xlu0 %v1452, 64
        %v1458 = vpop.permute.xlu0 %1457
        %v1461 = vadd.f32 %v701, %v1456
        %v1462 = vadd.f32 %v704, %v1458
        %v1463 = vtanh.pop %v1461
        %v1464 = vtanh.pop %v1462
        %v1465 = vsub.f32 1.0, %v1438
        %v1466 = vsub.f32 1.0, %v1440
        %1469 = vrot.lane.b32.xlu0 %v1463, 96
        %v1470 = vpop.permute.xlu0 %1469
        %1471 = vrot.lane.b32.xlu0 %v1464, 96
        %v1472 = vpop.permute.xlu0 %1471
        %v1475 = vmul.f32 %v1465, %v1470
        %v1476 = vmul.f32 %v1466, %v1472
        %v1477 = vrot.slane %v1226, 7
        %v1478 = vrot.slane %v1227, 7
        %v1481 = vmul.f32 %v1438, %v1477
        %v1482 = vmul.f32 %v1440, %v1478
        %v1483 = vadd.f32 %v1475, %v1481
        %v1484 = vadd.f32 %v1476, %v1482
        %v1485 = vpack.c.bf16 %v1344, %v1344
        %v1486 = vpack.c.bf16 %v1345, %v1345
        %v1489 = vunpack.c.l.b16 %v1485
        %v1490 = vunpack.c.l.b16 %v1486
        %v1491 = vrot.slane %v1489, 6
        %v1492 = vrot.slane %v1490, 5
        %v1493 = vsel %vm1119, %v1492, %v1491
        %v1494 = vpack.c.b16 %v1493, %v1493
        %1495 = vrot.lane.b32.xlu0 %v1494, 96
        %v1496 = vpop.permute.xlu0 %1495
        %v1498 = vsel %vm590, %v1496, 0
        %1500 = vmatprep.subr.bf16.mxu0 0
        %1501 = vmatpush1.bf16.msra.mxu0 0
        %1502 = vmatprep.subr.bf16.mxu0 0
        %1503 = vmatpush1.bf16.msra.mxu0 0
        %1504 = vmatprep.subr.bf16.mxu0 0
        %1505 = vmatpush1.bf16.msra.mxu0 0
        %1506 = vmatprep.subr.bf16.mxu0 0
        %1507 = vmatpush1.bf16.msra.mxu0 0
        %1508 = vmatprep.subr.bf16.mxu0 0
        %1509 = vmatpush1.bf16.msra.mxu0 0
        %1510 = vmatprep.subr.bf16.mxu0 0
        %1511 = vmatpush1.bf16.msra.mxu0 0
        %1512 = vmatprep.subr.bf16.mxu0 0
        %1513 = vmatpush1.bf16.msra.mxu0 %v968
        %1514 = vmatprep.subr.bf16.mxu0 0
        %1515 = vmatpush1.bf16.msra.mxu0 %v967
        %1516 = vmatprep.subr.bf16.mxu0 0
        %1517 = vmatpush2.bf16.msra.mxu0 0
        %1518 = vmatprep.subr.bf16.mxu0 0
        %1519 = vmatpush2.bf16.msra.mxu0 0
        %1520 = vmatprep.subr.bf16.mxu0 0
        %1521 = vmatpush2.bf16.msra.mxu0 0
        %1522 = vmatprep.subr.bf16.mxu0 0
        %1523 = vmatpush2.bf16.msra.mxu0 0
        %1524 = vmatprep.subr.bf16.mxu0 0
        %1525 = vmatpush2.bf16.msra.mxu0 0
        %1526 = vmatprep.subr.bf16.mxu0 0
        %1527 = vmatpush2.bf16.msra.mxu0 0
        %1528 = vmatprep.subr.bf16.mxu0 0
        %1529 = vmatpush2.bf16.msra.mxu0 0
        %1530 = vmatprep.subr.bf16.mxu0 0
        %1531 = vmatpush2.bf16.msra.mxu0 0
        %1532 = vmatprep.mubr.bf16.mxu0 0
        %1533 = vmatmul.mubr.bf16.gmra.mxu0 %v1498
        %v1534 = vpop.f32.mrf.mxu0
        %v1535 = vadd.f32 0.0, %v1534
        %v1536 = vpop.f32.mrf.mxu0
        %v1537 = vpop.f32.mrf.mxu0
        %v1538 = vpop.f32.mrf.mxu0
        %1539 = vdwg.mxu0
        %v1541 = vrot.slane %v1535, 3
        %v1542 = vrot.slane %v1535, 4
        %v1545 = vadd.f32 %v811, %v1541
        %v1546 = vadd.f32 %v814, %v1542
        %v1547 = vxor.u32 %v1545, 2147483648
        %v1548 = vxor.u32 %v1546, 2147483648
        %v1549 = vmul.f32 %v1547, 1.442695
        %v1550 = vpow.pop %v1549
        %v1551 = vmul.f32 %v1548, 1.442695
        %v1552 = vpow.pop %v1551
        %v1553 = vadd.f32 %v1550, 1.0
        %v1554 = vadd.f32 %v1552, 1.0
        %v1555 = vrcp.pop %v1553
        %v1556 = vmul.f32 1.0, %v1555
        %v1557 = vrcp.pop %v1554
        %v1558 = vmul.f32 1.0, %v1557
        %v1559 = vadd.f32 %v1535, %v1039
        %v1561 = vrot.slane %v1559, 3
        %v1562 = vrot.slane %v1559, 4
        %1563 = vrot.lane.b32.xlu0 %v1561, 64
        %v1564 = vpop.permute.xlu0 %1563
        %1565 = vrot.lane.b32.xlu0 %v1562, 64
        %v1566 = vpop.permute.xlu0 %1565
        %v1569 = vmul.f32 %v1556, %v1564
        %v1570 = vmul.f32 %v1558, %v1566
        %1573 = vrot.lane.b32.xlu0 %v1569, 64
        %v1574 = vpop.permute.xlu0 %1573
        %1575 = vrot.lane.b32.xlu0 %v1570, 64
        %v1576 = vpop.permute.xlu0 %1575
        %v1579 = vadd.f32 %v811, %v1574
        %v1580 = vadd.f32 %v814, %v1576
        %v1581 = vtanh.pop %v1579
        %v1582 = vtanh.pop %v1580
        %v1583 = vsub.f32 1.0, %v1556
        %v1584 = vsub.f32 1.0, %v1558
        %1587 = vrot.lane.b32.xlu0 %v1581, 96
        %v1588 = vpop.permute.xlu0 %1587
        %1589 = vrot.lane.b32.xlu0 %v1582, 96
        %v1590 = vpop.permute.xlu0 %1589
        %v1593 = vmul.f32 %v1583, %v1588
        %v1594 = vmul.f32 %v1584, %v1590
        %v1595 = vrot.slane %v1344, 1
        %v1596 = vrot.slane %v1345, 1
        %v1599 = vmul.f32 %v1556, %v1595
        %v1600 = vmul.f32 %v1558, %v1596
        %v1601 = vadd.f32 %v1593, %v1599
        %v1602 = vadd.f32 %v1594, %v1600
        %1605 = vrot.lane.b32.xlu0 %v1483, 96
        %v1606 = vpop.permute.xlu0 %1605
        %1607 = vrot.lane.b32.xlu0 %v1484, 96
        %v1608 = vpop.permute.xlu0 %1607
        %vm1611 = vcmask 256002
        %1612 = vst.msk [vmem:[%s563] sm:$0x4] %vm1611, %v1606
        %1613 = vst.msk [vmem:[%s563 + $0x8] sm:$0x4] %vm1611, %v1608
        %1616 = vrot.lane.b32.xlu0 %v1601, 96
        %v1617 = vpop.permute.xlu0 %1616
        %1618 = vrot.lane.b32.xlu0 %v1602, 96
        %v1619 = vpop.permute.xlu0 %1618
        %vm1622 = vcmask 259077
        %1623 = vst.msk [vmem:[%s570] sm:$0x20] %vm1622, %v1617
        %1624 = vst.msk [vmem:[%s570 + $0x8] sm:$0x20] %vm1622, %v1619
        %v1625 = vpack.c.bf16 %v1483, %v1483
        %v1626 = vpack.c.bf16 %v1484, %v1484
        %v1629 = vunpack.c.l.b16 %v1625
        %v1630 = vunpack.c.l.b16 %v1626
        %v1631 = vrot.slane %v1629, 2
        %v1632 = vrot.slane %v1630, 1
        %v1633 = vsel %vm1119, %v1632, %v1631
        %v1634 = vpack.c.b16 %v1633, %v1633
        %1635 = vrot.lane.b32.xlu0 %v1634, 96
        %v1636 = vpop.permute.xlu0 %1635
        %v1638 = vsel %vm590, %v1636, 0
        %1640 = vmatprep.subr.bf16.mxu0 0
        %1641 = vmatpush1.bf16.msra.mxu0 0
        %1642 = vmatprep.subr.bf16.mxu0 0
        %1643 = vmatpush1.bf16.msra.mxu0 0
        %1644 = vmatprep.subr.bf16.mxu0 0
        %1645 = vmatpush1.bf16.msra.mxu0 0
        %1646 = vmatprep.subr.bf16.mxu0 0
        %1647 = vmatpush1.bf16.msra.mxu0 0
        %1648 = vmatprep.subr.bf16.mxu0 0
        %1649 = vmatpush1.bf16.msra.mxu0 0
        %1650 = vmatprep.subr.bf16.mxu0 0
        %1651 = vmatpush1.bf16.msra.mxu0 0
        %1652 = vmatprep.subr.bf16.mxu0 0
        %1653 = vmatpush1.bf16.msra.mxu0 %v839
        %1654 = vmatprep.subr.bf16.mxu0 0
        %1655 = vmatpush1.bf16.msra.mxu0 %v838
        %1656 = vmatprep.subr.bf16.mxu0 0
        %1657 = vmatpush2.bf16.msra.mxu0 0
        %1658 = vmatprep.subr.bf16.mxu0 0
        %1659 = vmatpush2.bf16.msra.mxu0 0
        %1660 = vmatprep.subr.bf16.mxu0 0
        %1661 = vmatpush2.bf16.msra.mxu0 0
        %1662 = vmatprep.subr.bf16.mxu0 0
        %1663 = vmatpush2.bf16.msra.mxu0 0
        %1664 = vmatprep.subr.bf16.mxu0 0
        %1665 = vmatpush2.bf16.msra.mxu0 0
        %1666 = vmatprep.subr.bf16.mxu0 0
        %1667 = vmatpush2.bf16.msra.mxu0 0
        %1668 = vmatprep.subr.bf16.mxu0 0
        %1669 = vmatpush2.bf16.msra.mxu0 0
        %1670 = vmatprep.subr.bf16.mxu0 0
        %1671 = vmatpush2.bf16.msra.mxu0 0
        %1672 = vmatprep.mubr.bf16.mxu0 0
        %1673 = vmatmul.mubr.bf16.gmra.mxu0 %v1638
        %v1674 = vpop.f32.mrf.mxu0
        %v1675 = vadd.f32 0.0, %v1674
        %v1676 = vpop.f32.mrf.mxu0
        %v1677 = vpop.f32.mrf.mxu0
        %v1678 = vpop.f32.mrf.mxu0
        %1679 = vdwg.mxu0
        %v1681 = vrot.slane %v1675, 5
        %v1682 = vrot.slane %v1675, 6
        %v1685 = vadd.f32 %v701, %v1681
        %v1686 = vadd.f32 %v704, %v1682
        %v1687 = vxor.u32 %v1685, 2147483648
        %v1688 = vxor.u32 %v1686, 2147483648
        %v1689 = vmul.f32 %v1687, 1.442695
        %v1690 = vpow.pop %v1689
        %v1691 = vmul.f32 %v1688, 1.442695
        %v1692 = vpow.pop %v1691
        %v1693 = vadd.f32 %v1690, 1.0
        %v1694 = vadd.f32 %v1692, 1.0
        %v1695 = vrcp.pop %v1693
        %v1696 = vmul.f32 1.0, %v1695
        %v1697 = vrcp.pop %v1694
        %v1698 = vmul.f32 1.0, %v1697
        %v1699 = vadd.f32 %v1675, %v909
        %v1701 = vrot.slane %v1699, 5
        %v1702 = vrot.slane %v1699, 6
        %1703 = vrot.lane.b32.xlu0 %v1701, 64
        %v1704 = vpop.permute.xlu0 %1703
        %1705 = vrot.lane.b32.xlu0 %v1702, 64
        %v1706 = vpop.permute.xlu0 %1705
        %v1709 = vmul.f32 %v1696, %v1704
        %v1710 = vmul.f32 %v1698, %v1706
        %1713 = vrot.lane.b32.xlu0 %v1709, 64
        %v1714 = vpop.permute.xlu0 %1713
        %1715 = vrot.lane.b32.xlu0 %v1710, 64
        %v1716 = vpop.permute.xlu0 %1715
        %v1719 = vadd.f32 %v701, %v1714
        %v1720 = vadd.f32 %v704, %v1716
        %v1721 = vtanh.pop %v1719
        %v1722 = vtanh.pop %v1720
        %v1723 = vsub.f32 1.0, %v1696
        %v1724 = vsub.f32 1.0, %v1698
        %1727 = vrot.lane.b32.xlu0 %v1721, 96
        %v1728 = vpop.permute.xlu0 %1727
        %1729 = vrot.lane.b32.xlu0 %v1722, 96
        %v1730 = vpop.permute.xlu0 %1729
        %v1733 = vmul.f32 %v1723, %v1728
        %v1734 = vmul.f32 %v1724, %v1730
        %v1735 = vrot.slane %v1483, 7
        %v1736 = vrot.slane %v1484, 7
        %v1739 = vmul.f32 %v1696, %v1735
        %v1740 = vmul.f32 %v1698, %v1736
        %v1741 = vadd.f32 %v1733, %v1739
        %v1742 = vadd.f32 %v1734, %v1740
        %v1743 = vpack.c.bf16 %v1601, %v1601
        %v1744 = vpack.c.bf16 %v1602, %v1602
        %v1747 = vunpack.c.l.b16 %v1743
        %v1748 = vunpack.c.l.b16 %v1744
        %v1749 = vrot.slane %v1747, 5
        %v1750 = vrot.slane %v1748, 4
        %v1751 = vsel %vm1119, %v1750, %v1749
        %v1752 = vpack.c.b16 %v1751, %v1751
        %1753 = vrot.lane.b32.xlu0 %v1752, 96
        %v1754 = vpop.permute.xlu0 %1753
        %v1756 = vsel %vm590, %v1754, 0
        %1758 = vmatprep.subr.bf16.mxu0 0
        %1759 = vmatpush1.bf16.msra.mxu0 0
        %1760 = vmatprep.subr.bf16.mxu0 0
        %1761 = vmatpush1.bf16.msra.mxu0 0
        %1762 = vmatprep.subr.bf16.mxu0 0
        %1763 = vmatpush1.bf16.msra.mxu0 0
        %1764 = vmatprep.subr.bf16.mxu0 0
        %1765 = vmatpush1.bf16.msra.mxu0 0
        %1766 = vmatprep.subr.bf16.mxu0 0
        %1767 = vmatpush1.bf16.msra.mxu0 0
        %1768 = vmatprep.subr.bf16.mxu0 0
        %1769 = vmatpush1.bf16.msra.mxu0 0
        %1770 = vmatprep.subr.bf16.mxu0 0
        %1771 = vmatpush1.bf16.msra.mxu0 %v968
        %1772 = vmatprep.subr.bf16.mxu0 0
        %1773 = vmatpush1.bf16.msra.mxu0 %v967
        %1774 = vmatprep.subr.bf16.mxu0 0
        %1775 = vmatpush2.bf16.msra.mxu0 0
        %1776 = vmatprep.subr.bf16.mxu0 0
        %1777 = vmatpush2.bf16.msra.mxu0 0
        %1778 = vmatprep.subr.bf16.mxu0 0
        %1779 = vmatpush2.bf16.msra.mxu0 0
        %1780 = vmatprep.subr.bf16.mxu0 0
        %1781 = vmatpush2.bf16.msra.mxu0 0
        %1782 = vmatprep.subr.bf16.mxu0 0
        %1783 = vmatpush2.bf16.msra.mxu0 0
        %1784 = vmatprep.subr.bf16.mxu0 0
        %1785 = vmatpush2.bf16.msra.mxu0 0
        %1786 = vmatprep.subr.bf16.mxu0 0
        %1787 = vmatpush2.bf16.msra.mxu0 0
        %1788 = vmatprep.subr.bf16.mxu0 0
        %1789 = vmatpush2.bf16.msra.mxu0 0
        %1790 = vmatprep.mubr.bf16.mxu0 0
        %1791 = vmatmul.mubr.bf16.gmra.mxu0 %v1756
        %v1792 = vpop.f32.mrf.mxu0
        %v1793 = vadd.f32 0.0, %v1792
        %v1794 = vpop.f32.mrf.mxu0
        %v1795 = vpop.f32.mrf.mxu0
        %v1796 = vpop.f32.mrf.mxu0
        %1797 = vdwg.mxu0
        %v1799 = vrot.slane %v1793, 4
        %v1800 = vrot.slane %v1793, 5
        %v1803 = vadd.f32 %v811, %v1799
        %v1804 = vadd.f32 %v814, %v1800
        %v1805 = vxor.u32 %v1803, 2147483648
        %v1806 = vxor.u32 %v1804, 2147483648
        %v1807 = vmul.f32 %v1805, 1.442695
        %v1808 = vpow.pop %v1807
        %v1809 = vmul.f32 %v1806, 1.442695
        %v1810 = vpow.pop %v1809
        %v1811 = vadd.f32 %v1808, 1.0
        %v1812 = vadd.f32 %v1810, 1.0
        %v1813 = vrcp.pop %v1811
        %v1814 = vmul.f32 1.0, %v1813
        %v1815 = vrcp.pop %v1812
        %v1816 = vmul.f32 1.0, %v1815
        %v1817 = vadd.f32 %v1793, %v1039
        %v1819 = vrot.slane %v1817, 4
        %v1820 = vrot.slane %v1817, 5
        %1821 = vrot.lane.b32.xlu0 %v1819, 64
        %v1822 = vpop.permute.xlu0 %1821
        %1823 = vrot.lane.b32.xlu0 %v1820, 64
        %v1824 = vpop.permute.xlu0 %1823
        %v1827 = vmul.f32 %v1814, %v1822
        %v1828 = vmul.f32 %v1816, %v1824
        %1831 = vrot.lane.b32.xlu0 %v1827, 64
        %v1832 = vpop.permute.xlu0 %1831
        %1833 = vrot.lane.b32.xlu0 %v1828, 64
        %v1834 = vpop.permute.xlu0 %1833
        %v1837 = vadd.f32 %v811, %v1832
        %v1838 = vadd.f32 %v814, %v1834
        %v1839 = vtanh.pop %v1837
        %v1840 = vtanh.pop %v1838
        %v1841 = vsub.f32 1.0, %v1814
        %v1842 = vsub.f32 1.0, %v1816
        %1845 = vrot.lane.b32.xlu0 %v1839, 96
        %v1846 = vpop.permute.xlu0 %1845
        %1847 = vrot.lane.b32.xlu0 %v1840, 96
        %v1848 = vpop.permute.xlu0 %1847
        %v1851 = vmul.f32 %v1841, %v1846
        %v1852 = vmul.f32 %v1842, %v1848
        %v1853 = vrot.slane %v1601, 1
        %v1854 = vrot.slane %v1602, 1
        %v1857 = vmul.f32 %v1814, %v1853
        %v1858 = vmul.f32 %v1816, %v1854
        %v1859 = vadd.f32 %v1851, %v1857
        %v1860 = vadd.f32 %v1852, %v1858
        %1863 = vrot.lane.b32.xlu0 %v1741, 96
        %v1864 = vpop.permute.xlu0 %1863
        %1865 = vrot.lane.b32.xlu0 %v1742, 96
        %v1866 = vpop.permute.xlu0 %1865
        %vm1869 = vcmask 257027
        %1870 = vst.msk [vmem:[%s563] sm:$0x8] %vm1869, %v1864
        %1871 = vst.msk [vmem:[%s563 + $0x8] sm:$0x8] %vm1869, %v1866
        %1874 = vrot.lane.b32.xlu0 %v1859, 96
        %v1875 = vpop.permute.xlu0 %1874
        %1876 = vrot.lane.b32.xlu0 %v1860, 96
        %v1877 = vpop.permute.xlu0 %1876
        %vm1880 = vcmask 258052
        %1881 = vst.msk [vmem:[%s570] sm:$0x10] %vm1880, %v1875
        %1882 = vst.msk [vmem:[%s570 + $0x8] sm:$0x10] %vm1880, %v1877
        %v1883 = vpack.c.bf16 %v1741, %v1741
        %v1884 = vpack.c.bf16 %v1742, %v1742
        %v1887 = vunpack.c.l.b16 %v1883
        %v1888 = vunpack.c.l.b16 %v1884
        %v1889 = vrot.slane %v1887, 3
        %v1890 = vrot.slane %v1888, 2
        %v1891 = vsel %vm1119, %v1890, %v1889
        %v1892 = vpack.c.b16 %v1891, %v1891
        %1893 = vrot.lane.b32.xlu0 %v1892, 96
        %v1894 = vpop.permute.xlu0 %1893
        %v1896 = vsel %vm590, %v1894, 0
        %1898 = vmatprep.subr.bf16.mxu0 0
        %1899 = vmatpush1.bf16.msra.mxu0 0
        %1900 = vmatprep.subr.bf16.mxu0 0
        %1901 = vmatpush1.bf16.msra.mxu0 0
        %1902 = vmatprep.subr.bf16.mxu0 0
        %1903 = vmatpush1.bf16.msra.mxu0 0
        %1904 = vmatprep.subr.bf16.mxu0 0
        %1905 = vmatpush1.bf16.msra.mxu0 0
        %1906 = vmatprep.subr.bf16.mxu0 0
        %1907 = vmatpush1.bf16.msra.mxu0 0
        %1908 = vmatprep.subr.bf16.mxu0 0
        %1909 = vmatpush1.bf16.msra.mxu0 0
        %1910 = vmatprep.subr.bf16.mxu0 0
        %1911 = vmatpush1.bf16.msra.mxu0 %v839
        %1912 = vmatprep.subr.bf16.mxu0 0
        %1913 = vmatpush1.bf16.msra.mxu0 %v838
        %1914 = vmatprep.subr.bf16.mxu0 0
        %1915 = vmatpush2.bf16.msra.mxu0 0
        %1916 = vmatprep.subr.bf16.mxu0 0
        %1917 = vmatpush2.bf16.msra.mxu0 0
        %1918 = vmatprep.subr.bf16.mxu0 0
        %1919 = vmatpush2.bf16.msra.mxu0 0
        %1920 = vmatprep.subr.bf16.mxu0 0
        %1921 = vmatpush2.bf16.msra.mxu0 0
        %1922 = vmatprep.subr.bf16.mxu0 0
        %1923 = vmatpush2.bf16.msra.mxu0 0
        %1924 = vmatprep.subr.bf16.mxu0 0
        %1925 = vmatpush2.bf16.msra.mxu0 0
        %1926 = vmatprep.subr.bf16.mxu0 0
        %1927 = vmatpush2.bf16.msra.mxu0 0
        %1928 = vmatprep.subr.bf16.mxu0 0
        %1929 = vmatpush2.bf16.msra.mxu0 0
        %1930 = vmatprep.mubr.bf16.mxu0 0
        %1931 = vmatmul.mubr.bf16.gmra.mxu0 %v1896
        %v1932 = vpop.f32.mrf.mxu0
        %v1933 = vadd.f32 0.0, %v1932
        %v1934 = vpop.f32.mrf.mxu0
        %v1935 = vpop.f32.mrf.mxu0
        %v1936 = vpop.f32.mrf.mxu0
        %1937 = vdwg.mxu0
        %v1939 = vrot.slane %v1933, 4
        %v1940 = vrot.slane %v1933, 5
        %v1943 = vadd.f32 %v701, %v1939
        %v1944 = vadd.f32 %v704, %v1940
        %v1945 = vxor.u32 %v1943, 2147483648
        %v1946 = vxor.u32 %v1944, 2147483648
        %v1947 = vmul.f32 %v1945, 1.442695
        %v1948 = vpow.pop %v1947
        %v1949 = vmul.f32 %v1946, 1.442695
        %v1950 = vpow.pop %v1949
        %v1951 = vadd.f32 %v1948, 1.0
        %v1952 = vadd.f32 %v1950, 1.0
        %v1953 = vrcp.pop %v1951
        %v1954 = vmul.f32 1.0, %v1953
        %v1955 = vrcp.pop %v1952
        %v1956 = vmul.f32 1.0, %v1955
        %v1957 = vadd.f32 %v1933, %v909
        %v1959 = vrot.slane %v1957, 4
        %v1960 = vrot.slane %v1957, 5
        %1961 = vrot.lane.b32.xlu0 %v1959, 64
        %v1962 = vpop.permute.xlu0 %1961
        %1963 = vrot.lane.b32.xlu0 %v1960, 64
        %v1964 = vpop.permute.xlu0 %1963
        %v1967 = vmul.f32 %v1954, %v1962
        %v1968 = vmul.f32 %v1956, %v1964
        %1971 = vrot.lane.b32.xlu0 %v1967, 64
        %v1972 = vpop.permute.xlu0 %1971
        %1973 = vrot.lane.b32.xlu0 %v1968, 64
        %v1974 = vpop.permute.xlu0 %1973
        %v1977 = vadd.f32 %v701, %v1972
        %v1978 = vadd.f32 %v704, %v1974
        %v1979 = vtanh.pop %v1977
        %v1980 = vtanh.pop %v1978
        %v1981 = vsub.f32 1.0, %v1954
        %v1982 = vsub.f32 1.0, %v1956
        %1985 = vrot.lane.b32.xlu0 %v1979, 96
        %v1986 = vpop.permute.xlu0 %1985
        %1987 = vrot.lane.b32.xlu0 %v1980, 96
        %v1988 = vpop.permute.xlu0 %1987
        %v1991 = vmul.f32 %v1981, %v1986
        %v1992 = vmul.f32 %v1982, %v1988
        %v1993 = vrot.slane %v1741, 7
        %v1994 = vrot.slane %v1742, 7
        %v1997 = vmul.f32 %v1954, %v1993
        %v1998 = vmul.f32 %v1956, %v1994
        %v1999 = vadd.f32 %v1991, %v1997
        %v2000 = vadd.f32 %v1992, %v1998
        %v2001 = vpack.c.bf16 %v1859, %v1859
        %v2002 = vpack.c.bf16 %v1860, %v1860
        %v2005 = vunpack.c.l.b16 %v2001
        %v2006 = vunpack.c.l.b16 %v2002
        %v2007 = vrot.slane %v2005, 4
        %v2008 = vrot.slane %v2006, 3
        %v2009 = vsel %vm1119, %v2008, %v2007
        %v2010 = vpack.c.b16 %v2009, %v2009
        %2011 = vrot.lane.b32.xlu0 %v2010, 96
        %v2012 = vpop.permute.xlu0 %2011
        %v2014 = vsel %vm590, %v2012, 0
        %2016 = vmatprep.subr.bf16.mxu0 0
        %2017 = vmatpush1.bf16.msra.mxu0 0
        %2018 = vmatprep.subr.bf16.mxu0 0
        %2019 = vmatpush1.bf16.msra.mxu0 0
        %2020 = vmatprep.subr.bf16.mxu0 0
        %2021 = vmatpush1.bf16.msra.mxu0 0
        %2022 = vmatprep.subr.bf16.mxu0 0
        %2023 = vmatpush1.bf16.msra.mxu0 0
        %2024 = vmatprep.subr.bf16.mxu0 0
        %2025 = vmatpush1.bf16.msra.mxu0 0
        %2026 = vmatprep.subr.bf16.mxu0 0
        %2027 = vmatpush1.bf16.msra.mxu0 0
        %2028 = vmatprep.subr.bf16.mxu0 0
        %2029 = vmatpush1.bf16.msra.mxu0 %v968
        %2030 = vmatprep.subr.bf16.mxu0 0
        %2031 = vmatpush1.bf16.msra.mxu0 %v967
        %2032 = vmatprep.subr.bf16.mxu0 0
        %2033 = vmatpush2.bf16.msra.mxu0 0
        %2034 = vmatprep.subr.bf16.mxu0 0
        %2035 = vmatpush2.bf16.msra.mxu0 0
        %2036 = vmatprep.subr.bf16.mxu0 0
        %2037 = vmatpush2.bf16.msra.mxu0 0
        %2038 = vmatprep.subr.bf16.mxu0 0
        %2039 = vmatpush2.bf16.msra.mxu0 0
        %2040 = vmatprep.subr.bf16.mxu0 0
        %2041 = vmatpush2.bf16.msra.mxu0 0
        %2042 = vmatprep.subr.bf16.mxu0 0
        %2043 = vmatpush2.bf16.msra.mxu0 0
        %2044 = vmatprep.subr.bf16.mxu0 0
        %2045 = vmatpush2.bf16.msra.mxu0 0
        %2046 = vmatprep.subr.bf16.mxu0 0
        %2047 = vmatpush2.bf16.msra.mxu0 0
        %2048 = vmatprep.mubr.bf16.mxu0 0
        %2049 = vmatmul.mubr.bf16.gmra.mxu0 %v2014
        %v2050 = vpop.f32.mrf.mxu0
        %v2051 = vadd.f32 0.0, %v2050
        %v2052 = vpop.f32.mrf.mxu0
        %v2053 = vpop.f32.mrf.mxu0
        %v2054 = vpop.f32.mrf.mxu0
        %2055 = vdwg.mxu0
        %v2057 = vrot.slane %v2051, 5
        %v2058 = vrot.slane %v2051, 6
        %v2061 = vadd.f32 %v811, %v2057
        %v2062 = vadd.f32 %v814, %v2058
        %v2063 = vxor.u32 %v2061, 2147483648
        %v2064 = vxor.u32 %v2062, 2147483648
        %v2065 = vmul.f32 %v2063, 1.442695
        %v2066 = vpow.pop %v2065
        %v2067 = vmul.f32 %v2064, 1.442695
        %v2068 = vpow.pop %v2067
        %v2069 = vadd.f32 %v2066, 1.0
        %v2070 = vadd.f32 %v2068, 1.0
        %v2071 = vrcp.pop %v2069
        %v2072 = vmul.f32 1.0, %v2071
        %v2073 = vrcp.pop %v2070
        %v2074 = vmul.f32 1.0, %v2073
        %v2075 = vadd.f32 %v2051, %v1039
        %v2077 = vrot.slane %v2075, 5
        %v2078 = vrot.slane %v2075, 6
        %2079 = vrot.lane.b32.xlu0 %v2077, 64
        %v2080 = vpop.permute.xlu0 %2079
        %2081 = vrot.lane.b32.xlu0 %v2078, 64
        %v2082 = vpop.permute.xlu0 %2081
        %v2085 = vmul.f32 %v2072, %v2080
        %v2086 = vmul.f32 %v2074, %v2082
        %2089 = vrot.lane.b32.xlu0 %v2085, 64
        %v2090 = vpop.permute.xlu0 %2089
        %2091 = vrot.lane.b32.xlu0 %v2086, 64
        %v2092 = vpop.permute.xlu0 %2091
        %v2095 = vadd.f32 %v811, %v2090
        %v2096 = vadd.f32 %v814, %v2092
        %v2097 = vtanh.pop %v2095
        %v2098 = vtanh.pop %v2096
        %v2099 = vsub.f32 1.0, %v2072
        %v2100 = vsub.f32 1.0, %v2074
        %2103 = vrot.lane.b32.xlu0 %v2097, 96
        %v2104 = vpop.permute.xlu0 %2103
        %2105 = vrot.lane.b32.xlu0 %v2098, 96
        %v2106 = vpop.permute.xlu0 %2105
        %v2109 = vmul.f32 %v2099, %v2104
        %v2110 = vmul.f32 %v2100, %v2106
        %v2111 = vrot.slane %v1859, 1
        %v2112 = vrot.slane %v1860, 1
        %v2115 = vmul.f32 %v2072, %v2111
        %v2116 = vmul.f32 %v2074, %v2112
        %v2117 = vadd.f32 %v2109, %v2115
        %v2118 = vadd.f32 %v2110, %v2116
        %2121 = vrot.lane.b32.xlu0 %v1999, 96
        %v2122 = vpop.permute.xlu0 %2121
        %2123 = vrot.lane.b32.xlu0 %v2000, 96
        %v2124 = vpop.permute.xlu0 %2123
        %2127 = vst.msk [vmem:[%s563] sm:$0x10] %vm1880, %v2122
        %2128 = vst.msk [vmem:[%s563 + $0x8] sm:$0x10] %vm1880, %v2124
        %2131 = vrot.lane.b32.xlu0 %v2117, 96
        %v2132 = vpop.permute.xlu0 %2131
        %2133 = vrot.lane.b32.xlu0 %v2118, 96
        %v2134 = vpop.permute.xlu0 %2133
        %2137 = vst.msk [vmem:[%s570] sm:$0x8] %vm1869, %v2132
        %2138 = vst.msk [vmem:[%s570 + $0x8] sm:$0x8] %vm1869, %v2134
        %v2139 = vpack.c.bf16 %v1999, %v1999
        %v2140 = vpack.c.bf16 %v2000, %v2000
        %v2143 = vunpack.c.l.b16 %v2139
        %v2144 = vunpack.c.l.b16 %v2140
        %v2145 = vrot.slane %v2143, 4
        %v2146 = vrot.slane %v2144, 3
        %v2147 = vsel %vm1119, %v2146, %v2145
        %v2148 = vpack.c.b16 %v2147, %v2147
        %2149 = vrot.lane.b32.xlu0 %v2148, 96
        %v2150 = vpop.permute.xlu0 %2149
        %v2152 = vsel %vm590, %v2150, 0
        %2154 = vmatprep.subr.bf16.mxu0 0
        %2155 = vmatpush1.bf16.msra.mxu0 0
        %2156 = vmatprep.subr.bf16.mxu0 0
        %2157 = vmatpush1.bf16.msra.mxu0 0
        %2158 = vmatprep.subr.bf16.mxu0 0
        %2159 = vmatpush1.bf16.msra.mxu0 0
        %2160 = vmatprep.subr.bf16.mxu0 0
        %2161 = vmatpush1.bf16.msra.mxu0 0
        %2162 = vmatprep.subr.bf16.mxu0 0
        %2163 = vmatpush1.bf16.msra.mxu0 0
        %2164 = vmatprep.subr.bf16.mxu0 0
        %2165 = vmatpush1.bf16.msra.mxu0 0
        %2166 = vmatprep.subr.bf16.mxu0 0
        %2167 = vmatpush1.bf16.msra.mxu0 %v839
        %2168 = vmatprep.subr.bf16.mxu0 0
        %2169 = vmatpush1.bf16.msra.mxu0 %v838
        %2170 = vmatprep.subr.bf16.mxu0 0
        %2171 = vmatpush2.bf16.msra.mxu0 0
        %2172 = vmatprep.subr.bf16.mxu0 0
        %2173 = vmatpush2.bf16.msra.mxu0 0
        %2174 = vmatprep.subr.bf16.mxu0 0
        %2175 = vmatpush2.bf16.msra.mxu0 0
        %2176 = vmatprep.subr.bf16.mxu0 0
        %2177 = vmatpush2.bf16.msra.mxu0 0
        %2178 = vmatprep.subr.bf16.mxu0 0
        %2179 = vmatpush2.bf16.msra.mxu0 0
        %2180 = vmatprep.subr.bf16.mxu0 0
        %2181 = vmatpush2.bf16.msra.mxu0 0
        %2182 = vmatprep.subr.bf16.mxu0 0
        %2183 = vmatpush2.bf16.msra.mxu0 0
        %2184 = vmatprep.subr.bf16.mxu0 0
        %2185 = vmatpush2.bf16.msra.mxu0 0
        %2186 = vmatprep.mubr.bf16.mxu0 0
        %2187 = vmatmul.mubr.bf16.gmra.mxu0 %v2152
        %v2188 = vpop.f32.mrf.mxu0
        %v2189 = vadd.f32 0.0, %v2188
        %v2190 = vpop.f32.mrf.mxu0
        %v2191 = vpop.f32.mrf.mxu0
        %v2192 = vpop.f32.mrf.mxu0
        %2193 = vdwg.mxu0
        %v2195 = vrot.slane %v2189, 3
        %v2196 = vrot.slane %v2189, 4
        %v2199 = vadd.f32 %v701, %v2195
        %v2200 = vadd.f32 %v704, %v2196
        %v2201 = vxor.u32 %v2199, 2147483648
        %v2202 = vxor.u32 %v2200, 2147483648
        %v2203 = vmul.f32 %v2201, 1.442695
        %v2204 = vpow.pop %v2203
        %v2205 = vmul.f32 %v2202, 1.442695
        %v2206 = vpow.pop %v2205
        %v2207 = vadd.f32 %v2204, 1.0
        %v2208 = vadd.f32 %v2206, 1.0
        %v2209 = vrcp.pop %v2207
        %v2210 = vmul.f32 1.0, %v2209
        %v2211 = vrcp.pop %v2208
        %v2212 = vmul.f32 1.0, %v2211
        %v2213 = vadd.f32 %v2189, %v909
        %v2215 = vrot.slane %v2213, 3
        %v2216 = vrot.slane %v2213, 4
        %2217 = vrot.lane.b32.xlu0 %v2215, 64
        %v2218 = vpop.permute.xlu0 %2217
        %2219 = vrot.lane.b32.xlu0 %v2216, 64
        %v2220 = vpop.permute.xlu0 %2219
        %v2223 = vmul.f32 %v2210, %v2218
        %v2224 = vmul.f32 %v2212, %v2220
        %2227 = vrot.lane.b32.xlu0 %v2223, 64
        %v2228 = vpop.permute.xlu0 %2227
        %2229 = vrot.lane.b32.xlu0 %v2224, 64
        %v2230 = vpop.permute.xlu0 %2229
        %v2233 = vadd.f32 %v701, %v2228
        %v2234 = vadd.f32 %v704, %v2230
        %v2235 = vtanh.pop %v2233
        %v2236 = vtanh.pop %v2234
        %v2237 = vsub.f32 1.0, %v2210
        %v2238 = vsub.f32 1.0, %v2212
        %2241 = vrot.lane.b32.xlu0 %v2235, 96
        %v2242 = vpop.permute.xlu0 %2241
        %2243 = vrot.lane.b32.xlu0 %v2236, 96
        %v2244 = vpop.permute.xlu0 %2243
        %v2247 = vmul.f32 %v2237, %v2242
        %v2248 = vmul.f32 %v2238, %v2244
        %v2249 = vrot.slane %v1999, 7
        %v2250 = vrot.slane %v2000, 7
        %v2253 = vmul.f32 %v2210, %v2249
        %v2254 = vmul.f32 %v2212, %v2250
        %v2255 = vadd.f32 %v2247, %v2253
        %v2256 = vadd.f32 %v2248, %v2254
        %v2257 = vpack.c.bf16 %v2117, %v2117
        %v2258 = vpack.c.bf16 %v2118, %v2118
        %v2261 = vunpack.c.l.b16 %v2257
        %v2262 = vunpack.c.l.b16 %v2258
        %v2263 = vrot.slane %v2261, 3
        %v2264 = vrot.slane %v2262, 2
        %v2265 = vsel %vm1119, %v2264, %v2263
        %v2266 = vpack.c.b16 %v2265, %v2265
        %2267 = vrot.lane.b32.xlu0 %v2266, 96
        %v2268 = vpop.permute.xlu0 %2267
        %v2270 = vsel %vm590, %v2268, 0
        %2272 = vmatprep.subr.bf16.mxu0 0
        %2273 = vmatpush1.bf16.msra.mxu0 0
        %2274 = vmatprep.subr.bf16.mxu0 0
        %2275 = vmatpush1.bf16.msra.mxu0 0
        %2276 = vmatprep.subr.bf16.mxu0 0
        %2277 = vmatpush1.bf16.msra.mxu0 0
        %2278 = vmatprep.subr.bf16.mxu0 0
        %2279 = vmatpush1.bf16.msra.mxu0 0
        %2280 = vmatprep.subr.bf16.mxu0 0
        %2281 = vmatpush1.bf16.msra.mxu0 0
        %2282 = vmatprep.subr.bf16.mxu0 0
        %2283 = vmatpush1.bf16.msra.mxu0 0
        %2284 = vmatprep.subr.bf16.mxu0 0
        %2285 = vmatpush1.bf16.msra.mxu0 %v968
        %2286 = vmatprep.subr.bf16.mxu0 0
        %2287 = vmatpush1.bf16.msra.mxu0 %v967
        %2288 = vmatprep.subr.bf16.mxu0 0
        %2289 = vmatpush2.bf16.msra.mxu0 0
        %2290 = vmatprep.subr.bf16.mxu0 0
        %2291 = vmatpush2.bf16.msra.mxu0 0
        %2292 = vmatprep.subr.bf16.mxu0 0
        %2293 = vmatpush2.bf16.msra.mxu0 0
        %2294 = vmatprep.subr.bf16.mxu0 0
        %2295 = vmatpush2.bf16.msra.mxu0 0
        %2296 = vmatprep.subr.bf16.mxu0 0
        %2297 = vmatpush2.bf16.msra.mxu0 0
        %2298 = vmatprep.subr.bf16.mxu0 0
        %2299 = vmatpush2.bf16.msra.mxu0 0
        %2300 = vmatprep.subr.bf16.mxu0 0
        %2301 = vmatpush2.bf16.msra.mxu0 0
        %2302 = vmatprep.subr.bf16.mxu0 0
        %2303 = vmatpush2.bf16.msra.mxu0 0
        %2304 = vmatprep.mubr.bf16.mxu0 0
        %2305 = vmatmul.mubr.bf16.gmra.mxu0 %v2270
        %v2306 = vpop.f32.mrf.mxu0
        %v2307 = vadd.f32 0.0, %v2306
        %v2308 = vpop.f32.mrf.mxu0
        %v2309 = vpop.f32.mrf.mxu0
        %v2310 = vpop.f32.mrf.mxu0
        %2311 = vdwg.mxu0
        %v2313 = vrot.slane %v2307, 6
        %v2314 = vrot.slane %v2307, 7
        %v2317 = vadd.f32 %v811, %v2313
        %v2318 = vadd.f32 %v814, %v2314
        %v2319 = vxor.u32 %v2317, 2147483648
        %v2320 = vxor.u32 %v2318, 2147483648
        %v2321 = vmul.f32 %v2319, 1.442695
        %v2322 = vpow.pop %v2321
        %v2323 = vmul.f32 %v2320, 1.442695
        %v2324 = vpow.pop %v2323
        %v2325 = vadd.f32 %v2322, 1.0
        %v2326 = vadd.f32 %v2324, 1.0
        %v2327 = vrcp.pop %v2325
        %v2328 = vmul.f32 1.0, %v2327
        %v2329 = vrcp.pop %v2326
        %v2330 = vmul.f32 1.0, %v2329
        %v2331 = vadd.f32 %v2307, %v1039
        %v2333 = vrot.slane %v2331, 6
        %v2334 = vrot.slane %v2331, 7
        %2335 = vrot.lane.b32.xlu0 %v2333, 64
        %v2336 = vpop.permute.xlu0 %2335
        %2337 = vrot.lane.b32.xlu0 %v2334, 64
        %v2338 = vpop.permute.xlu0 %2337
        %v2341 = vmul.f32 %v2328, %v2336
        %v2342 = vmul.f32 %v2330, %v2338
        %2345 = vrot.lane.b32.xlu0 %v2341, 64
        %v2346 = vpop.permute.xlu0 %2345
        %2347 = vrot.lane.b32.xlu0 %v2342, 64
        %v2348 = vpop.permute.xlu0 %2347
        %v2351 = vadd.f32 %v811, %v2346
        %v2352 = vadd.f32 %v814, %v2348
        %v2353 = vtanh.pop %v2351
        %v2354 = vtanh.pop %v2352
        %v2355 = vsub.f32 1.0, %v2328
        %v2356 = vsub.f32 1.0, %v2330
        %2359 = vrot.lane.b32.xlu0 %v2353, 96
        %v2360 = vpop.permute.xlu0 %2359
        %2361 = vrot.lane.b32.xlu0 %v2354, 96
        %v2362 = vpop.permute.xlu0 %2361
        %v2365 = vmul.f32 %v2355, %v2360
        %v2366 = vmul.f32 %v2356, %v2362
        %v2367 = vrot.slane %v2117, 1
        %v2368 = vrot.slane %v2118, 1
        %v2371 = vmul.f32 %v2328, %v2367
        %v2372 = vmul.f32 %v2330, %v2368
        %v2373 = vadd.f32 %v2365, %v2371
        %v2374 = vadd.f32 %v2366, %v2372
        %2377 = vrot.lane.b32.xlu0 %v2255, 96
        %v2378 = vpop.permute.xlu0 %2377
        %2379 = vrot.lane.b32.xlu0 %v2256, 96
        %v2380 = vpop.permute.xlu0 %2379
        %2383 = vst.msk [vmem:[%s563] sm:$0x20] %vm1622, %v2378
        %2384 = vst.msk [vmem:[%s563 + $0x8] sm:$0x20] %vm1622, %v2380
        %2387 = vrot.lane.b32.xlu0 %v2373, 96
        %v2388 = vpop.permute.xlu0 %2387
        %2389 = vrot.lane.b32.xlu0 %v2374, 96
        %v2390 = vpop.permute.xlu0 %2389
        %2393 = vst.msk [vmem:[%s570] sm:$0x4] %vm1611, %v2388
        %2394 = vst.msk [vmem:[%s570 + $0x8] sm:$0x4] %vm1611, %v2390
        %v2395 = vpack.c.bf16 %v2255, %v2255
        %v2396 = vpack.c.bf16 %v2256, %v2256
        %v2399 = vunpack.c.l.b16 %v2395
        %v2400 = vunpack.c.l.b16 %v2396
        %v2401 = vrot.slane %v2399, 5
        %v2402 = vrot.slane %v2400, 4
        %v2403 = vsel %vm1119, %v2402, %v2401
        %v2404 = vpack.c.b16 %v2403, %v2403
        %2405 = vrot.lane.b32.xlu0 %v2404, 96
        %v2406 = vpop.permute.xlu0 %2405
        %v2408 = vsel %vm590, %v2406, 0
        %2410 = vmatprep.subr.bf16.mxu0 0
        %2411 = vmatpush1.bf16.msra.mxu0 0
        %2412 = vmatprep.subr.bf16.mxu0 0
        %2413 = vmatpush1.bf16.msra.mxu0 0
        %2414 = vmatprep.subr.bf16.mxu0 0
        %2415 = vmatpush1.bf16.msra.mxu0 0
        %2416 = vmatprep.subr.bf16.mxu0 0
        %2417 = vmatpush1.bf16.msra.mxu0 0
        %2418 = vmatprep.subr.bf16.mxu0 0
        %2419 = vmatpush1.bf16.msra.mxu0 0
        %2420 = vmatprep.subr.bf16.mxu0 0
        %2421 = vmatpush1.bf16.msra.mxu0 0
        %2422 = vmatprep.subr.bf16.mxu0 0
        %2423 = vmatpush1.bf16.msra.mxu0 %v839
        %2424 = vmatprep.subr.bf16.mxu0 0
        %2425 = vmatpush1.bf16.msra.mxu0 %v838
        %2426 = vmatprep.subr.bf16.mxu0 0
        %2427 = vmatpush2.bf16.msra.mxu0 0
        %2428 = vmatprep.subr.bf16.mxu0 0
        %2429 = vmatpush2.bf16.msra.mxu0 0
        %2430 = vmatprep.subr.bf16.mxu0 0
        %2431 = vmatpush2.bf16.msra.mxu0 0
        %2432 = vmatprep.subr.bf16.mxu0 0
        %2433 = vmatpush2.bf16.msra.mxu0 0
        %2434 = vmatprep.subr.bf16.mxu0 0
        %2435 = vmatpush2.bf16.msra.mxu0 0
        %2436 = vmatprep.subr.bf16.mxu0 0
        %2437 = vmatpush2.bf16.msra.mxu0 0
        %2438 = vmatprep.subr.bf16.mxu0 0
        %2439 = vmatpush2.bf16.msra.mxu0 0
        %2440 = vmatprep.subr.bf16.mxu0 0
        %2441 = vmatpush2.bf16.msra.mxu0 0
        %2442 = vmatprep.mubr.bf16.mxu0 0
        %2443 = vmatmul.mubr.bf16.gmra.mxu0 %v2408
        %v2444 = vpop.f32.mrf.mxu0
        %v2445 = vadd.f32 0.0, %v2444
        %v2446 = vpop.f32.mrf.mxu0
        %v2447 = vpop.f32.mrf.mxu0
        %v2448 = vpop.f32.mrf.mxu0
        %2449 = vdwg.mxu0
        %v2451 = vrot.slane %v2445, 2
        %v2452 = vrot.slane %v2445, 3
        %v2455 = vadd.f32 %v701, %v2451
        %v2456 = vadd.f32 %v704, %v2452
        %v2457 = vxor.u32 %v2455, 2147483648
        %v2458 = vxor.u32 %v2456, 2147483648
        %v2459 = vmul.f32 %v2457, 1.442695
        %v2460 = vpow.pop %v2459
        %v2461 = vmul.f32 %v2458, 1.442695
        %v2462 = vpow.pop %v2461
        %v2463 = vadd.f32 %v2460, 1.0
        %v2464 = vadd.f32 %v2462, 1.0
        %v2465 = vrcp.pop %v2463
        %v2466 = vmul.f32 1.0, %v2465
        %v2467 = vrcp.pop %v2464
        %v2468 = vmul.f32 1.0, %v2467
        %v2469 = vadd.f32 %v2445, %v909
        %v2471 = vrot.slane %v2469, 2
        %v2472 = vrot.slane %v2469, 3
        %2473 = vrot.lane.b32.xlu0 %v2471, 64
        %v2474 = vpop.permute.xlu0 %2473
        %2475 = vrot.lane.b32.xlu0 %v2472, 64
        %v2476 = vpop.permute.xlu0 %2475
        %v2479 = vmul.f32 %v2466, %v2474
        %v2480 = vmul.f32 %v2468, %v2476
        %2483 = vrot.lane.b32.xlu0 %v2479, 64
        %v2484 = vpop.permute.xlu0 %2483
        %2485 = vrot.lane.b32.xlu0 %v2480, 64
        %v2486 = vpop.permute.xlu0 %2485
        %v2489 = vadd.f32 %v701, %v2484
        %v2490 = vadd.f32 %v704, %v2486
        %v2491 = vtanh.pop %v2489
        %v2492 = vtanh.pop %v2490
        %v2493 = vsub.f32 1.0, %v2466
        %v2494 = vsub.f32 1.0, %v2468
        %2497 = vrot.lane.b32.xlu0 %v2491, 96
        %v2498 = vpop.permute.xlu0 %2497
        %2499 = vrot.lane.b32.xlu0 %v2492, 96
        %v2500 = vpop.permute.xlu0 %2499
        %v2503 = vmul.f32 %v2493, %v2498
        %v2504 = vmul.f32 %v2494, %v2500
        %v2505 = vrot.slane %v2255, 7
        %v2506 = vrot.slane %v2256, 7
        %v2509 = vmul.f32 %v2466, %v2505
        %v2510 = vmul.f32 %v2468, %v2506
        %v2511 = vadd.f32 %v2503, %v2509
        %v2512 = vadd.f32 %v2504, %v2510
        %v2513 = vpack.c.bf16 %v2373, %v2373
        %v2514 = vpack.c.bf16 %v2374, %v2374
        %v2517 = vunpack.c.l.b16 %v2513
        %v2518 = vunpack.c.l.b16 %v2514
        %v2519 = vrot.slane %v2517, 2
        %v2520 = vrot.slane %v2518, 1
        %v2521 = vsel %vm1119, %v2520, %v2519
        %v2522 = vpack.c.b16 %v2521, %v2521
        %2523 = vrot.lane.b32.xlu0 %v2522, 96
        %v2524 = vpop.permute.xlu0 %2523
        %v2526 = vsel %vm590, %v2524, 0
        %2528 = vmatprep.subr.bf16.mxu0 0
        %2529 = vmatpush1.bf16.msra.mxu0 0
        %2530 = vmatprep.subr.bf16.mxu0 0
        %2531 = vmatpush1.bf16.msra.mxu0 0
        %2532 = vmatprep.subr.bf16.mxu0 0
        %2533 = vmatpush1.bf16.msra.mxu0 0
        %2534 = vmatprep.subr.bf16.mxu0 0
        %2535 = vmatpush1.bf16.msra.mxu0 0
        %2536 = vmatprep.subr.bf16.mxu0 0
        %2537 = vmatpush1.bf16.msra.mxu0 0
        %2538 = vmatprep.subr.bf16.mxu0 0
        %2539 = vmatpush1.bf16.msra.mxu0 0
        %2540 = vmatprep.subr.bf16.mxu0 0
        %2541 = vmatpush1.bf16.msra.mxu0 %v968
        %2542 = vmatprep.subr.bf16.mxu0 0
        %2543 = vmatpush1.bf16.msra.mxu0 %v967
        %2544 = vmatprep.subr.bf16.mxu0 0
        %2545 = vmatpush2.bf16.msra.mxu0 0
        %2546 = vmatprep.subr.bf16.mxu0 0
        %2547 = vmatpush2.bf16.msra.mxu0 0
        %2548 = vmatprep.subr.bf16.mxu0 0
        %2549 = vmatpush2.bf16.msra.mxu0 0
        %2550 = vmatprep.subr.bf16.mxu0 0
        %2551 = vmatpush2.bf16.msra.mxu0 0
        %2552 = vmatprep.subr.bf16.mxu0 0
        %2553 = vmatpush2.bf16.msra.mxu0 0
        %2554 = vmatprep.subr.bf16.mxu0 0
        %2555 = vmatpush2.bf16.msra.mxu0 0
        %2556 = vmatprep.subr.bf16.mxu0 0
        %2557 = vmatpush2.bf16.msra.mxu0 0
        %2558 = vmatprep.subr.bf16.mxu0 0
        %2559 = vmatpush2.bf16.msra.mxu0 0
        %2560 = vmatprep.mubr.bf16.mxu0 0
        %2561 = vmatmul.mubr.bf16.gmra.mxu0 %v2526
        %v2562 = vpop.f32.mrf.mxu0
        %v2563 = vadd.f32 0.0, %v2562
        %v2564 = vpop.f32.mrf.mxu0
        %v2565 = vpop.f32.mrf.mxu0
        %v2566 = vpop.f32.mrf.mxu0
        %2567 = vdwg.mxu0
        %v2569 = vrot.slane %v2563, 7
        %v2572 = vadd.f32 %v811, %v2569
        %v2573 = vadd.f32 %v814, %v2563
        %v2574 = vxor.u32 %v2572, 2147483648
        %v2575 = vxor.u32 %v2573, 2147483648
        %v2576 = vmul.f32 %v2574, 1.442695
        %v2577 = vpow.pop %v2576
        %v2578 = vmul.f32 %v2575, 1.442695
        %v2579 = vpow.pop %v2578
        %v2580 = vadd.f32 %v2577, 1.0
        %v2581 = vadd.f32 %v2579, 1.0
        %v2582 = vrcp.pop %v2580
        %v2583 = vmul.f32 1.0, %v2582
        %v2584 = vrcp.pop %v2581
        %v2585 = vmul.f32 1.0, %v2584
        %v2586 = vadd.f32 %v2563, %v1039
        %v2588 = vrot.slane %v2586, 7
        %2589 = vrot.lane.b32.xlu0 %v2588, 64
        %v2590 = vpop.permute.xlu0 %2589
        %2591 = vrot.lane.b32.xlu0 %v2586, 64
        %v2592 = vpop.permute.xlu0 %2591
        %v2595 = vmul.f32 %v2583, %v2590
        %v2596 = vmul.f32 %v2585, %v2592
        %2599 = vrot.lane.b32.xlu0 %v2595, 64
        %v2600 = vpop.permute.xlu0 %2599
        %2601 = vrot.lane.b32.xlu0 %v2596, 64
        %v2602 = vpop.permute.xlu0 %2601
        %v2605 = vadd.f32 %v811, %v2600
        %v2606 = vadd.f32 %v814, %v2602
        %v2607 = vtanh.pop %v2605
        %v2608 = vtanh.pop %v2606
        %v2609 = vsub.f32 1.0, %v2583
        %v2610 = vsub.f32 1.0, %v2585
        %2613 = vrot.lane.b32.xlu0 %v2607, 96
        %v2614 = vpop.permute.xlu0 %2613
        %2615 = vrot.lane.b32.xlu0 %v2608, 96
        %v2616 = vpop.permute.xlu0 %2615
        %v2619 = vmul.f32 %v2609, %v2614
        %v2620 = vmul.f32 %v2610, %v2616
        %v2621 = vrot.slane %v2373, 1
        %v2622 = vrot.slane %v2374, 1
        %v2625 = vmul.f32 %v2583, %v2621
        %v2626 = vmul.f32 %v2585, %v2622
        %v2627 = vadd.f32 %v2619, %v2625
        %v2628 = vadd.f32 %v2620, %v2626
        %2631 = vrot.lane.b32.xlu0 %v2511, 96
        %v2632 = vpop.permute.xlu0 %2631
        %2633 = vrot.lane.b32.xlu0 %v2512, 96
        %v2634 = vpop.permute.xlu0 %2633
        %2637 = vst.msk [vmem:[%s563] sm:$0x40] %vm1365, %v2632
        %2638 = vst.msk [vmem:[%s563 + $0x8] sm:$0x40] %vm1365, %v2634
        %2641 = vrot.lane.b32.xlu0 %v2627, 96
        %v2642 = vpop.permute.xlu0 %2641
        %2643 = vrot.lane.b32.xlu0 %v2628, 96
        %v2644 = vpop.permute.xlu0 %2643
        %2647 = vst.msk [vmem:[%s570] sm:$0x2] %vm1354, %v2642
        %2648 = vst.msk [vmem:[%s570 + $0x8] sm:$0x2] %vm1354, %v2644
        %v2649 = vpack.c.bf16 %v2511, %v2511
        %v2650 = vpack.c.bf16 %v2512, %v2512
        %v2653 = vunpack.c.l.b16 %v2649
        %v2654 = vunpack.c.l.b16 %v2650
        %v2655 = vrot.slane %v2653, 6
        %v2656 = vrot.slane %v2654, 5
        %v2657 = vsel %vm1119, %v2656, %v2655
        %v2658 = vpack.c.b16 %v2657, %v2657
        %2659 = vrot.lane.b32.xlu0 %v2658, 96
        %v2660 = vpop.permute.xlu0 %2659
        %v2662 = vsel %vm590, %v2660, 0
        %2664 = vmatprep.subr.bf16.mxu0 0
        %2665 = vmatpush1.bf16.msra.mxu0 0
        %2666 = vmatprep.subr.bf16.mxu0 0
        %2667 = vmatpush1.bf16.msra.mxu0 0
        %2668 = vmatprep.subr.bf16.mxu0 0
        %2669 = vmatpush1.bf16.msra.mxu0 0
        %2670 = vmatprep.subr.bf16.mxu0 0
        %2671 = vmatpush1.bf16.msra.mxu0 0
        %2672 = vmatprep.subr.bf16.mxu0 0
        %2673 = vmatpush1.bf16.msra.mxu0 0
        %2674 = vmatprep.subr.bf16.mxu0 0
        %2675 = vmatpush1.bf16.msra.mxu0 0
        %2676 = vmatprep.subr.bf16.mxu0 0
        %2677 = vmatpush1.bf16.msra.mxu0 %v839
        %2678 = vmatprep.subr.bf16.mxu0 0
        %2679 = vmatpush1.bf16.msra.mxu0 %v838
        %2680 = vmatprep.subr.bf16.mxu0 0
        %2681 = vmatpush2.bf16.msra.mxu0 0
        %2682 = vmatprep.subr.bf16.mxu0 0
        %2683 = vmatpush2.bf16.msra.mxu0 0
        %2684 = vmatprep.subr.bf16.mxu0 0
        %2685 = vmatpush2.bf16.msra.mxu0 0
        %2686 = vmatprep.subr.bf16.mxu0 0
        %2687 = vmatpush2.bf16.msra.mxu0 0
        %2688 = vmatprep.subr.bf16.mxu0 0
        %2689 = vmatpush2.bf16.msra.mxu0 0
        %2690 = vmatprep.subr.bf16.mxu0 0
        %2691 = vmatpush2.bf16.msra.mxu0 0
        %2692 = vmatprep.subr.bf16.mxu0 0
        %2693 = vmatpush2.bf16.msra.mxu0 0
        %2694 = vmatprep.subr.bf16.mxu0 0
        %2695 = vmatpush2.bf16.msra.mxu0 0
        %2696 = vmatprep.mubr.bf16.mxu0 0
        %2697 = vmatmul.mubr.bf16.gmra.mxu0 %v2662
        %v2698 = vpop.f32.mrf.mxu0
        %v2699 = vadd.f32 0.0, %v2698
        %v2700 = vpop.f32.mrf.mxu0
        %v2701 = vpop.f32.mrf.mxu0
        %v2702 = vpop.f32.mrf.mxu0
        %2703 = vdwg.mxu0
        %v2705 = vrot.slane %v2699, 1
        %v2706 = vrot.slane %v2699, 2
        %v2709 = vadd.f32 %v701, %v2705
        %v2710 = vadd.f32 %v704, %v2706
        %v2711 = vxor.u32 %v2709, 2147483648
        %v2712 = vxor.u32 %v2710, 2147483648
        %v2713 = vmul.f32 %v2711, 1.442695
        %v2714 = vpow.pop %v2713
        %v2715 = vmul.f32 %v2712, 1.442695
        %v2716 = vpow.pop %v2715
        %v2717 = vadd.f32 %v2714, 1.0
        %v2718 = vadd.f32 %v2716, 1.0
        %v2719 = vrcp.pop %v2717
        %v2720 = vmul.f32 1.0, %v2719
        %v2721 = vrcp.pop %v2718
        %v2722 = vmul.f32 1.0, %v2721
        %v2723 = vadd.f32 %v2699, %v909
        %v2725 = vrot.slane %v2723, 1
        %v2726 = vrot.slane %v2723, 2
        %2727 = vrot.lane.b32.xlu0 %v2725, 64
        %v2728 = vpop.permute.xlu0 %2727
        %2729 = vrot.lane.b32.xlu0 %v2726, 64
        %v2730 = vpop.permute.xlu0 %2729
        %v2733 = vmul.f32 %v2720, %v2728
        %v2734 = vmul.f32 %v2722, %v2730
        %2737 = vrot.lane.b32.xlu0 %v2733, 64
        %v2738 = vpop.permute.xlu0 %2737
        %2739 = vrot.lane.b32.xlu0 %v2734, 64
        %v2740 = vpop.permute.xlu0 %2739
        %v2743 = vadd.f32 %v701, %v2738
        %v2744 = vadd.f32 %v704, %v2740
        %v2745 = vtanh.pop %v2743
        %v2746 = vtanh.pop %v2744
        %v2747 = vsub.f32 1.0, %v2720
        %v2748 = vsub.f32 1.0, %v2722
        %2751 = vrot.lane.b32.xlu0 %v2745, 96
        %v2752 = vpop.permute.xlu0 %2751
        %2753 = vrot.lane.b32.xlu0 %v2746, 96
        %v2754 = vpop.permute.xlu0 %2753
        %v2757 = vmul.f32 %v2747, %v2752
        %v2758 = vmul.f32 %v2748, %v2754
        %v2759 = vrot.slane %v2511, 7
        %v2760 = vrot.slane %v2512, 7
        %v2763 = vmul.f32 %v2720, %v2759
        %v2764 = vmul.f32 %v2722, %v2760
        %v2765 = vadd.f32 %v2757, %v2763
        %v2766 = vadd.f32 %v2758, %v2764
        %v2767 = vpack.c.bf16 %v2627, %v2627
        %v2768 = vpack.c.bf16 %v2628, %v2628
        %v2771 = vunpack.c.l.b16 %v2767
        %v2772 = vunpack.c.l.b16 %v2768
        %v2773 = vrot.slane %v2771, 1
        %v2774 = vsel %vm1119, %v2772, %v2773
        %v2775 = vpack.c.b16 %v2774, %v2774
        %2776 = vrot.lane.b32.xlu0 %v2775, 96
        %v2777 = vpop.permute.xlu0 %2776
        %v2779 = vsel %vm590, %v2777, 0
        %2781 = vmatprep.subr.bf16.mxu0 0
        %2782 = vmatpush1.bf16.msra.mxu0 0
        %2783 = vmatprep.subr.bf16.mxu0 0
        %2784 = vmatpush1.bf16.msra.mxu0 0
        %2785 = vmatprep.subr.bf16.mxu0 0
        %2786 = vmatpush1.bf16.msra.mxu0 0
        %2787 = vmatprep.subr.bf16.mxu0 0
        %2788 = vmatpush1.bf16.msra.mxu0 0
        %2789 = vmatprep.subr.bf16.mxu0 0
        %2790 = vmatpush1.bf16.msra.mxu0 0
        %2791 = vmatprep.subr.bf16.mxu0 0
        %2792 = vmatpush1.bf16.msra.mxu0 0
        %2793 = vmatprep.subr.bf16.mxu0 0
        %2794 = vmatpush1.bf16.msra.mxu0 %v968
        %2795 = vmatprep.subr.bf16.mxu0 0
        %2796 = vmatpush1.bf16.msra.mxu0 %v967
        %2797 = vmatprep.subr.bf16.mxu0 0
        %2798 = vmatpush2.bf16.msra.mxu0 0
        %2799 = vmatprep.subr.bf16.mxu0 0
        %2800 = vmatpush2.bf16.msra.mxu0 0
        %2801 = vmatprep.subr.bf16.mxu0 0
        %2802 = vmatpush2.bf16.msra.mxu0 0
        %2803 = vmatprep.subr.bf16.mxu0 0
        %2804 = vmatpush2.bf16.msra.mxu0 0
        %2805 = vmatprep.subr.bf16.mxu0 0
        %2806 = vmatpush2.bf16.msra.mxu0 0
        %2807 = vmatprep.subr.bf16.mxu0 0
        %2808 = vmatpush2.bf16.msra.mxu0 0
        %2809 = vmatprep.subr.bf16.mxu0 0
        %2810 = vmatpush2.bf16.msra.mxu0 0
        %2811 = vmatprep.subr.bf16.mxu0 0
        %2812 = vmatpush2.bf16.msra.mxu0 0
        %2813 = vmatprep.mubr.bf16.mxu0 0
        %2814 = vmatmul.mubr.bf16.gmra.mxu0 %v2779
        %v2815 = vpop.f32.mrf.mxu0
        %v2816 = vadd.f32 0.0, %v2815
        %v2817 = vpop.f32.mrf.mxu0
        %v2818 = vpop.f32.mrf.mxu0
        %v2819 = vpop.f32.mrf.mxu0
        %2820 = vdwg.mxu0
        %v2822 = vrot.slane %v2816, 1
        %v2825 = vadd.f32 %v811, %v2816
        %v2826 = vadd.f32 %v814, %v2822
        %v2827 = vxor.u32 %v2825, 2147483648
        %v2828 = vxor.u32 %v2826, 2147483648
        %v2829 = vmul.f32 %v2827, 1.442695
        %v2830 = vpow.pop %v2829
        %v2831 = vmul.f32 %v2828, 1.442695
        %v2832 = vpow.pop %v2831
        %v2833 = vadd.f32 %v2830, 1.0
        %v2834 = vadd.f32 %v2832, 1.0
        %v2835 = vrcp.pop %v2833
        %v2836 = vmul.f32 1.0, %v2835
        %v2837 = vrcp.pop %v2834
        %v2838 = vmul.f32 1.0, %v2837
        %v2839 = vadd.f32 %v2816, %v1039
        %v2841 = vrot.slane %v2839, 1
        %2842 = vrot.lane.b32.xlu0 %v2839, 64
        %v2843 = vpop.permute.xlu0 %2842
        %2844 = vrot.lane.b32.xlu0 %v2841, 64
        %v2845 = vpop.permute.xlu0 %2844
        %v2848 = vmul.f32 %v2836, %v2843
        %v2849 = vmul.f32 %v2838, %v2845
        %2852 = vrot.lane.b32.xlu0 %v2848, 64
        %v2853 = vpop.permute.xlu0 %2852
        %2854 = vrot.lane.b32.xlu0 %v2849, 64
        %v2855 = vpop.permute.xlu0 %2854
        %v2858 = vadd.f32 %v811, %v2853
        %v2859 = vadd.f32 %v814, %v2855
        %v2860 = vtanh.pop %v2858
        %v2861 = vtanh.pop %v2859
        %v2862 = vsub.f32 1.0, %v2836
        %v2863 = vsub.f32 1.0, %v2838
        %2866 = vrot.lane.b32.xlu0 %v2860, 96
        %v2867 = vpop.permute.xlu0 %2866
        %2868 = vrot.lane.b32.xlu0 %v2861, 96
        %v2869 = vpop.permute.xlu0 %2868
        %v2872 = vmul.f32 %v2862, %v2867
        %v2873 = vmul.f32 %v2863, %v2869
        %v2874 = vrot.slane %v2627, 1
        %v2875 = vrot.slane %v2628, 1
        %v2878 = vmul.f32 %v2836, %v2874
        %v2879 = vmul.f32 %v2838, %v2875
        %v2880 = vadd.f32 %v2872, %v2878
        %v2881 = vadd.f32 %v2873, %v2879
        %2884 = vrot.lane.b32.xlu0 %v2765, 96
        %v2885 = vpop.permute.xlu0 %2884
        %2886 = vrot.lane.b32.xlu0 %v2766, 96
        %v2887 = vpop.permute.xlu0 %2886
        %2890 = vst.msk [vmem:[%s563] sm:$0x80] %vm1109, %v2885
        %2891 = vst.msk [vmem:[%s563 + $0x8] sm:$0x80] %vm1109, %v2887
        %2894 = vrot.lane.b32.xlu0 %v2880, 96
        %v2895 = vpop.permute.xlu0 %2894
        %2896 = vrot.lane.b32.xlu0 %v2881, 96
        %v2897 = vpop.permute.xlu0 %2896
        %2900 = vst.msk [vmem:[%s570] sm:$0x1] %vm1098, %v2895
        %2901 = vst.msk [vmem:[%s570 + $0x8] sm:$0x1] %vm1098, %v2897
        %v2902 = vrot.slane %v2766, 7
        %2903 = vrot.lane.b32.xlu0 %v2902, 96
        %v2904 = vpop.permute.xlu0 %2903
        %2906 = vst.msk [vmem:[#allocation2 - $0x7] sm:$0x80] %vm1109, %v2885
        %2907 = vst.msk [vmem:[#allocation2 + $0x1] sm:$0x1] %vm1098, %v2904
        %v2908 = vrot.slane %v2881, 7
        %v2909 = vsel %vm1119, %v2908, %v2880
        %2910 = vrot.lane.b32.xlu0 %v2909, 96
        %v2911 = vpop.permute.xlu0 %2910
        %vm2913 = vcmask 254976
        %2914 = vst.msk [vmem:[#allocation3] sm:$0x3] %vm2913, %v2911
        %s2915 = sand.u32 %s311, 1
        %s2916 = scalar_lea.sflag [#allocation6], %s2915
        %s2917 = sand.u32 %s311, 1
        %s2918 = smul.addr %s2917, 16
        %s2919 = scalar_lea.vmem [#allocation15], %s2918
        %s2920 = sand.u32 %s339, 1
        %s2921 = scalar_lea.sflag [#allocation17], %s2920
        %s2922 = sand.u32 %s339, 1
        %s2923 = smul.addr %s2922, 16
        %s2924 = scalar_lea.vmem [#allocation16], %s2923
        // Predicated region
        $region97: #{tpu_custom_call.1} parent=67 // pred_check
          %p2925 = pneg %p321
        $region98: #{tpu_custom_call.1} parent=67 // pred_check_branch
          %2927 = sbr.rel (%p2925) target = $region100
        $region99: #{tpu_custom_call.1} parent=67 // pred_region
          %s2929 = ssub.s32 256, 256
          %2930 = vsyncadd %s2916, %s2929
          %s2931 = smul.addr %s39, 128
          %s2932 = scalar_lea.hbm %s12, %s2931
          %s2933 = sshll.u32 %s2919, 4
          %s2934 = int_to_ptr.vmem [resolvable:$true] %s2933
          %2939 = dma.vmem_to_hbm [thread:$0]  %s2934, 256, %s2932, %s2916, 128, 256, 8
        $region100: #{tpu_custom_call.1} parent=67 // pred_fallthru
          _
        // Predicated region
        $region101: #{tpu_custom_call.1} parent=67 // pred_check
          %p2940 = pneg %p349
        $region102: #{tpu_custom_call.1} parent=67 // pred_check_branch
          %2942 = sbr.rel (%p2940) target = $region104
        $region103: #{tpu_custom_call.1} parent=67 // pred_region
          %s2943 = ssub.s32 1, %s39
          %s2945 = ssub.s32 256, 256
          %2946 = vsyncadd %s2921, %s2945
          %s2947 = smul.addr %s2943, 128
          %s2948 = scalar_lea.hbm %s13, %s2947
          %s2949 = sshll.u32 %s2924, 4
          %s2950 = int_to_ptr.vmem [resolvable:$true] %s2949
          %2955 = dma.vmem_to_hbm [thread:$0]  %s2950, 256, %s2948, %s2921, 128, 256, 8
        $region104: #{tpu_custom_call.1} parent=67 // pred_fallthru
          _
      $region68: #{tpu_custom_call.1} parent=5 // pred_fallthru
        _
      %p2956 = scmp.le.s32.totalorder 2, %s34
      // Predicated region
      $region105: #{tpu_custom_call.1} parent=5 // pred_check
        %p2957 = pneg %p2956
      $region106: #{tpu_custom_call.1} parent=5 // pred_check_branch
        %2959 = sbr.rel (%p2957) target = $region108
      $region107: #{tpu_custom_call.1} parent=5 // pred_region
        %s2960 = ssub.s32 %s34, 2
        // Predicated region
        $region109: #{tpu_custom_call.1} parent=107 // pred_check
          %p2961 = pneg %p327
        $region110: #{tpu_custom_call.1} parent=107 // pred_check_branch
          %2963 = sbr.rel (%p2961) target = $region112
        $region111: #{tpu_custom_call.1} parent=107 // pred_region
          %s2964 = sand.u32 %s312, 1
          %s2965 = scalar_lea.sflag [#allocation6], %s2964
          %s2966 = sand.u32 %s312, 1
          %s2967 = smul.addr %s2966, 16
          %s2968 = scalar_lea.vmem [#allocation15], %s2967
          %2969 = dma.done %s2965, 256
        $region112: #{tpu_custom_call.1} parent=107 // pred_fallthru
          _
        // Predicated region
        $region113: #{tpu_custom_call.1} parent=107 // pred_check
          %p2970 = pneg %p355
        $region114: #{tpu_custom_call.1} parent=107 // pred_check_branch
          %2972 = sbr.rel (%p2970) target = $region116
        $region115: #{tpu_custom_call.1} parent=107 // pred_region
          %s2973 = sand.u32 %s340, 1
          %s2974 = scalar_lea.sflag [#allocation17], %s2973
          %s2975 = sand.u32 %s340, 1
          %s2976 = smul.addr %s2975, 16
          %s2977 = scalar_lea.vmem [#allocation16], %s2976
          %2978 = dma.done %s2974, 256
        $region116: #{tpu_custom_call.1} parent=107 // pred_fallthru
          _
      $region108: #{tpu_custom_call.1} parent=5 // pred_fallthru
        _
    $region6: #{tpu_custom_call.1} parent=1 // loop_footer
      %s38 = sadd.s32 1, %s34
    $region7: #{tpu_custom_call.1} parent=1 // loop_footer_branch
      %33 = sbr.rel target = $region3
    $region8: #{tpu_custom_call.1} parent=1 // loop_exit
      _
    %2979 = vsyncpa [#allocation5], 1
    %s2980 = scalar_lea.sflag [#allocation5], 1
    %2981 = vsyncpa %s2980, 1
    %2982 = vsyncpa [#allocation8], 1
    %s2983 = scalar_lea.sflag [#allocation8], 1
    %2984 = vsyncpa %s2983, 1
    %2985 = vsyncpa [#allocation11], 1
    %2986 = vsyncpa [#allocation14], 1
    %2987 = vsyncpa [#allocation6], 1
    %s2988 = scalar_lea.sflag [#allocation6], 1
    %2989 = vsyncpa %s2988, 1
    %2990 = vsyncpa [#allocation17], 1
    %s2991 = scalar_lea.sflag [#allocation17], 1
    %2992 = vsyncpa %s2991, 1

</llo_original>
